<compile_context>
chip_gen: v7x
topology: tpu7x:2x2x1
jax: 0.10.0
libtpu: 0.0.40
codegen_flags: <defaults>
</compile_context>

<pallas_src>
import numpy as np
import jax
import jax.numpy as jnp
from jax import lax
from jax.experimental import pallas as pl
from jax.experimental.pallas import tpu as pltpu


_PS = 8     # sublane halo (>= max radius 6, sublane-aligned)
_PL = 128   # lane halo (lane-tile aligned so interior stores start aligned)


# ---------------------------------------------------------------------------
# Circle structuring elements (mirrors SegmentationMask._make_circle_conv).
# ---------------------------------------------------------------------------
def _circle_taps(radius: int) -> np.ndarray:
    d = 1 + 2 * radius
    a = np.linspace(-1.0, 1.0, d) ** 2
    b = np.sqrt(a[None, :] + a[:, None])
    return b <= 1.0


def _disc_plan(radius: int):
    """Column-separable plan for the radius-r disc.

    Returns [((lo, hi), (dj, ...)), ...]: the vertical row-offset interval
    [lo, hi] covered by a disc column and the column offsets dj that share it,
    ordered smallest interval first.  Disc column intervals are nested, which
    lets the vertical running min/max slab be grown incrementally.
    """
    circ = _circle_taps(radius)
    r = radius
    groups = {}
    for c in range(2 * r + 1):
        rows = np.nonzero(circ[:, c])[0]
        if rows.size == 0:                       # FP edge case: empty column
            continue
        assert np.all(np.diff(rows) == 1), "disc column must be contiguous"
        iv = (int(rows[0]) - r, int(rows[-1]) - r)
        groups.setdefault(iv, []).append(c - r)
    plan = sorted(groups.items(), key=lambda kv: kv[0][1] - kv[0][0])
    ivs = [iv for iv, _ in plan]
    for (l1, h1), (l2, h2) in zip(ivs, ivs[1:]):
        assert l2 <= l1 and h1 <= h2, "disc column intervals must be nested"
    return [(iv, tuple(djs)) for iv, djs in plan]


_DISC_PLAN = {r: _disc_plan(r) for r in range(1, 8)}


# ---------------------------------------------------------------------------
# Fused kernel
# ---------------------------------------------------------------------------
def _make_kernel(H: int, W: int):
    f32 = jnp.float32
    bf16 = jnp.bfloat16
    u8 = jnp.uint8

    def kernel(inp_ref, rawpos_ref,
               raw_dense_ref, dense_ref, body_ref, air_ref,
               raw_cand_ref, cand_ref, lung_ref, neg_ref, pos_ref,
               mpad_ref, spad_ref):
        # Re-zero only the halo strips (aligned, full-width stores).  The
        # interiors are fully rewritten by every morphology call, so the halos
        # stay zero afterwards.
        mpad_ref[0:_PS, :] = jnp.zeros((_PS, W), f32)
        mpad_ref[_PS + H:_PS + H + _PS, :] = jnp.zeros((_PS, W), f32)
        spad_ref[:, 0:_PL] = jnp.zeros((H, _PL), f32)
        spad_ref[:, _PL + W:_PL + W + _PL] = jnp.zeros((H, _PL), f32)

        def morph(m, radius, reduce_fn):
            """Exact binary disc morphology (min => erode, max => deposit).

            Extent-separable: grow a vertical (sublane-shift) running min/max
            slab over the nested column intervals and fold in the lane-shifted
            slab for every column offset dj.  Shifted operands are read
            straight from the halo scratches; zero halos give zero-padded-conv
            border behaviour.  ~4*radius VALU min/max ops total.
            """
            mpad_ref[_PS:_PS + H, :] = m          # original mask, vert. halo
            spad_ref[:, _PL:_PL + W] = m          # current slab, lane halo
            cur_lo, cur_hi = 0, 0
            acc = None
            for (lo, hi), djs in _DISC_PLAN[radius]:
                # Grow the vertical slab from [cur_lo, cur_hi] to [lo, hi].
                grow = ([mpad_ref[_PS + d:_PS + d + H, :]
                         for d in range(lo, cur_lo)] +
                        [mpad_ref[_PS + d:_PS + d + H, :]
                         for d in range(cur_hi + 1, hi + 1)])
                if grow:
                    slab = spad_ref[:, _PL:_PL + W]
                    for t in grow:
                        slab = reduce_fn(slab, t)
                    spad_ref[:, _PL:_PL + W] = slab
                    cur_lo, cur_hi = lo, hi
                # Lane-shifted taps of the slab for this interval's columns;
                # tree-reduce to shorten the dependency chain (helps small HxW).
                taps = [spad_ref[:, _PL + dj:_PL + dj + W] for dj in djs]
                while len(taps) > 1:
                    nxt = [reduce_fn(taps[i], taps[i + 1])
                           for i in range(0, len(taps) - 1, 2)]
                    if len(taps) % 2:
                        nxt.append(taps[-1])
                    taps = nxt
                acc = taps[0] if acc is None else reduce_fn(acc, taps[0])
            return acc

        def deposit(m, radius):      # conv > 0   <=>  any disc tap set
            return morph(m, radius, jnp.maximum)

        def erode(m, radius):        # conv >= 1  <=>  all disc taps set
            return morph(m, radius, jnp.minimum)

        x = inp_ref[0]               # (H, W) float32
        rp = rawpos_ref[0]
        gcc = x + 1.0

        raw_dense = (gcc > 0.7).astype(f32)
        dense = deposit(raw_dense, 2)
        dense = erode(dense, 6)
        dense = deposit(dense, 4)

        # fill_cavity: inclusive cumsums as MXU matmuls against triangular
        # {0,1} constants built in-kernel (bf16 operands, f32 accumulation —
        # exact; comparisons match torch's cumsum>0 / cumsum<last semantics).
        iw = lax.broadcasted_iota(jnp.int32, (W, W), 0)
        jw = lax.broadcasted_iota(jnp.int32, (W, W), 1)
        upper = (iw <= jw).astype(bf16)                   # (W, W) upper-tri
        ih = lax.broadcasted_iota(jnp.int32, (H, H), 0)
        jh = lax.broadcasted_iota(jnp.int32, (H, H), 1)
        lower = (ih >= jh).astype(bf16)                   # (H, H) lower-tri
        dense_b = dense.astype(bf16)
        cs_w = jnp.dot(dense_b, upper, preferred_element_type=f32)  # cumsum(-1)
        cs_h = jnp.dot(lower, dense_b, preferred_element_type=f32)  # cumsum(-2)
        body = ((cs_w > 0.0) & (cs_w < cs_w[:, W - 1:W])
                & (cs_h > 0.0) & (cs_h < cs_h[H - 1:H, :])).astype(f32)

        air = deposit(body * (1.0 - dense), 5)    # body & ~dense
        air = erode(air, 6)
        lung = deposit(air, 5)

        raw_cand = (gcc > 0.4).astype(f32) * air
        cand = erode(raw_cand, 1)
        cand = deposit(cand, 1)

        pos = deposit((rp > 0.5).astype(f32) * lung, 2)
        neg = deposit(cand, 1)
        neg = neg * (1.0 - pos) * lung            # neg & ~pos & lung

        raw_dense_ref[0] = raw_dense.astype(u8)
        dense_ref[0] = dense.astype(u8)
        body_ref[0] = body.astype(u8)
        air_ref[0] = air.astype(u8)
        raw_cand_ref[0] = raw_cand.astype(u8)
        cand_ref[0] = cand.astype(u8)
        lung_ref[0] = lung.astype(u8)
        neg_ref[0] = neg
        pos_ref[0] = pos

    return kernel


def _seg_pallas(x, rp):
    B, H, W = x.shape
    f32, u8 = jnp.float32, jnp.uint8
    spec = pl.BlockSpec((1, H, W), lambda b: (b, 0, 0))
    out_shape = tuple(jax.ShapeDtypeStruct((B, H, W), dt)
                      for dt in (u8, u8, u8, u8, u8, u8, u8, f32, f32))
    return pl.pallas_call(
        _make_kernel(H, W),
        out_shape=out_shape,
        grid_spec=pltpu.PrefetchScalarGridSpec(
            num_scalar_prefetch=0,
            grid=(B,),
            in_specs=[spec, spec],
            out_specs=(spec,) * 9,
            scratch_shapes=[
                pltpu.VMEM((H + 2 * _PS, W), f32),       # vertical-halo pad
                pltpu.VMEM((H, W + 2 * _PL), f32),       # lane-halo pad
            ],
        ),
        compiler_params=pltpu.CompilerParams(
            dimension_semantics=("parallel",),
            vmem_limit_bytes=56 * 1024 * 1024,
        ),
    )(x, rp)


# ---------------------------------------------------------------------------
# Forward pass (mirrors SegmentationMask.forward)
# ---------------------------------------------------------------------------
@jax.jit
def segmentation_mask_forward(input_g, raw_pos_g):
    B, C, H, W = input_g.shape
    assert C == 1, "SegmentationMask uses single-channel Conv2d(1, 1, ...)"
    x = input_g.reshape(B, H, W).astype(jnp.float32)
    rp = raw_pos_g.reshape(B, H, W).astype(jnp.float32)

    (raw_dense, dense, body, air,
     raw_cand, cand, lung, neg, pos) = _seg_pallas(x, rp)

    def b4(m):                                   # uint8 {0,1} -> bool NCHW
        return (m > 0).reshape(B, 1, H, W)

    pos_f = pos.reshape(B, 1, H, W)              # float32 {0,1}
    neg_f = neg.reshape(B, 1, H, W)
    label_g = pos_f
    lung_mask = b4(lung)

    mask_dict = {
        'raw_dense_mask': b4(raw_dense),
        'dense_mask': b4(dense),
        'body_mask': b4(body),
        'air_mask': b4(air),
        'raw_candidate_mask': b4(raw_cand),
        'candidate_mask': b4(cand),
        'lung_mask': lung_mask,
        'neg_mask': (neg_f > 0.5),
        'pos_mask': (pos_f > 0.5),
    }
    return label_g, neg_f, pos_f, lung_mask, mask_dict


# ---------------------------------------------------------------------------
if __name__ == "__main__":
    key = jax.random.PRNGKey(0)
    k1, k2 = jax.random.split(key)
    B, C, H, W = 2, 1, 16, 16
    input_g = jax.random.uniform(k1, (B, C, H, W), jnp.float32, -1.0, 1.0)
    raw_pos_g = jax.random.uniform(k2, (B, C, H, W), jnp.float32, 0.0, 1.0)

    out = segmentation_mask_forward(input_g, raw_pos_g)
    jax.block_until_ready(out)

    label_g, neg_g, pos_g, lung_mask, mask_dict = out
    assert label_g.shape == (B, 1, H, W) and label_g.dtype == jnp.float32
    assert neg_g.dtype == jnp.float32 and pos_g.dtype == jnp.float32
    assert lung_mask.dtype == jnp.bool_
    assert set(mask_dict) == {
        'raw_dense_mask', 'dense_mask', 'body_mask', 'air_mask',
        'raw_candidate_mask', 'candidate_mask', 'lung_mask', 'neg_mask',
        'pos_mask'}
    for v in mask_dict.values():
        assert v.shape == (B, 1, H, W) and v.dtype == jnp.bool_
    print("KERNEL_OK")
</pallas_src>

<mosaic_0001>
module attributes {stable_mosaic.version = 11 : i64} {
  func.func @kernel(%arg0: i32, %arg1: memref<1x16x16xf32, #tpu.memory_space<vmem>>, %arg2: memref<1x16x16xf32, #tpu.memory_space<vmem>>, %arg3: memref<1x16x16xi8, #tpu.memory_space<vmem>>, %arg4: memref<1x16x16xi8, #tpu.memory_space<vmem>>, %arg5: memref<1x16x16xi8, #tpu.memory_space<vmem>>, %arg6: memref<1x16x16xi8, #tpu.memory_space<vmem>>, %arg7: memref<1x16x16xi8, #tpu.memory_space<vmem>>, %arg8: memref<1x16x16xi8, #tpu.memory_space<vmem>>, %arg9: memref<1x16x16xi8, #tpu.memory_space<vmem>>, %arg10: memref<1x16x16xf32, #tpu.memory_space<vmem>>, %arg11: memref<1x16x16xf32, #tpu.memory_space<vmem>>, %arg12: memref<32x16xf32, #tpu.memory_space<vmem>>, %arg13: memref<16x272xf32, #tpu.memory_space<vmem>>) attributes {dimension_semantics = [#tpu.dimension_semantics<parallel>], iteration_bounds = array<i64: 2>, scalar_prefetch = 0 : i64, scratch_operands = 2 : i64, tpu.core_type = #tpu.core_type<tc>, window_params = [{transform_indices = @transform_0, window_bounds = array<i64: 1, 16, 16>}, {transform_indices = @transform_1, window_bounds = array<i64: 1, 16, 16>}, {transform_indices = @transform_2, window_bounds = array<i64: 1, 16, 16>}, {transform_indices = @transform_3, window_bounds = array<i64: 1, 16, 16>}, {transform_indices = @transform_4, window_bounds = array<i64: 1, 16, 16>}, {transform_indices = @transform_5, window_bounds = array<i64: 1, 16, 16>}, {transform_indices = @transform_6, window_bounds = array<i64: 1, 16, 16>}, {transform_indices = @transform_7, window_bounds = array<i64: 1, 16, 16>}, {transform_indices = @transform_8, window_bounds = array<i64: 1, 16, 16>}, {transform_indices = @transform_9, window_bounds = array<i64: 1, 16, 16>}, {transform_indices = @transform_10, window_bounds = array<i64: 1, 16, 16>}]} {
    %cst = arith.constant 0.000000e+00 : f32
    %0 = vector.broadcast %cst : f32 to vector<8x16xf32>
    %c0 = arith.constant 0 : index
    %c0_0 = arith.constant 0 : index
    %1 = vector.load %arg12[%c0, %c0_0] : memref<32x16xf32, #tpu.memory_space<vmem>>, vector<8x16xf32>
    tpu.vector_store %arg12[%c0, %c0_0], %0 {strides = array<i32>} : memref<32x16xf32, #tpu.memory_space<vmem>>, vector<8x16xf32>,
    %cst_1 = arith.constant 0.000000e+00 : f32
    %2 = vector.broadcast %cst_1 : f32 to vector<8x16xf32>
    %c24 = arith.constant 24 : index
    %c0_2 = arith.constant 0 : index
    %3 = vector.load %arg12[%c24, %c0_2] : memref<32x16xf32, #tpu.memory_space<vmem>>, vector<8x16xf32>
    tpu.vector_store %arg12[%c24, %c0_2], %2 {strides = array<i32>} : memref<32x16xf32, #tpu.memory_space<vmem>>, vector<8x16xf32>,
    %cst_3 = arith.constant 0.000000e+00 : f32
    %4 = vector.broadcast %cst_3 : f32 to vector<16x128xf32>
    %c0_4 = arith.constant 0 : index
    %c0_5 = arith.constant 0 : index
    %5 = vector.load %arg13[%c0_4, %c0_5] : memref<16x272xf32, #tpu.memory_space<vmem>>, vector<16x128xf32>
    tpu.vector_store %arg13[%c0_4, %c0_5], %4 {strides = array<i32>} : memref<16x272xf32, #tpu.memory_space<vmem>>, vector<16x128xf32>,
    %cst_6 = arith.constant 0.000000e+00 : f32
    %6 = vector.broadcast %cst_6 : f32 to vector<16x128xf32>
    %c0_7 = arith.constant 0 : index
    %c144 = arith.constant 144 : index
    %7 = vector.load %arg13[%c0_7, %c144] : memref<16x272xf32, #tpu.memory_space<vmem>>, vector<16x128xf32>
    tpu.vector_store %arg13[%c0_7, %c144], %6 {strides = array<i32>} : memref<16x272xf32, #tpu.memory_space<vmem>>, vector<16x128xf32>,
    %c0_8 = arith.constant 0 : index
    %c0_9 = arith.constant 0 : index
    %c0_10 = arith.constant 0 : index
    %8 = vector.load %arg1[%c0_8, %c0_9, %c0_10] : memref<1x16x16xf32, #tpu.memory_space<vmem>>, vector<1x16x16xf32>
    %9 = vector.shape_cast %8 : vector<1x16x16xf32> to vector<16x16xf32>
    %c0_11 = arith.constant 0 : index
    %c0_12 = arith.constant 0 : index
    %c0_13 = arith.constant 0 : index
    %10 = vector.load %arg2[%c0_11, %c0_12, %c0_13] : memref<1x16x16xf32, #tpu.memory_space<vmem>>, vector<1x16x16xf32>
    %11 = vector.shape_cast %10 : vector<1x16x16xf32> to vector<16x16xf32>
    %cst_14 = arith.constant 1.000000e+00 : f32
    %12 = vector.broadcast %cst_14 : f32 to vector<16x16xf32>
    %13 = arith.addf %9, %12 : vector<16x16xf32>
    %cst_15 = arith.constant 0.699999988 : f32
    %14 = vector.broadcast %cst_15 : f32 to vector<16x16xf32>
    %15 = arith.cmpf ogt, %13, %14 : vector<16x16xf32>
    %16 = arith.extui %15 : vector<16x16xi1> to vector<16x16xi32>
    %17 = arith.sitofp %16 : vector<16x16xi32> to vector<16x16xf32>
    %c8 = arith.constant 8 : index
    %c0_16 = arith.constant 0 : index
    %18 = vector.load %arg12[%c8, %c0_16] : memref<32x16xf32, #tpu.memory_space<vmem>>, vector<16x16xf32>
    tpu.vector_store %arg12[%c8, %c0_16], %17 {strides = array<i32>} : memref<32x16xf32, #tpu.memory_space<vmem>>, vector<16x16xf32>,
    %c0_17 = arith.constant 0 : index
    %c128 = arith.constant 128 : index
    %19 = vector.load %arg13[%c0_17, %c128] : memref<16x272xf32, #tpu.memory_space<vmem>>, vector<16x16xf32>
    tpu.vector_store %arg13[%c0_17, %c128], %17 {strides = array<i32>} : memref<16x272xf32, #tpu.memory_space<vmem>>, vector<16x16xf32>,
    %c0_18 = arith.constant 0 : index
    %c126 = arith.constant 126 : index
    %20 = vector.load %arg13[%c0_18, %c126] : memref<16x272xf32, #tpu.memory_space<vmem>>, vector<16x16xf32>
    %c0_19 = arith.constant 0 : index
    %c130 = arith.constant 130 : index
    %21 = vector.load %arg13[%c0_19, %c130] : memref<16x272xf32, #tpu.memory_space<vmem>>, vector<16x16xf32>
    %22 = arith.maximumf %20, %21 : vector<16x16xf32>
    %c7 = arith.constant 7 : index
    %c0_20 = arith.constant 0 : index
    %23 = vector.load %arg12[%c7, %c0_20] : memref<32x16xf32, #tpu.memory_space<vmem>>, vector<16x16xf32>
    %c9 = arith.constant 9 : index
    %c0_21 = arith.constant 0 : index
    %24 = vector.load %arg12[%c9, %c0_21] : memref<32x16xf32, #tpu.memory_space<vmem>>, vector<16x16xf32>
    %c0_22 = arith.constant 0 : index
    %c128_23 = arith.constant 128 : index
    %25 = vector.load %arg13[%c0_22, %c128_23] : memref<16x272xf32, #tpu.memory_space<vmem>>, vector<16x16xf32>
    %26 = arith.maximumf %25, %23 : vector<16x16xf32>
    %27 = arith.maximumf %26, %24 : vector<16x16xf32>
    %c0_24 = arith.constant 0 : index
    %c128_25 = arith.constant 128 : index
    %28 = vector.load %arg13[%c0_24, %c128_25] : memref<16x272xf32, #tpu.memory_space<vmem>>, vector<16x16xf32>
    tpu.vector_store %arg13[%c0_24, %c128_25], %27 {strides = array<i32>} : memref<16x272xf32, #tpu.memory_space<vmem>>, vector<16x16xf32>,
    %c0_26 = arith.constant 0 : index
    %c127 = arith.constant 127 : index
    %29 = vector.load %arg13[%c0_26, %c127] : memref<16x272xf32, #tpu.memory_space<vmem>>, vector<16x16xf32>
    %c0_27 = arith.constant 0 : index
    %c129 = arith.constant 129 : index
    %30 = vector.load %arg13[%c0_27, %c129] : memref<16x272xf32, #tpu.memory_space<vmem>>, vector<16x16xf32>
    %31 = arith.maximumf %29, %30 : vector<16x16xf32>
    %32 = arith.maximumf %22, %31 : vector<16x16xf32>
    %c6 = arith.constant 6 : index
    %c0_28 = arith.constant 0 : index
    %33 = vector.load %arg12[%c6, %c0_28] : memref<32x16xf32, #tpu.memory_space<vmem>>, vector<16x16xf32>
    %c10 = arith.constant 10 : index
    %c0_29 = arith.constant 0 : index
    %34 = vector.load %arg12[%c10, %c0_29] : memref<32x16xf32, #tpu.memory_space<vmem>>, vector<16x16xf32>
    %c0_30 = arith.constant 0 : index
    %c128_31 = arith.constant 128 : index
    %35 = vector.load %arg13[%c0_30, %c128_31] : memref<16x272xf32, #tpu.memory_space<vmem>>, vector<16x16xf32>
    %36 = arith.maximumf %35, %33 : vector<16x16xf32>
    %37 = arith.maximumf %36, %34 : vector<16x16xf32>
    %c0_32 = arith.constant 0 : index
    %c128_33 = arith.constant 128 : index
    %38 = vector.load %arg13[%c0_32, %c128_33] : memref<16x272xf32, #tpu.memory_space<vmem>>, vector<16x16xf32>
    tpu.vector_store %arg13[%c0_32, %c128_33], %37 {strides = array<i32>} : memref<16x272xf32, #tpu.memory_space<vmem>>, vector<16x16xf32>,
    %c0_34 = arith.constant 0 : index
    %c128_35 = arith.constant 128 : index
    %39 = vector.load %arg13[%c0_34, %c128_35] : memref<16x272xf32, #tpu.memory_space<vmem>>, vector<16x16xf32>
    %40 = arith.maximumf %32, %39 : vector<16x16xf32>
    %c8_36 = arith.constant 8 : index
    %c0_37 = arith.constant 0 : index
    %41 = vector.load %arg12[%c8_36, %c0_37] : memref<32x16xf32, #tpu.memory_space<vmem>>, vector<16x16xf32>
    tpu.vector_store %arg12[%c8_36, %c0_37], %40 {strides = array<i32>} : memref<32x16xf32, #tpu.memory_space<vmem>>, vector<16x16xf32>,
    %c0_38 = arith.constant 0 : index
    %c128_39 = arith.constant 128 : index
    %42 = vector.load %arg13[%c0_38, %c128_39] : memref<16x272xf32, #tpu.memory_space<vmem>>, vector<16x16xf32>
    tpu.vector_store %arg13[%c0_38, %c128_39], %40 {strides = array<i32>} : memref<16x272xf32, #tpu.memory_space<vmem>>, vector<16x16xf32>,
    %c0_40 = arith.constant 0 : index
    %c122 = arith.constant 122 : index
    %43 = vector.load %arg13[%c0_40, %c122] : memref<16x272xf32, #tpu.memory_space<vmem>>, vector<16x16xf32>
    %c0_41 = arith.constant 0 : index
    %c134 = arith.constant 134 : index
    %44 = vector.load %arg13[%c0_41, %c134] : memref<16x272xf32, #tpu.memory_space<vmem>>, vector<16x16xf32>
    %45 = arith.minimumf %43, %44 : vector<16x16xf32>
    %c5 = arith.constant 5 : index
    %c0_42 = arith.constant 0 : index
    %46 = vector.load %arg12[%c5, %c0_42] : memref<32x16xf32, #tpu.memory_space<vmem>>, vector<16x16xf32>
    %c6_43 = arith.constant 6 : index
    %c0_44 = arith.constant 0 : index
    %47 = vector.load %arg12[%c6_43, %c0_44] : memref<32x16xf32, #tpu.memory_space<vmem>>, vector<16x16xf32>
    %c7_45 = arith.constant 7 : index
    %c0_46 = arith.constant 0 : index
    %48 = vector.load %arg12[%c7_45, %c0_46] : memref<32x16xf32, #tpu.memory_space<vmem>>, vector<16x16xf32>
    %c9_47 = arith.constant 9 : index
    %c0_48 = arith.constant 0 : index
    %49 = vector.load %arg12[%c9_47, %c0_48] : memref<32x16xf32, #tpu.memory_space<vmem>>, vector<16x16xf32>
    %c10_49 = arith.constant 10 : index
    %c0_50 = arith.constant 0 : index
    %50 = vector.load %arg12[%c10_49, %c0_50] : memref<32x16xf32, #tpu.memory_space<vmem>>, vector<16x16xf32>
    %c11 = arith.constant 11 : index
    %c0_51 = arith.constant 0 : index
    %51 = vector.load %arg12[%c11, %c0_51] : memref<32x16xf32, #tpu.memory_space<vmem>>, vector<16x16xf32>
    %c0_52 = arith.constant 0 : index
    %c128_53 = arith.constant 128 : index
    %52 = vector.load %arg13[%c0_52, %c128_53] : memref<16x272xf32, #tpu.memory_space<vmem>>, vector<16x16xf32>
    %53 = arith.minimumf %52, %46 : vector<16x16xf32>
    %54 = arith.minimumf %53, %47 : vector<16x16xf32>
    %55 = arith.minimumf %54, %48 : vector<16x16xf32>
    %56 = arith.minimumf %55, %49 : vector<16x16xf32>
    %57 = arith.minimumf %56, %50 : vector<16x16xf32>
    %58 = arith.minimumf %57, %51 : vector<16x16xf32>
    %c0_54 = arith.constant 0 : index
    %c128_55 = arith.constant 128 : index
    %59 = vector.load %arg13[%c0_54, %c128_55] : memref<16x272xf32, #tpu.memory_space<vmem>>, vector<16x16xf32>
    tpu.vector_store %arg13[%c0_54, %c128_55], %58 {strides = array<i32>} : memref<16x272xf32, #tpu.memory_space<vmem>>, vector<16x16xf32>,
    %c0_56 = arith.constant 0 : index
    %c123 = arith.constant 123 : index
    %60 = vector.load %arg13[%c0_56, %c123] : memref<16x272xf32, #tpu.memory_space<vmem>>, vector<16x16xf32>
    %c0_57 = arith.constant 0 : index
    %c133 = arith.constant 133 : index
    %61 = vector.load %arg13[%c0_57, %c133] : memref<16x272xf32, #tpu.memory_space<vmem>>, vector<16x16xf32>
    %62 = arith.minimumf %60, %61 : vector<16x16xf32>
    %63 = arith.minimumf %45, %62 : vector<16x16xf32>
    %c4 = arith.constant 4 : index
    %c0_58 = arith.constant 0 : index
    %64 = vector.load %arg12[%c4, %c0_58] : memref<32x16xf32, #tpu.memory_space<vmem>>, vector<16x16xf32>
    %c12 = arith.constant 12 : index
    %c0_59 = arith.constant 0 : index
    %65 = vector.load %arg12[%c12, %c0_59] : memref<32x16xf32, #tpu.memory_space<vmem>>, vector<16x16xf32>
    %c0_60 = arith.constant 0 : index
    %c128_61 = arith.constant 128 : index
    %66 = vector.load %arg13[%c0_60, %c128_61] : memref<16x272xf32, #tpu.memory_space<vmem>>, vector<16x16xf32>
    %67 = arith.minimumf %66, %64 : vector<16x16xf32>
    %68 = arith.minimumf %67, %65 : vector<16x16xf32>
    %c0_62 = arith.constant 0 : index
    %c128_63 = arith.constant 128 : index
    %69 = vector.load %arg13[%c0_62, %c128_63] : memref<16x272xf32, #tpu.memory_space<vmem>>, vector<16x16xf32>
    tpu.vector_store %arg13[%c0_62, %c128_63], %68 {strides = array<i32>} : memref<16x272xf32, #tpu.memory_space<vmem>>, vector<16x16xf32>,
    %c0_64 = arith.constant 0 : index
    %c124 = arith.constant 124 : index
    %70 = vector.load %arg13[%c0_64, %c124] : memref<16x272xf32, #tpu.memory_space<vmem>>, vector<16x16xf32>
    %c0_65 = arith.constant 0 : index
    %c132 = arith.constant 132 : index
    %71 = vector.load %arg13[%c0_65, %c132] : memref<16x272xf32, #tpu.memory_space<vmem>>, vector<16x16xf32>
    %72 = arith.minimumf %70, %71 : vector<16x16xf32>
    %73 = arith.minimumf %63, %72 : vector<16x16xf32>
    %c3 = arith.constant 3 : index
    %c0_66 = arith.constant 0 : index
    %74 = vector.load %arg12[%c3, %c0_66] : memref<32x16xf32, #tpu.memory_space<vmem>>, vector<16x16xf32>
    %c13 = arith.constant 13 : index
    %c0_67 = arith.constant 0 : index
    %75 = vector.load %arg12[%c13, %c0_67] : memref<32x16xf32, #tpu.memory_space<vmem>>, vector<16x16xf32>
    %c0_68 = arith.constant 0 : index
    %c128_69 = arith.constant 128 : index
    %76 = vector.load %arg13[%c0_68, %c128_69] : memref<16x272xf32, #tpu.memory_space<vmem>>, vector<16x16xf32>
    %77 = arith.minimumf %76, %74 : vector<16x16xf32>
    %78 = arith.minimumf %77, %75 : vector<16x16xf32>
    %c0_70 = arith.constant 0 : index
    %c128_71 = arith.constant 128 : index
    %79 = vector.load %arg13[%c0_70, %c128_71] : memref<16x272xf32, #tpu.memory_space<vmem>>, vector<16x16xf32>
    tpu.vector_store %arg13[%c0_70, %c128_71], %78 {strides = array<i32>} : memref<16x272xf32, #tpu.memory_space<vmem>>, vector<16x16xf32>,
    %c0_72 = arith.constant 0 : index
    %c125 = arith.constant 125 : index
    %80 = vector.load %arg13[%c0_72, %c125] : memref<16x272xf32, #tpu.memory_space<vmem>>, vector<16x16xf32>
    %c0_73 = arith.constant 0 : index
    %c126_74 = arith.constant 126 : index
    %81 = vector.load %arg13[%c0_73, %c126_74] : memref<16x272xf32, #tpu.memory_space<vmem>>, vector<16x16xf32>
    %c0_75 = arith.constant 0 : index
    %c127_76 = arith.constant 127 : index
    %82 = vector.load %arg13[%c0_75, %c127_76] : memref<16x272xf32, #tpu.memory_space<vmem>>, vector<16x16xf32>
    %c0_77 = arith.constant 0 : index
    %c129_78 = arith.constant 129 : index
    %83 = vector.load %arg13[%c0_77, %c129_78] : memref<16x272xf32, #tpu.memory_space<vmem>>, vector<16x16xf32>
    %c0_79 = arith.constant 0 : index
    %c130_80 = arith.constant 130 : index
    %84 = vector.load %arg13[%c0_79, %c130_80] : memref<16x272xf32, #tpu.memory_space<vmem>>, vector<16x16xf32>
    %c0_81 = arith.constant 0 : index
    %c131 = arith.constant 131 : index
    %85 = vector.load %arg13[%c0_81, %c131] : memref<16x272xf32, #tpu.memory_space<vmem>>, vector<16x16xf32>
    %86 = arith.minimumf %80, %81 : vector<16x16xf32>
    %87 = arith.minimumf %82, %83 : vector<16x16xf32>
    %88 = arith.minimumf %84, %85 : vector<16x16xf32>
    %89 = arith.minimumf %86, %87 : vector<16x16xf32>
    %90 = arith.minimumf %89, %88 : vector<16x16xf32>
    %91 = arith.minimumf %73, %90 : vector<16x16xf32>
    %c2 = arith.constant 2 : index
    %c0_82 = arith.constant 0 : index
    %92 = vector.load %arg12[%c2, %c0_82] : memref<32x16xf32, #tpu.memory_space<vmem>>, vector<16x16xf32>
    %c14 = arith.constant 14 : index
    %c0_83 = arith.constant 0 : index
    %93 = vector.load %arg12[%c14, %c0_83] : memref<32x16xf32, #tpu.memory_space<vmem>>, vector<16x16xf32>
    %c0_84 = arith.constant 0 : index
    %c128_85 = arith.constant 128 : index
    %94 = vector.load %arg13[%c0_84, %c128_85] : memref<16x272xf32, #tpu.memory_space<vmem>>, vector<16x16xf32>
    %95 = arith.minimumf %94, %92 : vector<16x16xf32>
    %96 = arith.minimumf %95, %93 : vector<16x16xf32>
    %c0_86 = arith.constant 0 : index
    %c128_87 = arith.constant 128 : index
    %97 = vector.load %arg13[%c0_86, %c128_87] : memref<16x272xf32, #tpu.memory_space<vmem>>, vector<16x16xf32>
    tpu.vector_store %arg13[%c0_86, %c128_87], %96 {strides = array<i32>} : memref<16x272xf32, #tpu.memory_space<vmem>>, vector<16x16xf32>,
    %c0_88 = arith.constant 0 : index
    %c128_89 = arith.constant 128 : index
    %98 = vector.load %arg13[%c0_88, %c128_89] : memref<16x272xf32, #tpu.memory_space<vmem>>, vector<16x16xf32>
    %99 = arith.minimumf %91, %98 : vector<16x16xf32>
    %c8_90 = arith.constant 8 : index
    %c0_91 = arith.constant 0 : index
    %100 = vector.load %arg12[%c8_90, %c0_91] : memref<32x16xf32, #tpu.memory_space<vmem>>, vector<16x16xf32>
    tpu.vector_store %arg12[%c8_90, %c0_91], %99 {strides = array<i32>} : memref<32x16xf32, #tpu.memory_space<vmem>>, vector<16x16xf32>,
    %c0_92 = arith.constant 0 : index
    %c128_93 = arith.constant 128 : index
    %101 = vector.load %arg13[%c0_92, %c128_93] : memref<16x272xf32, #tpu.memory_space<vmem>>, vector<16x16xf32>
    tpu.vector_store %arg13[%c0_92, %c128_93], %99 {strides = array<i32>} : memref<16x272xf32, #tpu.memory_space<vmem>>, vector<16x16xf32>,
    %c0_94 = arith.constant 0 : index
    %c124_95 = arith.constant 124 : index
    %102 = vector.load %arg13[%c0_94, %c124_95] : memref<16x272xf32, #tpu.memory_space<vmem>>, vector<16x16xf32>
    %c0_96 = arith.constant 0 : index
    %c132_97 = arith.constant 132 : index
    %103 = vector.load %arg13[%c0_96, %c132_97] : memref<16x272xf32, #tpu.memory_space<vmem>>, vector<16x16xf32>
    %104 = arith.maximumf %102, %103 : vector<16x16xf32>
    %c6_98 = arith.constant 6 : index
    %c0_99 = arith.constant 0 : index
    %105 = vector.load %arg12[%c6_98, %c0_99] : memref<32x16xf32, #tpu.memory_space<vmem>>, vector<16x16xf32>
    %c7_100 = arith.constant 7 : index
    %c0_101 = arith.constant 0 : index
    %106 = vector.load %arg12[%c7_100, %c0_101] : memref<32x16xf32, #tpu.memory_space<vmem>>, vector<16x16xf32>
    %c9_102 = arith.constant 9 : index
    %c0_103 = arith.constant 0 : index
    %107 = vector.load %arg12[%c9_102, %c0_103] : memref<32x16xf32, #tpu.memory_space<vmem>>, vector<16x16xf32>
    %c10_104 = arith.constant 10 : index
    %c0_105 = arith.constant 0 : index
    %108 = vector.load %arg12[%c10_104, %c0_105] : memref<32x16xf32, #tpu.memory_space<vmem>>, vector<16x16xf32>
    %c0_106 = arith.constant 0 : index
    %c128_107 = arith.constant 128 : index
    %109 = vector.load %arg13[%c0_106, %c128_107] : memref<16x272xf32, #tpu.memory_space<vmem>>, vector<16x16xf32>
    %110 = arith.maximumf %109, %105 : vector<16x16xf32>
    %111 = arith.maximumf %110, %106 : vector<16x16xf32>
    %112 = arith.maximumf %111, %107 : vector<16x16xf32>
    %113 = arith.maximumf %112, %108 : vector<16x16xf32>
    %c0_108 = arith.constant 0 : index
    %c128_109 = arith.constant 128 : index
    %114 = vector.load %arg13[%c0_108, %c128_109] : memref<16x272xf32, #tpu.memory_space<vmem>>, vector<16x16xf32>
    tpu.vector_store %arg13[%c0_108, %c128_109], %113 {strides = array<i32>} : memref<16x272xf32, #tpu.memory_space<vmem>>, vector<16x16xf32>,
    %c0_110 = arith.constant 0 : index
    %c125_111 = arith.constant 125 : index
    %115 = vector.load %arg13[%c0_110, %c125_111] : memref<16x272xf32, #tpu.memory_space<vmem>>, vector<16x16xf32>
    %c0_112 = arith.constant 0 : index
    %c131_113 = arith.constant 131 : index
    %116 = vector.load %arg13[%c0_112, %c131_113] : memref<16x272xf32, #tpu.memory_space<vmem>>, vector<16x16xf32>
    %117 = arith.maximumf %115, %116 : vector<16x16xf32>
    %118 = arith.maximumf %104, %117 : vector<16x16xf32>
    %c5_114 = arith.constant 5 : index
    %c0_115 = arith.constant 0 : index
    %119 = vector.load %arg12[%c5_114, %c0_115] : memref<32x16xf32, #tpu.memory_space<vmem>>, vector<16x16xf32>
    %c11_116 = arith.constant 11 : index
    %c0_117 = arith.constant 0 : index
    %120 = vector.load %arg12[%c11_116, %c0_117] : memref<32x16xf32, #tpu.memory_space<vmem>>, vector<16x16xf32>
    %c0_118 = arith.constant 0 : index
    %c128_119 = arith.constant 128 : index
    %121 = vector.load %arg13[%c0_118, %c128_119] : memref<16x272xf32, #tpu.memory_space<vmem>>, vector<16x16xf32>
    %122 = arith.maximumf %121, %119 : vector<16x16xf32>
    %123 = arith.maximumf %122, %120 : vector<16x16xf32>
    %c0_120 = arith.constant 0 : index
    %c128_121 = arith.constant 128 : index
    %124 = vector.load %arg13[%c0_120, %c128_121] : memref<16x272xf32, #tpu.memory_space<vmem>>, vector<16x16xf32>
    tpu.vector_store %arg13[%c0_120, %c128_121], %123 {strides = array<i32>} : memref<16x272xf32, #tpu.memory_space<vmem>>, vector<16x16xf32>,
    %c0_122 = arith.constant 0 : index
    %c126_123 = arith.constant 126 : index
    %125 = vector.load %arg13[%c0_122, %c126_123] : memref<16x272xf32, #tpu.memory_space<vmem>>, vector<16x16xf32>
    %c0_124 = arith.constant 0 : index
    %c127_125 = arith.constant 127 : index
    %126 = vector.load %arg13[%c0_124, %c127_125] : memref<16x272xf32, #tpu.memory_space<vmem>>, vector<16x16xf32>
    %c0_126 = arith.constant 0 : index
    %c129_127 = arith.constant 129 : index
    %127 = vector.load %arg13[%c0_126, %c129_127] : memref<16x272xf32, #tpu.memory_space<vmem>>, vector<16x16xf32>
    %c0_128 = arith.constant 0 : index
    %c130_129 = arith.constant 130 : index
    %128 = vector.load %arg13[%c0_128, %c130_129] : memref<16x272xf32, #tpu.memory_space<vmem>>, vector<16x16xf32>
    %129 = arith.maximumf %125, %126 : vector<16x16xf32>
    %130 = arith.maximumf %127, %128 : vector<16x16xf32>
    %131 = arith.maximumf %129, %130 : vector<16x16xf32>
    %132 = arith.maximumf %118, %131 : vector<16x16xf32>
    %c4_130 = arith.constant 4 : index
    %c0_131 = arith.constant 0 : index
    %133 = vector.load %arg12[%c4_130, %c0_131] : memref<32x16xf32, #tpu.memory_space<vmem>>, vector<16x16xf32>
    %c12_132 = arith.constant 12 : index
    %c0_133 = arith.constant 0 : index
    %134 = vector.load %arg12[%c12_132, %c0_133] : memref<32x16xf32, #tpu.memory_space<vmem>>, vector<16x16xf32>
    %c0_134 = arith.constant 0 : index
    %c128_135 = arith.constant 128 : index
    %135 = vector.load %arg13[%c0_134, %c128_135] : memref<16x272xf32, #tpu.memory_space<vmem>>, vector<16x16xf32>
    %136 = arith.maximumf %135, %133 : vector<16x16xf32>
    %137 = arith.maximumf %136, %134 : vector<16x16xf32>
    %c0_136 = arith.constant 0 : index
    %c128_137 = arith.constant 128 : index
    %138 = vector.load %arg13[%c0_136, %c128_137] : memref<16x272xf32, #tpu.memory_space<vmem>>, vector<16x16xf32>
    tpu.vector_store %arg13[%c0_136, %c128_137], %137 {strides = array<i32>} : memref<16x272xf32, #tpu.memory_space<vmem>>, vector<16x16xf32>,
    %c0_138 = arith.constant 0 : index
    %c128_139 = arith.constant 128 : index
    %139 = vector.load %arg13[%c0_138, %c128_139] : memref<16x272xf32, #tpu.memory_space<vmem>>, vector<16x16xf32>
    %140 = arith.maximumf %132, %139 : vector<16x16xf32>
    %141 = tpu.iota {dimensions = array<i32: 0>} : vector<16x16xi32>
    %142 = tpu.iota {dimensions = array<i32: 1>} : vector<16x16xi32>
    %143 = arith.cmpi sle, %141, %142 : vector<16x16xi32>
    %144 = arith.extui %143 : vector<16x16xi1> to vector<16x16xi32>
    %145 = arith.sitofp %144 : vector<16x16xi32> to vector<16x16xf32>
    %146 = arith.truncf %145 : vector<16x16xf32> to vector<16x16xbf16>
    %147 = tpu.iota {dimensions = array<i32: 0>} : vector<16x16xi32>
    %148 = tpu.iota {dimensions = array<i32: 1>} : vector<16x16xi32>
    %149 = arith.cmpi sge, %147, %148 : vector<16x16xi32>
    %150 = arith.extui %149 : vector<16x16xi1> to vector<16x16xi32>
    %151 = arith.sitofp %150 : vector<16x16xi32> to vector<16x16xf32>
    %152 = arith.truncf %151 : vector<16x16xf32> to vector<16x16xbf16>
    %153 = arith.truncf %140 : vector<16x16xf32> to vector<16x16xbf16>
    %cst_140 = arith.constant dense<0.000000e+00> : vector<16x16xf32>
    %154 = tpu.matmul %153, %146, %cst_140 {dimension_numbers = #tpu.dot_dimension_numbers<[1], [0], [0], [1], [0, 0, 1, 1], [], []>} : vector<16x16xbf16>, vector<16x16xbf16>, vector<16x16xf32> -> vector<16x16xf32>
    %cst_141 = arith.constant dense<0.000000e+00> : vector<16x16xf32>
    %155 = tpu.matmul %152, %153, %cst_141 {dimension_numbers = #tpu.dot_dimension_numbers<[1], [0], [0], [1], [0, 0, 1, 1], [], []>} : vector<16x16xbf16>, vector<16x16xbf16>, vector<16x16xf32> -> vector<16x16xf32>
    %cst_142 = arith.constant 0.000000e+00 : f32
    %156 = vector.broadcast %cst_142 : f32 to vector<16x16xf32>
    %157 = arith.cmpf ogt, %154, %156 : vector<16x16xf32>
    %158 = vector.extract_strided_slice %154 {offsets = [0, 15], sizes = [16, 1], strides = [1, 1]} : vector<16x16xf32> to vector<16x1xf32>
    %159 = vector.broadcast %158 : vector<16x1xf32> to vector<16x16xf32>
    %160 = arith.cmpf olt, %154, %159 : vector<16x16xf32>
    %161 = arith.andi %157, %160 : vector<16x16xi1>
    %cst_143 = arith.constant 0.000000e+00 : f32
    %162 = vector.broadcast %cst_143 : f32 to vector<16x16xf32>
    %163 = arith.cmpf ogt, %155, %162 : vector<16x16xf32>
    %164 = arith.andi %161, %163 : vector<16x16xi1>
    %165 = vector.extract_strided_slice %155 {offsets = [15, 0], sizes = [1, 16], strides = [1, 1]} : vector<16x16xf32> to vector<1x16xf32>
    %166 = vector.broadcast %165 : vector<1x16xf32> to vector<16x16xf32>
    %167 = arith.cmpf olt, %155, %166 : vector<16x16xf32>
    %168 = arith.andi %164, %167 : vector<16x16xi1>
    %169 = arith.extui %168 : vector<16x16xi1> to vector<16x16xi32>
    %170 = arith.sitofp %169 : vector<16x16xi32> to vector<16x16xf32>
    %cst_144 = arith.constant 1.000000e+00 : f32
    %171 = vector.broadcast %cst_144 : f32 to vector<16x16xf32>
    %172 = arith.subf %171, %140 : vector<16x16xf32>
    %173 = arith.mulf %170, %172 : vector<16x16xf32>
    %c8_145 = arith.constant 8 : index
    %c0_146 = arith.constant 0 : index
    %174 = vector.load %arg12[%c8_145, %c0_146] : memref<32x16xf32, #tpu.memory_space<vmem>>, vector<16x16xf32>
    tpu.vector_store %arg12[%c8_145, %c0_146], %173 {strides = array<i32>} : memref<32x16xf32, #tpu.memory_space<vmem>>, vector<16x16xf32>,
    %c0_147 = arith.constant 0 : index
    %c128_148 = arith.constant 128 : index
    %175 = vector.load %arg13[%c0_147, %c128_148] : memref<16x272xf32, #tpu.memory_space<vmem>>, vector<16x16xf32>
    tpu.vector_store %arg13[%c0_147, %c128_148], %173 {strides = array<i32>} : memref<16x272xf32, #tpu.memory_space<vmem>>, vector<16x16xf32>,
    %c0_149 = arith.constant 0 : index
    %c123_150 = arith.constant 123 : index
    %176 = vector.load %arg13[%c0_149, %c123_150] : memref<16x272xf32, #tpu.memory_space<vmem>>, vector<16x16xf32>
    %c0_151 = arith.constant 0 : index
    %c133_152 = arith.constant 133 : index
    %177 = vector.load %arg13[%c0_151, %c133_152] : memref<16x272xf32, #tpu.memory_space<vmem>>, vector<16x16xf32>
    %178 = arith.maximumf %176, %177 : vector<16x16xf32>
    %c5_153 = arith.constant 5 : index
    %c0_154 = arith.constant 0 : index
    %179 = vector.load %arg12[%c5_153, %c0_154] : memref<32x16xf32, #tpu.memory_space<vmem>>, vector<16x16xf32>
    %c6_155 = arith.constant 6 : index
    %c0_156 = arith.constant 0 : index
    %180 = vector.load %arg12[%c6_155, %c0_156] : memref<32x16xf32, #tpu.memory_space<vmem>>, vector<16x16xf32>
    %c7_157 = arith.constant 7 : index
    %c0_158 = arith.constant 0 : index
    %181 = vector.load %arg12[%c7_157, %c0_158] : memref<32x16xf32, #tpu.memory_space<vmem>>, vector<16x16xf32>
    %c9_159 = arith.constant 9 : index
    %c0_160 = arith.constant 0 : index
    %182 = vector.load %arg12[%c9_159, %c0_160] : memref<32x16xf32, #tpu.memory_space<vmem>>, vector<16x16xf32>
    %c10_161 = arith.constant 10 : index
    %c0_162 = arith.constant 0 : index
    %183 = vector.load %arg12[%c10_161, %c0_162] : memref<32x16xf32, #tpu.memory_space<vmem>>, vector<16x16xf32>
    %c11_163 = arith.constant 11 : index
    %c0_164 = arith.constant 0 : index
    %184 = vector.load %arg12[%c11_163, %c0_164] : memref<32x16xf32, #tpu.memory_space<vmem>>, vector<16x16xf32>
    %c0_165 = arith.constant 0 : index
    %c128_166 = arith.constant 128 : index
    %185 = vector.load %arg13[%c0_165, %c128_166] : memref<16x272xf32, #tpu.memory_space<vmem>>, vector<16x16xf32>
    %186 = arith.maximumf %185, %179 : vector<16x16xf32>
    %187 = arith.maximumf %186, %180 : vector<16x16xf32>
    %188 = arith.maximumf %187, %181 : vector<16x16xf32>
    %189 = arith.maximumf %188, %182 : vector<16x16xf32>
    %190 = arith.maximumf %189, %183 : vector<16x16xf32>
    %191 = arith.maximumf %190, %184 : vector<16x16xf32>
    %c0_167 = arith.constant 0 : index
    %c128_168 = arith.constant 128 : index
    %192 = vector.load %arg13[%c0_167, %c128_168] : memref<16x272xf32, #tpu.memory_space<vmem>>, vector<16x16xf32>
    tpu.vector_store %arg13[%c0_167, %c128_168], %191 {strides = array<i32>} : memref<16x272xf32, #tpu.memory_space<vmem>>, vector<16x16xf32>,
    %c0_169 = arith.constant 0 : index
    %c124_170 = arith.constant 124 : index
    %193 = vector.load %arg13[%c0_169, %c124_170] : memref<16x272xf32, #tpu.memory_space<vmem>>, vector<16x16xf32>
    %c0_171 = arith.constant 0 : index
    %c132_172 = arith.constant 132 : index
    %194 = vector.load %arg13[%c0_171, %c132_172] : memref<16x272xf32, #tpu.memory_space<vmem>>, vector<16x16xf32>
    %195 = arith.maximumf %193, %194 : vector<16x16xf32>
    %196 = arith.maximumf %178, %195 : vector<16x16xf32>
    %c4_173 = arith.constant 4 : index
    %c0_174 = arith.constant 0 : index
    %197 = vector.load %arg12[%c4_173, %c0_174] : memref<32x16xf32, #tpu.memory_space<vmem>>, vector<16x16xf32>
    %c12_175 = arith.constant 12 : index
    %c0_176 = arith.constant 0 : index
    %198 = vector.load %arg12[%c12_175, %c0_176] : memref<32x16xf32, #tpu.memory_space<vmem>>, vector<16x16xf32>
    %c0_177 = arith.constant 0 : index
    %c128_178 = arith.constant 128 : index
    %199 = vector.load %arg13[%c0_177, %c128_178] : memref<16x272xf32, #tpu.memory_space<vmem>>, vector<16x16xf32>
    %200 = arith.maximumf %199, %197 : vector<16x16xf32>
    %201 = arith.maximumf %200, %198 : vector<16x16xf32>
    %c0_179 = arith.constant 0 : index
    %c128_180 = arith.constant 128 : index
    %202 = vector.load %arg13[%c0_179, %c128_180] : memref<16x272xf32, #tpu.memory_space<vmem>>, vector<16x16xf32>
    tpu.vector_store %arg13[%c0_179, %c128_180], %201 {strides = array<i32>} : memref<16x272xf32, #tpu.memory_space<vmem>>, vector<16x16xf32>,
    %c0_181 = arith.constant 0 : index
    %c125_182 = arith.constant 125 : index
    %203 = vector.load %arg13[%c0_181, %c125_182] : memref<16x272xf32, #tpu.memory_space<vmem>>, vector<16x16xf32>
    %c0_183 = arith.constant 0 : index
    %c126_184 = arith.constant 126 : index
    %204 = vector.load %arg13[%c0_183, %c126_184] : memref<16x272xf32, #tpu.memory_space<vmem>>, vector<16x16xf32>
    %c0_185 = arith.constant 0 : index
    %c127_186 = arith.constant 127 : index
    %205 = vector.load %arg13[%c0_185, %c127_186] : memref<16x272xf32, #tpu.memory_space<vmem>>, vector<16x16xf32>
    %c0_187 = arith.constant 0 : index
    %c129_188 = arith.constant 129 : index
    %206 = vector.load %arg13[%c0_187, %c129_188] : memref<16x272xf32, #tpu.memory_space<vmem>>, vector<16x16xf32>
    %c0_189 = arith.constant 0 : index
    %c130_190 = arith.constant 130 : index
    %207 = vector.load %arg13[%c0_189, %c130_190] : memref<16x272xf32, #tpu.memory_space<vmem>>, vector<16x16xf32>
    %c0_191 = arith.constant 0 : index
    %c131_192 = arith.constant 131 : index
    %208 = vector.load %arg13[%c0_191, %c131_192] : memref<16x272xf32, #tpu.memory_space<vmem>>, vector<16x16xf32>
    %209 = arith.maximumf %203, %204 : vector<16x16xf32>
    %210 = arith.maximumf %205, %206 : vector<16x16xf32>
    %211 = arith.maximumf %207, %208 : vector<16x16xf32>
    %212 = arith.maximumf %209, %210 : vector<16x16xf32>
    %213 = arith.maximumf %212, %211 : vector<16x16xf32>
    %214 = arith.maximumf %196, %213 : vector<16x16xf32>
    %c3_193 = arith.constant 3 : index
    %c0_194 = arith.constant 0 : index
    %215 = vector.load %arg12[%c3_193, %c0_194] : memref<32x16xf32, #tpu.memory_space<vmem>>, vector<16x16xf32>
    %c13_195 = arith.constant 13 : index
    %c0_196 = arith.constant 0 : index
    %216 = vector.load %arg12[%c13_195, %c0_196] : memref<32x16xf32, #tpu.memory_space<vmem>>, vector<16x16xf32>
    %c0_197 = arith.constant 0 : index
    %c128_198 = arith.constant 128 : index
    %217 = vector.load %arg13[%c0_197, %c128_198] : memref<16x272xf32, #tpu.memory_space<vmem>>, vector<16x16xf32>
    %218 = arith.maximumf %217, %215 : vector<16x16xf32>
    %219 = arith.maximumf %218, %216 : vector<16x16xf32>
    %c0_199 = arith.constant 0 : index
    %c128_200 = arith.constant 128 : index
    %220 = vector.load %arg13[%c0_199, %c128_200] : memref<16x272xf32, #tpu.memory_space<vmem>>, vector<16x16xf32>
    tpu.vector_store %arg13[%c0_199, %c128_200], %219 {strides = array<i32>} : memref<16x272xf32, #tpu.memory_space<vmem>>, vector<16x16xf32>,
    %c0_201 = arith.constant 0 : index
    %c128_202 = arith.constant 128 : index
    %221 = vector.load %arg13[%c0_201, %c128_202] : memref<16x272xf32, #tpu.memory_space<vmem>>, vector<16x16xf32>
    %222 = arith.maximumf %214, %221 : vector<16x16xf32>
    %c8_203 = arith.constant 8 : index
    %c0_204 = arith.constant 0 : index
    %223 = vector.load %arg12[%c8_203, %c0_204] : memref<32x16xf32, #tpu.memory_space<vmem>>, vector<16x16xf32>
    tpu.vector_store %arg12[%c8_203, %c0_204], %222 {strides = array<i32>} : memref<32x16xf32, #tpu.memory_space<vmem>>, vector<16x16xf32>,
    %c0_205 = arith.constant 0 : index
    %c128_206 = arith.constant 128 : index
    %224 = vector.load %arg13[%c0_205, %c128_206] : memref<16x272xf32, #tpu.memory_space<vmem>>, vector<16x16xf32>
    tpu.vector_store %arg13[%c0_205, %c128_206], %222 {strides = array<i32>} : memref<16x272xf32, #tpu.memory_space<vmem>>, vector<16x16xf32>,
    %c0_207 = arith.constant 0 : index
    %c122_208 = arith.constant 122 : index
    %225 = vector.load %arg13[%c0_207, %c122_208] : memref<16x272xf32, #tpu.memory_space<vmem>>, vector<16x16xf32>
    %c0_209 = arith.constant 0 : index
    %c134_210 = arith.constant 134 : index
    %226 = vector.load %arg13[%c0_209, %c134_210] : memref<16x272xf32, #tpu.memory_space<vmem>>, vector<16x16xf32>
    %227 = arith.minimumf %225, %226 : vector<16x16xf32>
    %c5_211 = arith.constant 5 : index
    %c0_212 = arith.constant 0 : index
    %228 = vector.load %arg12[%c5_211, %c0_212] : memref<32x16xf32, #tpu.memory_space<vmem>>, vector<16x16xf32>
    %c6_213 = arith.constant 6 : index
    %c0_214 = arith.constant 0 : index
    %229 = vector.load %arg12[%c6_213, %c0_214] : memref<32x16xf32, #tpu.memory_space<vmem>>, vector<16x16xf32>
    %c7_215 = arith.constant 7 : index
    %c0_216 = arith.constant 0 : index
    %230 = vector.load %arg12[%c7_215, %c0_216] : memref<32x16xf32, #tpu.memory_space<vmem>>, vector<16x16xf32>
    %c9_217 = arith.constant 9 : index
    %c0_218 = arith.constant 0 : index
    %231 = vector.load %arg12[%c9_217, %c0_218] : memref<32x16xf32, #tpu.memory_space<vmem>>, vector<16x16xf32>
    %c10_219 = arith.constant 10 : index
    %c0_220 = arith.constant 0 : index
    %232 = vector.load %arg12[%c10_219, %c0_220] : memref<32x16xf32, #tpu.memory_space<vmem>>, vector<16x16xf32>
    %c11_221 = arith.constant 11 : index
    %c0_222 = arith.constant 0 : index
    %233 = vector.load %arg12[%c11_221, %c0_222] : memref<32x16xf32, #tpu.memory_space<vmem>>, vector<16x16xf32>
    %c0_223 = arith.constant 0 : index
    %c128_224 = arith.constant 128 : index
    %234 = vector.load %arg13[%c0_223, %c128_224] : memref<16x272xf32, #tpu.memory_space<vmem>>, vector<16x16xf32>
    %235 = arith.minimumf %234, %228 : vector<16x16xf32>
    %236 = arith.minimumf %235, %229 : vector<16x16xf32>
    %237 = arith.minimumf %236, %230 : vector<16x16xf32>
    %238 = arith.minimumf %237, %231 : vector<16x16xf32>
    %239 = arith.minimumf %238, %232 : vector<16x16xf32>
    %240 = arith.minimumf %239, %233 : vector<16x16xf32>
    %c0_225 = arith.constant 0 : index
    %c128_226 = arith.constant 128 : index
    %241 = vector.load %arg13[%c0_225, %c128_226] : memref<16x272xf32, #tpu.memory_space<vmem>>, vector<16x16xf32>
    tpu.vector_store %arg13[%c0_225, %c128_226], %240 {strides = array<i32>} : memref<16x272xf32, #tpu.memory_space<vmem>>, vector<16x16xf32>,
    %c0_227 = arith.constant 0 : index
    %c123_228 = arith.constant 123 : index
    %242 = vector.load %arg13[%c0_227, %c123_228] : memref<16x272xf32, #tpu.memory_space<vmem>>, vector<16x16xf32>
    %c0_229 = arith.constant 0 : index
    %c133_230 = arith.constant 133 : index
    %243 = vector.load %arg13[%c0_229, %c133_230] : memref<16x272xf32, #tpu.memory_space<vmem>>, vector<16x16xf32>
    %244 = arith.minimumf %242, %243 : vector<16x16xf32>
    %245 = arith.minimumf %227, %244 : vector<16x16xf32>
    %c4_231 = arith.constant 4 : index
    %c0_232 = arith.constant 0 : index
    %246 = vector.load %arg12[%c4_231, %c0_232] : memref<32x16xf32, #tpu.memory_space<vmem>>, vector<16x16xf32>
    %c12_233 = arith.constant 12 : index
    %c0_234 = arith.constant 0 : index
    %247 = vector.load %arg12[%c12_233, %c0_234] : memref<32x16xf32, #tpu.memory_space<vmem>>, vector<16x16xf32>
    %c0_235 = arith.constant 0 : index
    %c128_236 = arith.constant 128 : index
    %248 = vector.load %arg13[%c0_235, %c128_236] : memref<16x272xf32, #tpu.memory_space<vmem>>, vector<16x16xf32>
    %249 = arith.minimumf %248, %246 : vector<16x16xf32>
    %250 = arith.minimumf %249, %247 : vector<16x16xf32>
    %c0_237 = arith.constant 0 : index
    %c128_238 = arith.constant 128 : index
    %251 = vector.load %arg13[%c0_237, %c128_238] : memref<16x272xf32, #tpu.memory_space<vmem>>, vector<16x16xf32>
    tpu.vector_store %arg13[%c0_237, %c128_238], %250 {strides = array<i32>} : memref<16x272xf32, #tpu.memory_space<vmem>>, vector<16x16xf32>,
    %c0_239 = arith.constant 0 : index
    %c124_240 = arith.constant 124 : index
    %252 = vector.load %arg13[%c0_239, %c124_240] : memref<16x272xf32, #tpu.memory_space<vmem>>, vector<16x16xf32>
    %c0_241 = arith.constant 0 : index
    %c132_242 = arith.constant 132 : index
    %253 = vector.load %arg13[%c0_241, %c132_242] : memref<16x272xf32, #tpu.memory_space<vmem>>, vector<16x16xf32>
    %254 = arith.minimumf %252, %253 : vector<16x16xf32>
    %255 = arith.minimumf %245, %254 : vector<16x16xf32>
    %c3_243 = arith.constant 3 : index
    %c0_244 = arith.constant 0 : index
    %256 = vector.load %arg12[%c3_243, %c0_244] : memref<32x16xf32, #tpu.memory_space<vmem>>, vector<16x16xf32>
    %c13_245 = arith.constant 13 : index
    %c0_246 = arith.constant 0 : index
    %257 = vector.load %arg12[%c13_245, %c0_246] : memref<32x16xf32, #tpu.memory_space<vmem>>, vector<16x16xf32>
    %c0_247 = arith.constant 0 : index
    %c128_248 = arith.constant 128 : index
    %258 = vector.load %arg13[%c0_247, %c128_248] : memref<16x272xf32, #tpu.memory_space<vmem>>, vector<16x16xf32>
    %259 = arith.minimumf %258, %256 : vector<16x16xf32>
    %260 = arith.minimumf %259, %257 : vector<16x16xf32>
    %c0_249 = arith.constant 0 : index
    %c128_250 = arith.constant 128 : index
    %261 = vector.load %arg13[%c0_249, %c128_250] : memref<16x272xf32, #tpu.memory_space<vmem>>, vector<16x16xf32>
    tpu.vector_store %arg13[%c0_249, %c128_250], %260 {strides = array<i32>} : memref<16x272xf32, #tpu.memory_space<vmem>>, vector<16x16xf32>,
    %c0_251 = arith.constant 0 : index
    %c125_252 = arith.constant 125 : index
    %262 = vector.load %arg13[%c0_251, %c125_252] : memref<16x272xf32, #tpu.memory_space<vmem>>, vector<16x16xf32>
    %c0_253 = arith.constant 0 : index
    %c126_254 = arith.constant 126 : index
    %263 = vector.load %arg13[%c0_253, %c126_254] : memref<16x272xf32, #tpu.memory_space<vmem>>, vector<16x16xf32>
    %c0_255 = arith.constant 0 : index
    %c127_256 = arith.constant 127 : index
    %264 = vector.load %arg13[%c0_255, %c127_256] : memref<16x272xf32, #tpu.memory_space<vmem>>, vector<16x16xf32>
    %c0_257 = arith.constant 0 : index
    %c129_258 = arith.constant 129 : index
    %265 = vector.load %arg13[%c0_257, %c129_258] : memref<16x272xf32, #tpu.memory_space<vmem>>, vector<16x16xf32>
    %c0_259 = arith.constant 0 : index
    %c130_260 = arith.constant 130 : index
    %266 = vector.load %arg13[%c0_259, %c130_260] : memref<16x272xf32, #tpu.memory_space<vmem>>, vector<16x16xf32>
    %c0_261 = arith.constant 0 : index
    %c131_262 = arith.constant 131 : index
    %267 = vector.load %arg13[%c0_261, %c131_262] : memref<16x272xf32, #tpu.memory_space<vmem>>, vector<16x16xf32>
    %268 = arith.minimumf %262, %263 : vector<16x16xf32>
    %269 = arith.minimumf %264, %265 : vector<16x16xf32>
    %270 = arith.minimumf %266, %267 : vector<16x16xf32>
    %271 = arith.minimumf %268, %269 : vector<16x16xf32>
    %272 = arith.minimumf %271, %270 : vector<16x16xf32>
    %273 = arith.minimumf %255, %272 : vector<16x16xf32>
    %c2_263 = arith.constant 2 : index
    %c0_264 = arith.constant 0 : index
    %274 = vector.load %arg12[%c2_263, %c0_264] : memref<32x16xf32, #tpu.memory_space<vmem>>, vector<16x16xf32>
    %c14_265 = arith.constant 14 : index
    %c0_266 = arith.constant 0 : index
    %275 = vector.load %arg12[%c14_265, %c0_266] : memref<32x16xf32, #tpu.memory_space<vmem>>, vector<16x16xf32>
    %c0_267 = arith.constant 0 : index
    %c128_268 = arith.constant 128 : index
    %276 = vector.load %arg13[%c0_267, %c128_268] : memref<16x272xf32, #tpu.memory_space<vmem>>, vector<16x16xf32>
    %277 = arith.minimumf %276, %274 : vector<16x16xf32>
    %278 = arith.minimumf %277, %275 : vector<16x16xf32>
    %c0_269 = arith.constant 0 : index
    %c128_270 = arith.constant 128 : index
    %279 = vector.load %arg13[%c0_269, %c128_270] : memref<16x272xf32, #tpu.memory_space<vmem>>, vector<16x16xf32>
    tpu.vector_store %arg13[%c0_269, %c128_270], %278 {strides = array<i32>} : memref<16x272xf32, #tpu.memory_space<vmem>>, vector<16x16xf32>,
    %c0_271 = arith.constant 0 : index
    %c128_272 = arith.constant 128 : index
    %280 = vector.load %arg13[%c0_271, %c128_272] : memref<16x272xf32, #tpu.memory_space<vmem>>, vector<16x16xf32>
    %281 = arith.minimumf %273, %280 : vector<16x16xf32>
    %c8_273 = arith.constant 8 : index
    %c0_274 = arith.constant 0 : index
    %282 = vector.load %arg12[%c8_273, %c0_274] : memref<32x16xf32, #tpu.memory_space<vmem>>, vector<16x16xf32>
    tpu.vector_store %arg12[%c8_273, %c0_274], %281 {strides = array<i32>} : memref<32x16xf32, #tpu.memory_space<vmem>>, vector<16x16xf32>,
    %c0_275 = arith.constant 0 : index
    %c128_276 = arith.constant 128 : index
    %283 = vector.load %arg13[%c0_275, %c128_276] : memref<16x272xf32, #tpu.memory_space<vmem>>, vector<16x16xf32>
    tpu.vector_store %arg13[%c0_275, %c128_276], %281 {strides = array<i32>} : memref<16x272xf32, #tpu.memory_space<vmem>>, vector<16x16xf32>,
    %c0_277 = arith.constant 0 : index
    %c123_278 = arith.constant 123 : index
    %284 = vector.load %arg13[%c0_277, %c123_278] : memref<16x272xf32, #tpu.memory_space<vmem>>, vector<16x16xf32>
    %c0_279 = arith.constant 0 : index
    %c133_280 = arith.constant 133 : index
    %285 = vector.load %arg13[%c0_279, %c133_280] : memref<16x272xf32, #tpu.memory_space<vmem>>, vector<16x16xf32>
    %286 = arith.maximumf %284, %285 : vector<16x16xf32>
    %c5_281 = arith.constant 5 : index
    %c0_282 = arith.constant 0 : index
    %287 = vector.load %arg12[%c5_281, %c0_282] : memref<32x16xf32, #tpu.memory_space<vmem>>, vector<16x16xf32>
    %c6_283 = arith.constant 6 : index
    %c0_284 = arith.constant 0 : index
    %288 = vector.load %arg12[%c6_283, %c0_284] : memref<32x16xf32, #tpu.memory_space<vmem>>, vector<16x16xf32>
    %c7_285 = arith.constant 7 : index
    %c0_286 = arith.constant 0 : index
    %289 = vector.load %arg12[%c7_285, %c0_286] : memref<32x16xf32, #tpu.memory_space<vmem>>, vector<16x16xf32>
    %c9_287 = arith.constant 9 : index
    %c0_288 = arith.constant 0 : index
    %290 = vector.load %arg12[%c9_287, %c0_288] : memref<32x16xf32, #tpu.memory_space<vmem>>, vector<16x16xf32>
    %c10_289 = arith.constant 10 : index
    %c0_290 = arith.constant 0 : index
    %291 = vector.load %arg12[%c10_289, %c0_290] : memref<32x16xf32, #tpu.memory_space<vmem>>, vector<16x16xf32>
    %c11_291 = arith.constant 11 : index
    %c0_292 = arith.constant 0 : index
    %292 = vector.load %arg12[%c11_291, %c0_292] : memref<32x16xf32, #tpu.memory_space<vmem>>, vector<16x16xf32>
    %c0_293 = arith.constant 0 : index
    %c128_294 = arith.constant 128 : index
    %293 = vector.load %arg13[%c0_293, %c128_294] : memref<16x272xf32, #tpu.memory_space<vmem>>, vector<16x16xf32>
    %294 = arith.maximumf %293, %287 : vector<16x16xf32>
    %295 = arith.maximumf %294, %288 : vector<16x16xf32>
    %296 = arith.maximumf %295, %289 : vector<16x16xf32>
    %297 = arith.maximumf %296, %290 : vector<16x16xf32>
    %298 = arith.maximumf %297, %291 : vector<16x16xf32>
    %299 = arith.maximumf %298, %292 : vector<16x16xf32>
    %c0_295 = arith.constant 0 : index
    %c128_296 = arith.constant 128 : index
    %300 = vector.load %arg13[%c0_295, %c128_296] : memref<16x272xf32, #tpu.memory_space<vmem>>, vector<16x16xf32>
    tpu.vector_store %arg13[%c0_295, %c128_296], %299 {strides = array<i32>} : memref<16x272xf32, #tpu.memory_space<vmem>>, vector<16x16xf32>,
    %c0_297 = arith.constant 0 : index
    %c124_298 = arith.constant 124 : index
    %301 = vector.load %arg13[%c0_297, %c124_298] : memref<16x272xf32, #tpu.memory_space<vmem>>, vector<16x16xf32>
    %c0_299 = arith.constant 0 : index
    %c132_300 = arith.constant 132 : index
    %302 = vector.load %arg13[%c0_299, %c132_300] : memref<16x272xf32, #tpu.memory_space<vmem>>, vector<16x16xf32>
    %303 = arith.maximumf %301, %302 : vector<16x16xf32>
    %304 = arith.maximumf %286, %303 : vector<16x16xf32>
    %c4_301 = arith.constant 4 : index
    %c0_302 = arith.constant 0 : index
    %305 = vector.load %arg12[%c4_301, %c0_302] : memref<32x16xf32, #tpu.memory_space<vmem>>, vector<16x16xf32>
    %c12_303 = arith.constant 12 : index
    %c0_304 = arith.constant 0 : index
    %306 = vector.load %arg12[%c12_303, %c0_304] : memref<32x16xf32, #tpu.memory_space<vmem>>, vector<16x16xf32>
    %c0_305 = arith.constant 0 : index
    %c128_306 = arith.constant 128 : index
    %307 = vector.load %arg13[%c0_305, %c128_306] : memref<16x272xf32, #tpu.memory_space<vmem>>, vector<16x16xf32>
    %308 = arith.maximumf %307, %305 : vector<16x16xf32>
    %309 = arith.maximumf %308, %306 : vector<16x16xf32>
    %c0_307 = arith.constant 0 : index
    %c128_308 = arith.constant 128 : index
    %310 = vector.load %arg13[%c0_307, %c128_308] : memref<16x272xf32, #tpu.memory_space<vmem>>, vector<16x16xf32>
    tpu.vector_store %arg13[%c0_307, %c128_308], %309 {strides = array<i32>} : memref<16x272xf32, #tpu.memory_space<vmem>>, vector<16x16xf32>,
    %c0_309 = arith.constant 0 : index
    %c125_310 = arith.constant 125 : index
    %311 = vector.load %arg13[%c0_309, %c125_310] : memref<16x272xf32, #tpu.memory_space<vmem>>, vector<16x16xf32>
    %c0_311 = arith.constant 0 : index
    %c126_312 = arith.constant 126 : index
    %312 = vector.load %arg13[%c0_311, %c126_312] : memref<16x272xf32, #tpu.memory_space<vmem>>, vector<16x16xf32>
    %c0_313 = arith.constant 0 : index
    %c127_314 = arith.constant 127 : index
    %313 = vector.load %arg13[%c0_313, %c127_314] : memref<16x272xf32, #tpu.memory_space<vmem>>, vector<16x16xf32>
    %c0_315 = arith.constant 0 : index
    %c129_316 = arith.constant 129 : index
    %314 = vector.load %arg13[%c0_315, %c129_316] : memref<16x272xf32, #tpu.memory_space<vmem>>, vector<16x16xf32>
    %c0_317 = arith.constant 0 : index
    %c130_318 = arith.constant 130 : index
    %315 = vector.load %arg13[%c0_317, %c130_318] : memref<16x272xf32, #tpu.memory_space<vmem>>, vector<16x16xf32>
    %c0_319 = arith.constant 0 : index
    %c131_320 = arith.constant 131 : index
    %316 = vector.load %arg13[%c0_319, %c131_320] : memref<16x272xf32, #tpu.memory_space<vmem>>, vector<16x16xf32>
    %317 = arith.maximumf %311, %312 : vector<16x16xf32>
    %318 = arith.maximumf %313, %314 : vector<16x16xf32>
    %319 = arith.maximumf %315, %316 : vector<16x16xf32>
    %320 = arith.maximumf %317, %318 : vector<16x16xf32>
    %321 = arith.maximumf %320, %319 : vector<16x16xf32>
    %322 = arith.maximumf %304, %321 : vector<16x16xf32>
    %c3_321 = arith.constant 3 : index
    %c0_322 = arith.constant 0 : index
    %323 = vector.load %arg12[%c3_321, %c0_322] : memref<32x16xf32, #tpu.memory_space<vmem>>, vector<16x16xf32>
    %c13_323 = arith.constant 13 : index
    %c0_324 = arith.constant 0 : index
    %324 = vector.load %arg12[%c13_323, %c0_324] : memref<32x16xf32, #tpu.memory_space<vmem>>, vector<16x16xf32>
    %c0_325 = arith.constant 0 : index
    %c128_326 = arith.constant 128 : index
    %325 = vector.load %arg13[%c0_325, %c128_326] : memref<16x272xf32, #tpu.memory_space<vmem>>, vector<16x16xf32>
    %326 = arith.maximumf %325, %323 : vector<16x16xf32>
    %327 = arith.maximumf %326, %324 : vector<16x16xf32>
    %c0_327 = arith.constant 0 : index
    %c128_328 = arith.constant 128 : index
    %328 = vector.load %arg13[%c0_327, %c128_328] : memref<16x272xf32, #tpu.memory_space<vmem>>, vector<16x16xf32>
    tpu.vector_store %arg13[%c0_327, %c128_328], %327 {strides = array<i32>} : memref<16x272xf32, #tpu.memory_space<vmem>>, vector<16x16xf32>,
    %c0_329 = arith.constant 0 : index
    %c128_330 = arith.constant 128 : index
    %329 = vector.load %arg13[%c0_329, %c128_330] : memref<16x272xf32, #tpu.memory_space<vmem>>, vector<16x16xf32>
    %330 = arith.maximumf %322, %329 : vector<16x16xf32>
    %cst_331 = arith.constant 4.000000e-01 : f32
    %331 = vector.broadcast %cst_331 : f32 to vector<16x16xf32>
    %332 = arith.cmpf ogt, %13, %331 : vector<16x16xf32>
    %333 = arith.extui %332 : vector<16x16xi1> to vector<16x16xi32>
    %334 = arith.sitofp %333 : vector<16x16xi32> to vector<16x16xf32>
    %335 = arith.mulf %334, %281 : vector<16x16xf32>
    %c8_332 = arith.constant 8 : index
    %c0_333 = arith.constant 0 : index
    %336 = vector.load %arg12[%c8_332, %c0_333] : memref<32x16xf32, #tpu.memory_space<vmem>>, vector<16x16xf32>
    tpu.vector_store %arg12[%c8_332, %c0_333], %335 {strides = array<i32>} : memref<32x16xf32, #tpu.memory_space<vmem>>, vector<16x16xf32>,
    %c0_334 = arith.constant 0 : index
    %c128_335 = arith.constant 128 : index
    %337 = vector.load %arg13[%c0_334, %c128_335] : memref<16x272xf32, #tpu.memory_space<vmem>>, vector<16x16xf32>
    tpu.vector_store %arg13[%c0_334, %c128_335], %335 {strides = array<i32>} : memref<16x272xf32, #tpu.memory_space<vmem>>, vector<16x16xf32>,
    %c0_336 = arith.constant 0 : index
    %c127_337 = arith.constant 127 : index
    %338 = vector.load %arg13[%c0_336, %c127_337] : memref<16x272xf32, #tpu.memory_space<vmem>>, vector<16x16xf32>
    %c0_338 = arith.constant 0 : index
    %c129_339 = arith.constant 129 : index
    %339 = vector.load %arg13[%c0_338, %c129_339] : memref<16x272xf32, #tpu.memory_space<vmem>>, vector<16x16xf32>
    %340 = arith.minimumf %338, %339 : vector<16x16xf32>
    %c7_340 = arith.constant 7 : index
    %c0_341 = arith.constant 0 : index
    %341 = vector.load %arg12[%c7_340, %c0_341] : memref<32x16xf32, #tpu.memory_space<vmem>>, vector<16x16xf32>
    %c9_342 = arith.constant 9 : index
    %c0_343 = arith.constant 0 : index
    %342 = vector.load %arg12[%c9_342, %c0_343] : memref<32x16xf32, #tpu.memory_space<vmem>>, vector<16x16xf32>
    %c0_344 = arith.constant 0 : index
    %c128_345 = arith.constant 128 : index
    %343 = vector.load %arg13[%c0_344, %c128_345] : memref<16x272xf32, #tpu.memory_space<vmem>>, vector<16x16xf32>
    %344 = arith.minimumf %343, %341 : vector<16x16xf32>
    %345 = arith.minimumf %344, %342 : vector<16x16xf32>
    %c0_346 = arith.constant 0 : index
    %c128_347 = arith.constant 128 : index
    %346 = vector.load %arg13[%c0_346, %c128_347] : memref<16x272xf32, #tpu.memory_space<vmem>>, vector<16x16xf32>
    tpu.vector_store %arg13[%c0_346, %c128_347], %345 {strides = array<i32>} : memref<16x272xf32, #tpu.memory_space<vmem>>, vector<16x16xf32>,
    %c0_348 = arith.constant 0 : index
    %c128_349 = arith.constant 128 : index
    %347 = vector.load %arg13[%c0_348, %c128_349] : memref<16x272xf32, #tpu.memory_space<vmem>>, vector<16x16xf32>
    %348 = arith.minimumf %340, %347 : vector<16x16xf32>
    %c8_350 = arith.constant 8 : index
    %c0_351 = arith.constant 0 : index
    %349 = vector.load %arg12[%c8_350, %c0_351] : memref<32x16xf32, #tpu.memory_space<vmem>>, vector<16x16xf32>
    tpu.vector_store %arg12[%c8_350, %c0_351], %348 {strides = array<i32>} : memref<32x16xf32, #tpu.memory_space<vmem>>, vector<16x16xf32>,
    %c0_352 = arith.constant 0 : index
    %c128_353 = arith.constant 128 : index
    %350 = vector.load %arg13[%c0_352, %c128_353] : memref<16x272xf32, #tpu.memory_space<vmem>>, vector<16x16xf32>
    tpu.vector_store %arg13[%c0_352, %c128_353], %348 {strides = array<i32>} : memref<16x272xf32, #tpu.memory_space<vmem>>, vector<16x16xf32>,
    %c0_354 = arith.constant 0 : index
    %c127_355 = arith.constant 127 : index
    %351 = vector.load %arg13[%c0_354, %c127_355] : memref<16x272xf32, #tpu.memory_space<vmem>>, vector<16x16xf32>
    %c0_356 = arith.constant 0 : index
    %c129_357 = arith.constant 129 : index
    %352 = vector.load %arg13[%c0_356, %c129_357] : memref<16x272xf32, #tpu.memory_space<vmem>>, vector<16x16xf32>
    %353 = arith.maximumf %351, %352 : vector<16x16xf32>
    %c7_358 = arith.constant 7 : index
    %c0_359 = arith.constant 0 : index
    %354 = vector.load %arg12[%c7_358, %c0_359] : memref<32x16xf32, #tpu.memory_space<vmem>>, vector<16x16xf32>
    %c9_360 = arith.constant 9 : index
    %c0_361 = arith.constant 0 : index
    %355 = vector.load %arg12[%c9_360, %c0_361] : memref<32x16xf32, #tpu.memory_space<vmem>>, vector<16x16xf32>
    %c0_362 = arith.constant 0 : index
    %c128_363 = arith.constant 128 : index
    %356 = vector.load %arg13[%c0_362, %c128_363] : memref<16x272xf32, #tpu.memory_space<vmem>>, vector<16x16xf32>
    %357 = arith.maximumf %356, %354 : vector<16x16xf32>
    %358 = arith.maximumf %357, %355 : vector<16x16xf32>
    %c0_364 = arith.constant 0 : index
    %c128_365 = arith.constant 128 : index
    %359 = vector.load %arg13[%c0_364, %c128_365] : memref<16x272xf32, #tpu.memory_space<vmem>>, vector<16x16xf32>
    tpu.vector_store %arg13[%c0_364, %c128_365], %358 {strides = array<i32>} : memref<16x272xf32, #tpu.memory_space<vmem>>, vector<16x16xf32>,
    %c0_366 = arith.constant 0 : index
    %c128_367 = arith.constant 128 : index
    %360 = vector.load %arg13[%c0_366, %c128_367] : memref<16x272xf32, #tpu.memory_space<vmem>>, vector<16x16xf32>
    %361 = arith.maximumf %353, %360 : vector<16x16xf32>
    %cst_368 = arith.constant 5.000000e-01 : f32
    %362 = vector.broadcast %cst_368 : f32 to vector<16x16xf32>
    %363 = arith.cmpf ogt, %11, %362 : vector<16x16xf32>
    %364 = arith.extui %363 : vector<16x16xi1> to vector<16x16xi32>
    %365 = arith.sitofp %364 : vector<16x16xi32> to vector<16x16xf32>
    %366 = arith.mulf %365, %330 : vector<16x16xf32>
    %c8_369 = arith.constant 8 : index
    %c0_370 = arith.constant 0 : index
    %367 = vector.load %arg12[%c8_369, %c0_370] : memref<32x16xf32, #tpu.memory_space<vmem>>, vector<16x16xf32>
    tpu.vector_store %arg12[%c8_369, %c0_370], %366 {strides = array<i32>} : memref<32x16xf32, #tpu.memory_space<vmem>>, vector<16x16xf32>,
    %c0_371 = arith.constant 0 : index
    %c128_372 = arith.constant 128 : index
    %368 = vector.load %arg13[%c0_371, %c128_372] : memref<16x272xf32, #tpu.memory_space<vmem>>, vector<16x16xf32>
    tpu.vector_store %arg13[%c0_371, %c128_372], %366 {strides = array<i32>} : memref<16x272xf32, #tpu.memory_space<vmem>>, vector<16x16xf32>,
    %c0_373 = arith.constant 0 : index
    %c126_374 = arith.constant 126 : index
    %369 = vector.load %arg13[%c0_373, %c126_374] : memref<16x272xf32, #tpu.memory_space<vmem>>, vector<16x16xf32>
    %c0_375 = arith.constant 0 : index
    %c130_376 = arith.constant 130 : index
    %370 = vector.load %arg13[%c0_375, %c130_376] : memref<16x272xf32, #tpu.memory_space<vmem>>, vector<16x16xf32>
    %371 = arith.maximumf %369, %370 : vector<16x16xf32>
    %c7_377 = arith.constant 7 : index
    %c0_378 = arith.constant 0 : index
    %372 = vector.load %arg12[%c7_377, %c0_378] : memref<32x16xf32, #tpu.memory_space<vmem>>, vector<16x16xf32>
    %c9_379 = arith.constant 9 : index
    %c0_380 = arith.constant 0 : index
    %373 = vector.load %arg12[%c9_379, %c0_380] : memref<32x16xf32, #tpu.memory_space<vmem>>, vector<16x16xf32>
    %c0_381 = arith.constant 0 : index
    %c128_382 = arith.constant 128 : index
    %374 = vector.load %arg13[%c0_381, %c128_382] : memref<16x272xf32, #tpu.memory_space<vmem>>, vector<16x16xf32>
    %375 = arith.maximumf %374, %372 : vector<16x16xf32>
    %376 = arith.maximumf %375, %373 : vector<16x16xf32>
    %c0_383 = arith.constant 0 : index
    %c128_384 = arith.constant 128 : index
    %377 = vector.load %arg13[%c0_383, %c128_384] : memref<16x272xf32, #tpu.memory_space<vmem>>, vector<16x16xf32>
    tpu.vector_store %arg13[%c0_383, %c128_384], %376 {strides = array<i32>} : memref<16x272xf32, #tpu.memory_space<vmem>>, vector<16x16xf32>,
    %c0_385 = arith.constant 0 : index
    %c127_386 = arith.constant 127 : index
    %378 = vector.load %arg13[%c0_385, %c127_386] : memref<16x272xf32, #tpu.memory_space<vmem>>, vector<16x16xf32>
    %c0_387 = arith.constant 0 : index
    %c129_388 = arith.constant 129 : index
    %379 = vector.load %arg13[%c0_387, %c129_388] : memref<16x272xf32, #tpu.memory_space<vmem>>, vector<16x16xf32>
    %380 = arith.maximumf %378, %379 : vector<16x16xf32>
    %381 = arith.maximumf %371, %380 : vector<16x16xf32>
    %c6_389 = arith.constant 6 : index
    %c0_390 = arith.constant 0 : index
    %382 = vector.load %arg12[%c6_389, %c0_390] : memref<32x16xf32, #tpu.memory_space<vmem>>, vector<16x16xf32>
    %c10_391 = arith.constant 10 : index
    %c0_392 = arith.constant 0 : index
    %383 = vector.load %arg12[%c10_391, %c0_392] : memref<32x16xf32, #tpu.memory_space<vmem>>, vector<16x16xf32>
    %c0_393 = arith.constant 0 : index
    %c128_394 = arith.constant 128 : index
    %384 = vector.load %arg13[%c0_393, %c128_394] : memref<16x272xf32, #tpu.memory_space<vmem>>, vector<16x16xf32>
    %385 = arith.maximumf %384, %382 : vector<16x16xf32>
    %386 = arith.maximumf %385, %383 : vector<16x16xf32>
    %c0_395 = arith.constant 0 : index
    %c128_396 = arith.constant 128 : index
    %387 = vector.load %arg13[%c0_395, %c128_396] : memref<16x272xf32, #tpu.memory_space<vmem>>, vector<16x16xf32>
    tpu.vector_store %arg13[%c0_395, %c128_396], %386 {strides = array<i32>} : memref<16x272xf32, #tpu.memory_space<vmem>>, vector<16x16xf32>,
    %c0_397 = arith.constant 0 : index
    %c128_398 = arith.constant 128 : index
    %388 = vector.load %arg13[%c0_397, %c128_398] : memref<16x272xf32, #tpu.memory_space<vmem>>, vector<16x16xf32>
    %389 = arith.maximumf %381, %388 : vector<16x16xf32>
    %c8_399 = arith.constant 8 : index
    %c0_400 = arith.constant 0 : index
    %390 = vector.load %arg12[%c8_399, %c0_400] : memref<32x16xf32, #tpu.memory_space<vmem>>, vector<16x16xf32>
    tpu.vector_store %arg12[%c8_399, %c0_400], %361 {strides = array<i32>} : memref<32x16xf32, #tpu.memory_space<vmem>>, vector<16x16xf32>,
    %c0_401 = arith.constant 0 : index
    %c128_402 = arith.constant 128 : index
    %391 = vector.load %arg13[%c0_401, %c128_402] : memref<16x272xf32, #tpu.memory_space<vmem>>, vector<16x16xf32>
    tpu.vector_store %arg13[%c0_401, %c128_402], %361 {strides = array<i32>} : memref<16x272xf32, #tpu.memory_space<vmem>>, vector<16x16xf32>,
    %c0_403 = arith.constant 0 : index
    %c127_404 = arith.constant 127 : index
    %392 = vector.load %arg13[%c0_403, %c127_404] : memref<16x272xf32, #tpu.memory_space<vmem>>, vector<16x16xf32>
    %c0_405 = arith.constant 0 : index
    %c129_406 = arith.constant 129 : index
    %393 = vector.load %arg13[%c0_405, %c129_406] : memref<16x272xf32, #tpu.memory_space<vmem>>, vector<16x16xf32>
    %394 = arith.maximumf %392, %393 : vector<16x16xf32>
    %c7_407 = arith.constant 7 : index
    %c0_408 = arith.constant 0 : index
    %395 = vector.load %arg12[%c7_407, %c0_408] : memref<32x16xf32, #tpu.memory_space<vmem>>, vector<16x16xf32>
    %c9_409 = arith.constant 9 : index
    %c0_410 = arith.constant 0 : index
    %396 = vector.load %arg12[%c9_409, %c0_410] : memref<32x16xf32, #tpu.memory_space<vmem>>, vector<16x16xf32>
    %c0_411 = arith.constant 0 : index
    %c128_412 = arith.constant 128 : index
    %397 = vector.load %arg13[%c0_411, %c128_412] : memref<16x272xf32, #tpu.memory_space<vmem>>, vector<16x16xf32>
    %398 = arith.maximumf %397, %395 : vector<16x16xf32>
    %399 = arith.maximumf %398, %396 : vector<16x16xf32>
    %c0_413 = arith.constant 0 : index
    %c128_414 = arith.constant 128 : index
    %400 = vector.load %arg13[%c0_413, %c128_414] : memref<16x272xf32, #tpu.memory_space<vmem>>, vector<16x16xf32>
    tpu.vector_store %arg13[%c0_413, %c128_414], %399 {strides = array<i32>} : memref<16x272xf32, #tpu.memory_space<vmem>>, vector<16x16xf32>,
    %c0_415 = arith.constant 0 : index
    %c128_416 = arith.constant 128 : index
    %401 = vector.load %arg13[%c0_415, %c128_416] : memref<16x272xf32, #tpu.memory_space<vmem>>, vector<16x16xf32>
    %402 = arith.maximumf %394, %401 : vector<16x16xf32>
    %cst_417 = arith.constant 1.000000e+00 : f32
    %403 = vector.broadcast %cst_417 : f32 to vector<16x16xf32>
    %404 = arith.subf %403, %389 : vector<16x16xf32>
    %405 = arith.mulf %402, %404 : vector<16x16xf32>
    %406 = arith.mulf %405, %330 : vector<16x16xf32>
    %407 = arith.fptoui %17 : vector<16x16xf32> to vector<16x16xi8>
    %c0_418 = arith.constant 0 : index
    %c0_419 = arith.constant 0 : index
    %c0_420 = arith.constant 0 : index
    %408 = vector.load %arg3[%c0_418, %c0_419, %c0_420] : memref<1x16x16xi8, #tpu.memory_space<vmem>>, vector<1x16x16xi8>
    %409 = vector.shape_cast %408 : vector<1x16x16xi8> to vector<16x16xi8>
    %410 = vector.shape_cast %407 : vector<16x16xi8> to vector<1x16x16xi8>
    tpu.vector_store %arg3[%c0_418, %c0_419, %c0_420], %410 {strides = array<i32>} : memref<1x16x16xi8, #tpu.memory_space<vmem>>, vector<1x16x16xi8>,
    %411 = arith.fptoui %140 : vector<16x16xf32> to vector<16x16xi8>
    %c0_421 = arith.constant 0 : index
    %c0_422 = arith.constant 0 : index
    %c0_423 = arith.constant 0 : index
    %412 = vector.load %arg4[%c0_421, %c0_422, %c0_423] : memref<1x16x16xi8, #tpu.memory_space<vmem>>, vector<1x16x16xi8>
    %413 = vector.shape_cast %412 : vector<1x16x16xi8> to vector<16x16xi8>
    %414 = vector.shape_cast %411 : vector<16x16xi8> to vector<1x16x16xi8>
    tpu.vector_store %arg4[%c0_421, %c0_422, %c0_423], %414 {strides = array<i32>} : memref<1x16x16xi8, #tpu.memory_space<vmem>>, vector<1x16x16xi8>,
    %415 = arith.fptoui %170 : vector<16x16xf32> to vector<16x16xi8>
    %c0_424 = arith.constant 0 : index
    %c0_425 = arith.constant 0 : index
    %c0_426 = arith.constant 0 : index
    %416 = vector.load %arg5[%c0_424, %c0_425, %c0_426] : memref<1x16x16xi8, #tpu.memory_space<vmem>>, vector<1x16x16xi8>
    %417 = vector.shape_cast %416 : vector<1x16x16xi8> to vector<16x16xi8>
    %418 = vector.shape_cast %415 : vector<16x16xi8> to vector<1x16x16xi8>
    tpu.vector_store %arg5[%c0_424, %c0_425, %c0_426], %418 {strides = array<i32>} : memref<1x16x16xi8, #tpu.memory_space<vmem>>, vector<1x16x16xi8>,
    %419 = arith.fptoui %281 : vector<16x16xf32> to vector<16x16xi8>
    %c0_427 = arith.constant 0 : index
    %c0_428 = arith.constant 0 : index
    %c0_429 = arith.constant 0 : index
    %420 = vector.load %arg6[%c0_427, %c0_428, %c0_429] : memref<1x16x16xi8, #tpu.memory_space<vmem>>, vector<1x16x16xi8>
    %421 = vector.shape_cast %420 : vector<1x16x16xi8> to vector<16x16xi8>
    %422 = vector.shape_cast %419 : vector<16x16xi8> to vector<1x16x16xi8>
    tpu.vector_store %arg6[%c0_427, %c0_428, %c0_429], %422 {strides = array<i32>} : memref<1x16x16xi8, #tpu.memory_space<vmem>>, vector<1x16x16xi8>,
    %423 = arith.fptoui %335 : vector<16x16xf32> to vector<16x16xi8>
    %c0_430 = arith.constant 0 : index
    %c0_431 = arith.constant 0 : index
    %c0_432 = arith.constant 0 : index
    %424 = vector.load %arg7[%c0_430, %c0_431, %c0_432] : memref<1x16x16xi8, #tpu.memory_space<vmem>>, vector<1x16x16xi8>
    %425 = vector.shape_cast %424 : vector<1x16x16xi8> to vector<16x16xi8>
    %426 = vector.shape_cast %423 : vector<16x16xi8> to vector<1x16x16xi8>
    tpu.vector_store %arg7[%c0_430, %c0_431, %c0_432], %426 {strides = array<i32>} : memref<1x16x16xi8, #tpu.memory_space<vmem>>, vector<1x16x16xi8>,
    %427 = arith.fptoui %361 : vector<16x16xf32> to vector<16x16xi8>
    %c0_433 = arith.constant 0 : index
    %c0_434 = arith.constant 0 : index
    %c0_435 = arith.constant 0 : index
    %428 = vector.load %arg8[%c0_433, %c0_434, %c0_435] : memref<1x16x16xi8, #tpu.memory_space<vmem>>, vector<1x16x16xi8>
    %429 = vector.shape_cast %428 : vector<1x16x16xi8> to vector<16x16xi8>
    %430 = vector.shape_cast %427 : vector<16x16xi8> to vector<1x16x16xi8>
    tpu.vector_store %arg8[%c0_433, %c0_434, %c0_435], %430 {strides = array<i32>} : memref<1x16x16xi8, #tpu.memory_space<vmem>>, vector<1x16x16xi8>,
    %431 = arith.fptoui %330 : vector<16x16xf32> to vector<16x16xi8>
    %c0_436 = arith.constant 0 : index
    %c0_437 = arith.constant 0 : index
    %c0_438 = arith.constant 0 : index
    %432 = vector.load %arg9[%c0_436, %c0_437, %c0_438] : memref<1x16x16xi8, #tpu.memory_space<vmem>>, vector<1x16x16xi8>
    %433 = vector.shape_cast %432 : vector<1x16x16xi8> to vector<16x16xi8>
    %434 = vector.shape_cast %431 : vector<16x16xi8> to vector<1x16x16xi8>
    tpu.vector_store %arg9[%c0_436, %c0_437, %c0_438], %434 {strides = array<i32>} : memref<1x16x16xi8, #tpu.memory_space<vmem>>, vector<1x16x16xi8>,
    %c0_439 = arith.constant 0 : index
    %c0_440 = arith.constant 0 : index
    %c0_441 = arith.constant 0 : index
    %435 = vector.load %arg10[%c0_439, %c0_440, %c0_441] : memref<1x16x16xf32, #tpu.memory_space<vmem>>, vector<1x16x16xf32>
    %436 = vector.shape_cast %435 : vector<1x16x16xf32> to vector<16x16xf32>
    %437 = vector.shape_cast %406 : vector<16x16xf32> to vector<1x16x16xf32>
    tpu.vector_store %arg10[%c0_439, %c0_440, %c0_441], %437 {strides = array<i32>} : memref<1x16x16xf32, #tpu.memory_space<vmem>>, vector<1x16x16xf32>,
    %c0_442 = arith.constant 0 : index
    %c0_443 = arith.constant 0 : index
    %c0_444 = arith.constant 0 : index
    %438 = vector.load %arg11[%c0_442, %c0_443, %c0_444] : memref<1x16x16xf32, #tpu.memory_space<vmem>>, vector<1x16x16xf32>
    %439 = vector.shape_cast %438 : vector<1x16x16xf32> to vector<16x16xf32>
    %440 = vector.shape_cast %389 : vector<16x16xf32> to vector<1x16x16xf32>
    tpu.vector_store %arg11[%c0_442, %c0_443, %c0_444], %440 {strides = array<i32>} : memref<1x16x16xf32, #tpu.memory_space<vmem>>, vector<1x16x16xf32>,
    return
  }
  func.func @transform_0(%arg0: i32) -> (i32, i32, i32) {
    %c0_i32 = arith.constant 0 : i32
    %c0_i32_0 = arith.constant 0 : i32
    %c0_i32_1 = arith.constant 0 : i32
    return %arg0, %c0_i32, %c0_i32_0 : i32, i32, i32
  }
  func.func @transform_1(%arg0: i32) -> (i32, i32, i32) {
    %c0_i32 = arith.constant 0 : i32
    %c0_i32_0 = arith.constant 0 : i32
    %c0_i32_1 = arith.constant 0 : i32
    return %arg0, %c0_i32, %c0_i32_0 : i32, i32, i32
  }
  func.func @transform_2(%arg0: i32) -> (i32, i32, i32) {
    %c0_i32 = arith.constant 0 : i32
    %c0_i32_0 = arith.constant 0 : i32
    %c0_i32_1 = arith.constant 0 : i32
    return %arg0, %c0_i32, %c0_i32_0 : i32, i32, i32
  }
  func.func @transform_3(%arg0: i32) -> (i32, i32, i32) {
    %c0_i32 = arith.constant 0 : i32
    %c0_i32_0 = arith.constant 0 : i32
    %c0_i32_1 = arith.constant 0 : i32
    return %arg0, %c0_i32, %c0_i32_0 : i32, i32, i32
  }
  func.func @transform_4(%arg0: i32) -> (i32, i32, i32) {
    %c0_i32 = arith.constant 0 : i32
    %c0_i32_0 = arith.constant 0 : i32
    %c0_i32_1 = arith.constant 0 : i32
    return %arg0, %c0_i32, %c0_i32_0 : i32, i32, i32
  }
  func.func @transform_5(%arg0: i32) -> (i32, i32, i32) {
    %c0_i32 = arith.constant 0 : i32
    %c0_i32_0 = arith.constant 0 : i32
    %c0_i32_1 = arith.constant 0 : i32
    return %arg0, %c0_i32, %c0_i32_0 : i32, i32, i32
  }
  func.func @transform_6(%arg0: i32) -> (i32, i32, i32) {
    %c0_i32 = arith.constant 0 : i32
    %c0_i32_0 = arith.constant 0 : i32
    %c0_i32_1 = arith.constant 0 : i32
    return %arg0, %c0_i32, %c0_i32_0 : i32, i32, i32
  }
  func.func @transform_7(%arg0: i32) -> (i32, i32, i32) {
    %c0_i32 = arith.constant 0 : i32
    %c0_i32_0 = arith.constant 0 : i32
    %c0_i32_1 = arith.constant 0 : i32
    return %arg0, %c0_i32, %c0_i32_0 : i32, i32, i32
  }
  func.func @transform_8(%arg0: i32) -> (i32, i32, i32) {
    %c0_i32 = arith.constant 0 : i32
    %c0_i32_0 = arith.constant 0 : i32
    %c0_i32_1 = arith.constant 0 : i32
    return %arg0, %c0_i32, %c0_i32_0 : i32, i32, i32
  }
  func.func @transform_9(%arg0: i32) -> (i32, i32, i32) {
    %c0_i32 = arith.constant 0 : i32
    %c0_i32_0 = arith.constant 0 : i32
    %c0_i32_1 = arith.constant 0 : i32
    return %arg0, %c0_i32, %c0_i32_0 : i32, i32, i32
  }
  func.func @transform_10(%arg0: i32) -> (i32, i32, i32) {
    %c0_i32 = arith.constant 0 : i32
    %c0_i32_0 = arith.constant 0 : i32
    %c0_i32_1 = arith.constant 0 : i32
    return %arg0, %c0_i32, %c0_i32_0 : i32, i32, i32
  }
}

</mosaic_0001>

<llo_original>
// kernel: segmentation_mask_forward.1
$region0: #{segmentation_mask_forward.1}
  #allocation0 [shape = 'u32[]', space=smem, size = 0x4, offset = 0x4, fixed_abs, tag = 'smem constant byte address 0x4 - core index']
  #allocation1 [shape = 'u32[144,128]{1,0:T(1,128)}', space=vmem, size = 0x12000, scoped, tag = 'internal scratch']
  #allocation2 [shape = 'f32[32,16]{1,0:T(8,128)}', space=vmem, size = 0x4000, scoped, tag = 'scratch operand']
  #allocation3 [shape = 'f32[16,272]{1,0:T(8,128)}', space=vmem, size = 0x6000, scoped, tag = 'scratch operand']
  %s0 = inlined_call_operand.hbm [shape: f32[2,16,16], index: 0, kind: input, shape index: {}]
  %s1 = inlined_call_operand.hbm [shape: f32[2,16,16], index: 1, kind: input, shape index: {}]
  %s2 = inlined_call_operand.vmem [shape: u8[2,16,16], index: 2, kind: output, shape index: {0}]
  %s3 = inlined_call_operand.vmem [shape: u8[2,16,16], index: 3, kind: output, shape index: {1}]
  %s4 = inlined_call_operand.vmem [shape: u8[2,16,16], index: 4, kind: output, shape index: {2}]
  %s5 = inlined_call_operand.vmem [shape: u8[2,16,16], index: 5, kind: output, shape index: {3}]
  %s6 = inlined_call_operand.vmem [shape: u8[2,16,16], index: 6, kind: output, shape index: {4}]
  %s7 = inlined_call_operand.vmem [shape: u8[2,16,16], index: 7, kind: output, shape index: {5}]
  %s8 = inlined_call_operand.vmem [shape: u8[2,16,16], index: 8, kind: output, shape index: {6}]
  %s9 = inlined_call_operand.vmem [shape: f32[2,16,16], index: 9, kind: output, shape index: {7}]
  %s10 = inlined_call_operand.vmem [shape: f32[2,16,16], index: 10, kind: output, shape index: {8}]
  %11 = xla_tuple %s2, %s3, %s4, %s5, %s6, %s7, %s8, %s9, %s10
  %s12 = sld [smem:[#allocation0]]
  $region113: #{segmentation_mask_forward.1} parent=0
    _
  %s14 = ssub.s32 1, %s12
  %s15 = scalar_select 0, %s14, %s12
  $region1: #{segmentation_mask_forward.1} parent=0
    #allocation4 [shape = 'u8[16384]{0}', space=vmem, size = 0x4000, scoped, tag = 'input window, operand 0']
    #allocation5 [shape = 's32[2]{0}', space=sflag, size = 0x8, scoped, tag = 'scoped memory for segmentation_mask_forward.1']
    #allocation6 [shape = 'u8[16384]{0}', space=vmem, size = 0x4000, scoped, tag = 'input window, operand 1']
    #allocation7 [shape = 's32[2]{0}', space=sflag, size = 0x8, scoped, tag = 'scoped memory for segmentation_mask_forward.1']
    %16 = vsyncpa [#allocation5], 0
    %s17 = scalar_lea.sflag [#allocation5], 1
    %18 = vsyncpa %s17, 0
    %19 = vsyncpa [#allocation7], 0
    %s20 = scalar_lea.sflag [#allocation7], 1
    %21 = vsyncpa %s20, 0
    loop: start=0, step=1, limit=4
    $region2: #{segmentation_mask_forward.1} parent=1 // loop_pre_header
      _
    $region3: #{segmentation_mask_forward.1} parent=1 // loop_header
      %s23 = sphi 0, %s27
      %p24 = scmp.ge.s32.totalorder %s23, 4
      %s33 = sphi 0, %s35
      %s36 = sphi 0, %s33
      %s37 = sphi 0, %s36
      %s53 = sphi 0, %s37
      %s59 = sphi 0, %s61
      %s62 = sphi 0, %s59
      %s63 = sphi 0, %s62
      %s79 = sphi 0, %s63
      %s85 = sphi 0, %s87
      %s88 = sphi 0, %s85
      %s89 = sphi 0, %s88
      %s105 = sphi 0, %s89
      %s111 = sphi 0, %s113
      %s114 = sphi 0, %s111
      %s115 = sphi 0, %s114
      %s131 = sphi 0, %s115
      %s137 = sphi 0, %s139
      %s140 = sphi 0, %s137
      %s141 = sphi 0, %s140
      %s157 = sphi 0, %s141
      %s163 = sphi 0, %s165
      %s166 = sphi 0, %s163
      %s167 = sphi 0, %s166
      %s183 = sphi 0, %s167
      %s189 = sphi 0, %s191
      %s192 = sphi 0, %s189
      %s193 = sphi 0, %s192
      %s209 = sphi 0, %s193
      %s215 = sphi 0, %s217
      %s218 = sphi 0, %s215
      %s219 = sphi 0, %s218
      %s235 = sphi 0, %s219
      %s241 = sphi 0, %s243
      %s244 = sphi 0, %s241
      %s245 = sphi 0, %s244
      %s261 = sphi 0, %s245
      %s267 = sphi 0, %s269
      %s270 = sphi 0, %s267
      %s271 = sphi 0, %s270
      %s287 = sphi 0, %s271
      %s293 = sphi 0, %s295
      %s296 = sphi 0, %s293
      %s297 = sphi 0, %s296
      %s313 = sphi 0, %s297
    $region4: #{segmentation_mask_forward.1} parent=1 // loop_header_branch
      %26 = sbr.rel (%p24) target = $region8
    $region5: #{segmentation_mask_forward.1} parent=1 // loop_body
      %s28 = ssub.s32 %s23, 1
      %s29 = ssub.s32 %s23, 2
      %s30 = sadd.s32 %s23, 1
      %s31 = ssub.s32 %s23, %s30
      %p32 = scmp.eq.s32.totalorder %s31, 0
      %s34 = sadd.s32 %s33, 1
      %s35 = scalar_select %p32, %s33, %s34
      %p38 = pneg %p32
      %p39 = scmp.eq.s32.totalorder %s23, 1
      %p40 = por %p38, %p39
      %p41 = scmp.ne.s32.totalorder %s33, %s36
      %p42 = scmp.eq.s32.totalorder %s23, 0
      %p43 = por %p41, %p42
      %p44 = scmp.ne.s32.totalorder %s33, %s36
      %p45 = scmp.eq.s32.totalorder %s28, 1
      %p46 = por %p44, %p45
      %p47 = scmp.ne.s32.totalorder %s36, %s37
      %p48 = scmp.eq.s32.totalorder %s28, 0
      %p49 = por %p47, %p48
      %p50 = scmp.ne.s32.totalorder %s36, %s37
      %p51 = scmp.eq.s32.totalorder %s29, 1
      %p52 = por %p50, %p51
      %p54 = scmp.ne.s32.totalorder %s37, %s53
      %p55 = scmp.eq.s32.totalorder %s29, 0
      %p56 = por %p54, %p55
      %s57 = ssub.s32 %s23, %s30
      %p58 = scmp.eq.s32.totalorder %s57, 0
      %s60 = sadd.s32 %s59, 1
      %s61 = scalar_select %p58, %s59, %s60
      %p64 = pneg %p58
      %p65 = scmp.eq.s32.totalorder %s23, 1
      %p66 = por %p64, %p65
      %p67 = scmp.ne.s32.totalorder %s59, %s62
      %p68 = scmp.eq.s32.totalorder %s23, 0
      %p69 = por %p67, %p68
      %p70 = scmp.ne.s32.totalorder %s59, %s62
      %p71 = scmp.eq.s32.totalorder %s28, 1
      %p72 = por %p70, %p71
      %p73 = scmp.ne.s32.totalorder %s62, %s63
      %p74 = scmp.eq.s32.totalorder %s28, 0
      %p75 = por %p73, %p74
      %p76 = scmp.ne.s32.totalorder %s62, %s63
      %p77 = scmp.eq.s32.totalorder %s29, 1
      %p78 = por %p76, %p77
      %p80 = scmp.ne.s32.totalorder %s63, %s79
      %p81 = scmp.eq.s32.totalorder %s29, 0
      %p82 = por %p80, %p81
      %s83 = ssub.s32 %s23, %s30
      %p84 = scmp.eq.s32.totalorder %s83, 0
      %s86 = sadd.s32 %s85, 1
      %s87 = scalar_select %p84, %s85, %s86
      %p90 = pneg %p84
      %p91 = scmp.eq.s32.totalorder %s23, 1
      %p92 = por %p90, %p91
      %p93 = scmp.ne.s32.totalorder %s85, %s88
      %p94 = scmp.eq.s32.totalorder %s23, 0
      %p95 = por %p93, %p94
      %p96 = scmp.ne.s32.totalorder %s85, %s88
      %p97 = scmp.eq.s32.totalorder %s28, 1
      %p98 = por %p96, %p97
      %p99 = scmp.ne.s32.totalorder %s88, %s89
      %p100 = scmp.eq.s32.totalorder %s28, 0
      %p101 = por %p99, %p100
      %p102 = scmp.ne.s32.totalorder %s88, %s89
      %p103 = scmp.eq.s32.totalorder %s29, 1
      %p104 = por %p102, %p103
      %p106 = scmp.ne.s32.totalorder %s89, %s105
      %p107 = scmp.eq.s32.totalorder %s29, 0
      %p108 = por %p106, %p107
      %s109 = ssub.s32 %s23, %s30
      %p110 = scmp.eq.s32.totalorder %s109, 0
      %s112 = sadd.s32 %s111, 1
      %s113 = scalar_select %p110, %s111, %s112
      %p116 = pneg %p110
      %p117 = scmp.eq.s32.totalorder %s23, 1
      %p118 = por %p116, %p117
      %p119 = scmp.ne.s32.totalorder %s111, %s114
      %p120 = scmp.eq.s32.totalorder %s23, 0
      %p121 = por %p119, %p120
      %p122 = scmp.ne.s32.totalorder %s111, %s114
      %p123 = scmp.eq.s32.totalorder %s28, 1
      %p124 = por %p122, %p123
      %p125 = scmp.ne.s32.totalorder %s114, %s115
      %p126 = scmp.eq.s32.totalorder %s28, 0
      %p127 = por %p125, %p126
      %p128 = scmp.ne.s32.totalorder %s114, %s115
      %p129 = scmp.eq.s32.totalorder %s29, 1
      %p130 = por %p128, %p129
      %p132 = scmp.ne.s32.totalorder %s115, %s131
      %p133 = scmp.eq.s32.totalorder %s29, 0
      %p134 = por %p132, %p133
      %s135 = ssub.s32 %s23, %s30
      %p136 = scmp.eq.s32.totalorder %s135, 0
      %s138 = sadd.s32 %s137, 1
      %s139 = scalar_select %p136, %s137, %s138
      %p142 = pneg %p136
      %p143 = scmp.eq.s32.totalorder %s23, 1
      %p144 = por %p142, %p143
      %p145 = scmp.ne.s32.totalorder %s137, %s140
      %p146 = scmp.eq.s32.totalorder %s23, 0
      %p147 = por %p145, %p146
      %p148 = scmp.ne.s32.totalorder %s137, %s140
      %p149 = scmp.eq.s32.totalorder %s28, 1
      %p150 = por %p148, %p149
      %p151 = scmp.ne.s32.totalorder %s140, %s141
      %p152 = scmp.eq.s32.totalorder %s28, 0
      %p153 = por %p151, %p152
      %p154 = scmp.ne.s32.totalorder %s140, %s141
      %p155 = scmp.eq.s32.totalorder %s29, 1
      %p156 = por %p154, %p155
      %p158 = scmp.ne.s32.totalorder %s141, %s157
      %p159 = scmp.eq.s32.totalorder %s29, 0
      %p160 = por %p158, %p159
      %s161 = ssub.s32 %s23, %s30
      %p162 = scmp.eq.s32.totalorder %s161, 0
      %s164 = sadd.s32 %s163, 1
      %s165 = scalar_select %p162, %s163, %s164
      %p168 = pneg %p162
      %p169 = scmp.eq.s32.totalorder %s23, 1
      %p170 = por %p168, %p169
      %p171 = scmp.ne.s32.totalorder %s163, %s166
      %p172 = scmp.eq.s32.totalorder %s23, 0
      %p173 = por %p171, %p172
      %p174 = scmp.ne.s32.totalorder %s163, %s166
      %p175 = scmp.eq.s32.totalorder %s28, 1
      %p176 = por %p174, %p175
      %p177 = scmp.ne.s32.totalorder %s166, %s167
      %p178 = scmp.eq.s32.totalorder %s28, 0
      %p179 = por %p177, %p178
      %p180 = scmp.ne.s32.totalorder %s166, %s167
      %p181 = scmp.eq.s32.totalorder %s29, 1
      %p182 = por %p180, %p181
      %p184 = scmp.ne.s32.totalorder %s167, %s183
      %p185 = scmp.eq.s32.totalorder %s29, 0
      %p186 = por %p184, %p185
      %s187 = ssub.s32 %s23, %s30
      %p188 = scmp.eq.s32.totalorder %s187, 0
      %s190 = sadd.s32 %s189, 1
      %s191 = scalar_select %p188, %s189, %s190
      %p194 = pneg %p188
      %p195 = scmp.eq.s32.totalorder %s23, 1
      %p196 = por %p194, %p195
      %p197 = scmp.ne.s32.totalorder %s189, %s192
      %p198 = scmp.eq.s32.totalorder %s23, 0
      %p199 = por %p197, %p198
      %p200 = scmp.ne.s32.totalorder %s189, %s192
      %p201 = scmp.eq.s32.totalorder %s28, 1
      %p202 = por %p200, %p201
      %p203 = scmp.ne.s32.totalorder %s192, %s193
      %p204 = scmp.eq.s32.totalorder %s28, 0
      %p205 = por %p203, %p204
      %p206 = scmp.ne.s32.totalorder %s192, %s193
      %p207 = scmp.eq.s32.totalorder %s29, 1
      %p208 = por %p206, %p207
      %p210 = scmp.ne.s32.totalorder %s193, %s209
      %p211 = scmp.eq.s32.totalorder %s29, 0
      %p212 = por %p210, %p211
      %s213 = ssub.s32 %s23, %s30
      %p214 = scmp.eq.s32.totalorder %s213, 0
      %s216 = sadd.s32 %s215, 1
      %s217 = scalar_select %p214, %s215, %s216
      %p220 = pneg %p214
      %p221 = scmp.eq.s32.totalorder %s23, 1
      %p222 = por %p220, %p221
      %p223 = scmp.ne.s32.totalorder %s215, %s218
      %p224 = scmp.eq.s32.totalorder %s23, 0
      %p225 = por %p223, %p224
      %p226 = scmp.ne.s32.totalorder %s215, %s218
      %p227 = scmp.eq.s32.totalorder %s28, 1
      %p228 = por %p226, %p227
      %p229 = scmp.ne.s32.totalorder %s218, %s219
      %p230 = scmp.eq.s32.totalorder %s28, 0
      %p231 = por %p229, %p230
      %p232 = scmp.ne.s32.totalorder %s218, %s219
      %p233 = scmp.eq.s32.totalorder %s29, 1
      %p234 = por %p232, %p233
      %p236 = scmp.ne.s32.totalorder %s219, %s235
      %p237 = scmp.eq.s32.totalorder %s29, 0
      %p238 = por %p236, %p237
      %s239 = ssub.s32 %s23, %s30
      %p240 = scmp.eq.s32.totalorder %s239, 0
      %s242 = sadd.s32 %s241, 1
      %s243 = scalar_select %p240, %s241, %s242
      %p246 = pneg %p240
      %p247 = scmp.eq.s32.totalorder %s23, 1
      %p248 = por %p246, %p247
      %p249 = scmp.ne.s32.totalorder %s241, %s244
      %p250 = scmp.eq.s32.totalorder %s23, 0
      %p251 = por %p249, %p250
      %p252 = scmp.ne.s32.totalorder %s241, %s244
      %p253 = scmp.eq.s32.totalorder %s28, 1
      %p254 = por %p252, %p253
      %p255 = scmp.ne.s32.totalorder %s244, %s245
      %p256 = scmp.eq.s32.totalorder %s28, 0
      %p257 = por %p255, %p256
      %p258 = scmp.ne.s32.totalorder %s244, %s245
      %p259 = scmp.eq.s32.totalorder %s29, 1
      %p260 = por %p258, %p259
      %p262 = scmp.ne.s32.totalorder %s245, %s261
      %p263 = scmp.eq.s32.totalorder %s29, 0
      %p264 = por %p262, %p263
      %s265 = ssub.s32 %s23, %s30
      %p266 = scmp.eq.s32.totalorder %s265, 0
      %s268 = sadd.s32 %s267, 1
      %s269 = scalar_select %p266, %s267, %s268
      %p272 = pneg %p266
      %p273 = scmp.eq.s32.totalorder %s23, 1
      %p274 = por %p272, %p273
      %p275 = scmp.ne.s32.totalorder %s267, %s270
      %p276 = scmp.eq.s32.totalorder %s23, 0
      %p277 = por %p275, %p276
      %p278 = scmp.ne.s32.totalorder %s267, %s270
      %p279 = scmp.eq.s32.totalorder %s28, 1
      %p280 = por %p278, %p279
      %p281 = scmp.ne.s32.totalorder %s270, %s271
      %p282 = scmp.eq.s32.totalorder %s28, 0
      %p283 = por %p281, %p282
      %p284 = scmp.ne.s32.totalorder %s270, %s271
      %p285 = scmp.eq.s32.totalorder %s29, 1
      %p286 = por %p284, %p285
      %p288 = scmp.ne.s32.totalorder %s271, %s287
      %p289 = scmp.eq.s32.totalorder %s29, 0
      %p290 = por %p288, %p289
      %s291 = ssub.s32 %s23, %s30
      %p292 = scmp.eq.s32.totalorder %s291, 0
      %s294 = sadd.s32 %s293, 1
      %s295 = scalar_select %p292, %s293, %s294
      %p298 = pneg %p292
      %p299 = scmp.eq.s32.totalorder %s23, 1
      %p300 = por %p298, %p299
      %p301 = scmp.ne.s32.totalorder %s293, %s296
      %p302 = scmp.eq.s32.totalorder %s23, 0
      %p303 = por %p301, %p302
      %p304 = scmp.ne.s32.totalorder %s293, %s296
      %p305 = scmp.eq.s32.totalorder %s28, 1
      %p306 = por %p304, %p305
      %p307 = scmp.ne.s32.totalorder %s296, %s297
      %p308 = scmp.eq.s32.totalorder %s28, 0
      %p309 = por %p307, %p308
      %p310 = scmp.ne.s32.totalorder %s296, %s297
      %p311 = scmp.eq.s32.totalorder %s29, 1
      %p312 = por %p310, %p311
      %p314 = scmp.ne.s32.totalorder %s297, %s313
      %p315 = scmp.eq.s32.totalorder %s29, 0
      %p316 = por %p314, %p315
      %p317 = scmp.le.s32.totalorder 1, %s23
      %p318 = scmp.lt.s32.totalorder %s23, 3
      %p319 = pnand %p317, %p318
      %p320 = pneg %p319
      // Predicated region
      $region9: #{segmentation_mask_forward.1} parent=5 // pred_check
        _
      $region10: #{segmentation_mask_forward.1} parent=5 // pred_check_branch
        %322 = sbr.rel (%p319) target = $region12
      $region11: #{segmentation_mask_forward.1} parent=5 // pred_region
        %s323 = ssub.s32 %s23, 1
      $region12: #{segmentation_mask_forward.1} parent=5 // pred_fallthru
        _
      %p324 = scmp.lt.s32.totalorder %s23, 2
      // Predicated region
      $region13: #{segmentation_mask_forward.1} parent=5 // pred_check
        %p325 = pneg %p324
      $region14: #{segmentation_mask_forward.1} parent=5 // pred_check_branch
        %327 = sbr.rel (%p325) target = $region16
      $region15: #{segmentation_mask_forward.1} parent=5 // pred_region
        // Predicated region
        $region17: #{segmentation_mask_forward.1} parent=15 // pred_check
          %p328 = pneg %p43
        $region18: #{segmentation_mask_forward.1} parent=15 // pred_check_branch
          %330 = sbr.rel (%p328) target = $region20
        $region19: #{segmentation_mask_forward.1} parent=15 // pred_region
          %s331 = sand.u32 %s33, 1
          %s332 = scalar_lea.sflag [#allocation5], %s331
          %s333 = sand.u32 %s33, 1
          %s334 = smul.addr %s333, 16
          %s335 = scalar_lea.vmem [#allocation4], %s334
          %s337 = ssub.s32 256, 256
          %338 = vsyncadd %s332, %s337
          %s339 = smul.addr %s23, 2
          %s340 = smul.addr %s339, 128
          %s341 = scalar_lea.hbm %s0, %s340
          %s342 = sshll.u32 %s335, 4
          %s343 = int_to_ptr.vmem [resolvable:$true] %s342
          %348 = dma.hbm_to_vmem [thread:$0]  %s341, 256, %s343, %s332, 128, 128, 8
        $region20: #{segmentation_mask_forward.1} parent=15 // pred_fallthru
          _
        // Predicated region
        $region21: #{segmentation_mask_forward.1} parent=15 // pred_check
          %p349 = pneg %p69
        $region22: #{segmentation_mask_forward.1} parent=15 // pred_check_branch
          %351 = sbr.rel (%p349) target = $region24
        $region23: #{segmentation_mask_forward.1} parent=15 // pred_region
          %s352 = sand.u32 %s59, 1
          %s353 = scalar_lea.sflag [#allocation7], %s352
          %s354 = sand.u32 %s59, 1
          %s355 = smul.addr %s354, 16
          %s356 = scalar_lea.vmem [#allocation6], %s355
          %s358 = ssub.s32 256, 256
          %359 = vsyncadd %s353, %s358
          %s360 = smul.addr %s23, 2
          %s361 = smul.addr %s360, 128
          %s362 = scalar_lea.hbm %s1, %s361
          %s363 = sshll.u32 %s356, 4
          %s364 = int_to_ptr.vmem [resolvable:$true] %s363
          %369 = dma.hbm_to_vmem [thread:$0]  %s362, 256, %s364, %s353, 128, 128, 8
        $region24: #{segmentation_mask_forward.1} parent=15 // pred_fallthru
          _
      $region16: #{segmentation_mask_forward.1} parent=5 // pred_fallthru
        _
      %p370 = scmp.le.s32.totalorder 1, %s23
      %p371 = scmp.lt.s32.totalorder %s23, 3
      %p372 = pnand %p370, %p371
      %p373 = pneg %p372
      // Predicated region
      $region25: #{segmentation_mask_forward.1} parent=5 // pred_check
        _
      $region26: #{segmentation_mask_forward.1} parent=5 // pred_check_branch
        %375 = sbr.rel (%p372) target = $region28
      $region27: #{segmentation_mask_forward.1} parent=5 // pred_region
        %s376 = ssub.s32 %s23, 1
        %s377 = sand.u32 %s36, 1
        %s378 = scalar_lea.sflag [#allocation5], %s377
        %s379 = sand.u32 %s36, 1
        %s380 = smul.addr %s379, 16
        %s381 = scalar_lea.vmem [#allocation4], %s380
        // Predicated region
        $region29: #{segmentation_mask_forward.1} parent=27 // pred_check
          %p382 = pneg %p49
        $region30: #{segmentation_mask_forward.1} parent=27 // pred_check_branch
          %384 = sbr.rel (%p382) target = $region32
        $region31: #{segmentation_mask_forward.1} parent=27 // pred_region
          %385 = dma.done %s378, 256
        $region32: #{segmentation_mask_forward.1} parent=27 // pred_fallthru
          _
        %s386 = sand.u32 %s62, 1
        %s387 = scalar_lea.sflag [#allocation7], %s386
        %s388 = sand.u32 %s62, 1
        %s389 = smul.addr %s388, 16
        %s390 = scalar_lea.vmem [#allocation6], %s389
        // Predicated region
        $region33: #{segmentation_mask_forward.1} parent=27 // pred_check
          %p391 = pneg %p75
        $region34: #{segmentation_mask_forward.1} parent=27 // pred_check_branch
          %393 = sbr.rel (%p391) target = $region36
        $region35: #{segmentation_mask_forward.1} parent=27 // pred_region
          %394 = dma.done %s387, 256
        $region36: #{segmentation_mask_forward.1} parent=27 // pred_fallthru
          _
        %s395 = sand.u32 %s36, 1
        %s396 = scalar_lea.sflag [#allocation5], %s395
        %s397 = sand.u32 %s36, 1
        %s398 = smul.addr %s397, 16
        %s399 = scalar_lea.vmem [#allocation4], %s398
        %p400 = pneg %p49
        %p401 = pneg %p46
        %s402 = sand.u32 %s62, 1
        %s403 = scalar_lea.sflag [#allocation7], %s402
        %s404 = sand.u32 %s62, 1
        %s405 = smul.addr %s404, 16
        %s406 = scalar_lea.vmem [#allocation6], %s405
        %p407 = pneg %p75
        %p408 = pneg %p72
        %p409 = pneg %p101
        %p410 = pneg %p98
        %p411 = scmp.lt.s32.totalorder %s28, 1
        %s412 = scalar_select %p411, %s28, 1
        %s413 = smul.addr %s412, 2
        %s414 = smul.addr %s413, 2
        %s415 = scalar_lea.vmem %s2, %s414
        %p416 = pneg %p127
        %p417 = pneg %p124
        %p418 = scmp.lt.s32.totalorder %s28, 1
        %s419 = scalar_select %p418, %s28, 1
        %s420 = smul.addr %s419, 2
        %s421 = smul.addr %s420, 2
        %s422 = scalar_lea.vmem %s3, %s421
        %p423 = pneg %p153
        %p424 = pneg %p150
        %p425 = scmp.lt.s32.totalorder %s28, 1
        %s426 = scalar_select %p425, %s28, 1
        %s427 = smul.addr %s426, 2
        %s428 = smul.addr %s427, 2
        %s429 = scalar_lea.vmem %s4, %s428
        %p430 = pneg %p179
        %p431 = pneg %p176
        %p432 = scmp.lt.s32.totalorder %s28, 1
        %s433 = scalar_select %p432, %s28, 1
        %s434 = smul.addr %s433, 2
        %s435 = smul.addr %s434, 2
        %s436 = scalar_lea.vmem %s5, %s435
        %p437 = pneg %p205
        %p438 = pneg %p202
        %p439 = scmp.lt.s32.totalorder %s28, 1
        %s440 = scalar_select %p439, %s28, 1
        %s441 = smul.addr %s440, 2
        %s442 = smul.addr %s441, 2
        %s443 = scalar_lea.vmem %s6, %s442
        %p444 = pneg %p231
        %p445 = pneg %p228
        %p446 = scmp.lt.s32.totalorder %s28, 1
        %s447 = scalar_select %p446, %s28, 1
        %s448 = smul.addr %s447, 2
        %s449 = smul.addr %s448, 2
        %s450 = scalar_lea.vmem %s7, %s449
        %p451 = pneg %p257
        %p452 = pneg %p254
        %p453 = scmp.lt.s32.totalorder %s28, 1
        %s454 = scalar_select %p453, %s28, 1
        %s455 = smul.addr %s454, 2
        %s456 = smul.addr %s455, 2
        %s457 = scalar_lea.vmem %s8, %s456
        %p458 = pneg %p283
        %p459 = pneg %p280
        %p460 = scmp.lt.s32.totalorder %s28, 1
        %s461 = scalar_select %p460, %s28, 1
        %s462 = smul.addr %s461, 2
        %s463 = smul.addr %s462, 8
        %s464 = scalar_lea.vmem %s9, %s463
        %p465 = pneg %p309
        %p466 = pneg %p306
        %p467 = scmp.lt.s32.totalorder %s28, 1
        %s468 = scalar_select %p467, %s28, 1
        %s469 = smul.addr %s468, 2
        %s470 = smul.addr %s469, 8
        %s471 = scalar_lea.vmem %s10, %s470
        %p472 = scmp.lt.s32.totalorder %s28, 1
        %s473 = scalar_select %p472, %s28, 1
        %s474 = smul.addr %s473, 2
        %s475 = smul.addr %s474, 2
        %s476 = scalar_lea.vmem %s2, %s475
        %p477 = scmp.lt.s32.totalorder %s28, 1
        %s478 = scalar_select %p477, %s28, 1
        %s479 = smul.addr %s478, 2
        %s480 = smul.addr %s479, 2
        %s481 = scalar_lea.vmem %s3, %s480
        %p482 = scmp.lt.s32.totalorder %s28, 1
        %s483 = scalar_select %p482, %s28, 1
        %s484 = smul.addr %s483, 2
        %s485 = smul.addr %s484, 2
        %s486 = scalar_lea.vmem %s4, %s485
        %p487 = scmp.lt.s32.totalorder %s28, 1
        %s488 = scalar_select %p487, %s28, 1
        %s489 = smul.addr %s488, 2
        %s490 = smul.addr %s489, 2
        %s491 = scalar_lea.vmem %s5, %s490
        %p492 = scmp.lt.s32.totalorder %s28, 1
        %s493 = scalar_select %p492, %s28, 1
        %s494 = smul.addr %s493, 2
        %s495 = smul.addr %s494, 2
        %s496 = scalar_lea.vmem %s6, %s495
        %p497 = scmp.lt.s32.totalorder %s28, 1
        %s498 = scalar_select %p497, %s28, 1
        %s499 = smul.addr %s498, 2
        %s500 = smul.addr %s499, 2
        %s501 = scalar_lea.vmem %s7, %s500
        %p502 = scmp.lt.s32.totalorder %s28, 1
        %s503 = scalar_select %p502, %s28, 1
        %s504 = smul.addr %s503, 2
        %s505 = smul.addr %s504, 2
        %s506 = scalar_lea.vmem %s8, %s505
        %p507 = scmp.lt.s32.totalorder %s28, 1
        %s508 = scalar_select %p507, %s28, 1
        %s509 = smul.addr %s508, 2
        %s510 = smul.addr %s509, 8
        %s511 = scalar_lea.vmem %s9, %s510
        %p512 = scmp.lt.s32.totalorder %s28, 1
        %s513 = scalar_select %p512, %s28, 1
        %s514 = smul.addr %s513, 2
        %s515 = smul.addr %s514, 8
        %s516 = scalar_lea.vmem %s10, %s515
        %vm518 = vcmask 130048
        %519 = vst.msk [vmem:[#allocation2] sm:$0xff] %vm518, 0.0
        %520 = vst.msk [vmem:[#allocation2 + $0x18] sm:$0xff] %vm518, 0.0
        %521 = vst [vmem:[#allocation3] sm:$0xff] 0.0
        %522 = vst [vmem:[#allocation3 + $0x18] sm:$0xff] 0.0
        %vm523 = vcmask 1047680
        %524 = vst.msk [vmem:[#allocation3 + $0x8] sm:$0xff] %vm523, 0.0
        %525 = vst.msk [vmem:[#allocation3 + $0x10] sm:$0xff] %vm518, 0.0
        %526 = vst.msk [vmem:[#allocation3 + $0x20] sm:$0xff] %vm523, 0.0
        %527 = vst.msk [vmem:[#allocation3 + $0x28] sm:$0xff] %vm518, 0.0
        %v528 = vld [vmem:[%s381] sm:$0xff]
        %v529 = vld [vmem:[%s381 + $0x8] sm:$0xff]
        %v530 = vld [vmem:[%s390] sm:$0xff]
        %v531 = vld [vmem:[%s390 + $0x8] sm:$0xff]
        %v532 = vadd.f32 %v528, 1.0
        %v533 = vadd.f32 %v529, 1.0
        %vm534 = vcmp.gt.f32.partialorder %v532, 0.7
        %vm535 = vcmp.gt.f32.partialorder %v533, 0.7
        %v536 = vsel %vm534, 1, 0
        %v537 = vsel %vm535, 1, 0
        %v538 = vcvt.s32.f32 %v536
        %v539 = vcvt.s32.f32 %v537
        %540 = vst.msk [vmem:[#allocation2 + $0x8] sm:$0xff] %vm518, %v538
        %541 = vst.msk [vmem:[#allocation2 + $0x10] sm:$0xff] %vm518, %v539
        %542 = vst.msk [vmem:[#allocation3 + $0x8] sm:$0xff] %vm518, %v538
        %543 = vst.msk [vmem:[#allocation3 + $0x20] sm:$0xff] %vm518, %v539
        %v544 = vld [vmem:[#allocation3] sm:$0xff]
        %v545 = vld [vmem:[#allocation3 + $0x8] sm:$0xff]
        %v546 = vld [vmem:[#allocation3 + $0x18] sm:$0xff]
        %v547 = vld [vmem:[#allocation3 + $0x20] sm:$0xff]
        %550 = vrot.lane.b32.xlu0 %v545, 124
        %v551 = vpop.permute.xlu0 %550
        %552 = vrot.lane.b32.xlu0 %v547, 124
        %v553 = vpop.permute.xlu0 %552
        %v556 = vmax.f32 %v544, %v551
        %v557 = vmax.f32 %v545, %v551
        %v558 = vmax.f32 %v546, %v553
        %v559 = vmax.f32 %v547, %v553
        %v560 = vld [vmem:[#allocation2 + $0x7] sm:$0xff]
        %v561 = vld [vmem:[#allocation2 + $0xf] sm:$0xff]
        %v562 = vld [vmem:[#allocation2 + $0x9] sm:$0xff]
        %v563 = vld [vmem:[#allocation2 + $0x11] sm:$0xff]
        %v564 = vmax.f32 %v545, %v560
        %v565 = vmax.f32 %v547, %v561
        %v566 = vmax.f32 %v564, %v562
        %v567 = vmax.f32 %v565, %v563
        %568 = vst.msk [vmem:[#allocation3 + $0x8] sm:$0xff] %vm518, %v566
        %569 = vst.msk [vmem:[#allocation3 + $0x20] sm:$0xff] %vm518, %v567
        %v570 = vld [vmem:[#allocation3] sm:$0xff]
        %v571 = vld [vmem:[#allocation3 + $0x8] sm:$0xff]
        %v572 = vld [vmem:[#allocation3 + $0x18] sm:$0xff]
        %v573 = vld [vmem:[#allocation3 + $0x20] sm:$0xff]
        %576 = vrot.lane.b32.xlu0 %v571, 126
        %v577 = vpop.permute.xlu0 %576
        %578 = vrot.lane.b32.xlu0 %v573, 126
        %v579 = vpop.permute.xlu0 %578
        %v582 = vmax.f32 %v570, %v577
        %v583 = vmax.f32 %v571, %v577
        %v584 = vmax.f32 %v572, %v579
        %v585 = vmax.f32 %v573, %v579
        %590 = vrot.lane.b32.xlu0 %v582, 127
        %v591 = vpop.permute.xlu0 %590
        %592 = vrot.lane.b32.xlu0 %v583, 127
        %v593 = vpop.permute.xlu0 %592
        %594 = vrot.lane.b32.xlu0 %v584, 127
        %v595 = vpop.permute.xlu0 %594
        %596 = vrot.lane.b32.xlu0 %v585, 127
        %v597 = vpop.permute.xlu0 %596
        %vm598 = vcmask 1039360
        %v599 = vsel %vm598, %v591, %v593
        %v600 = vsel %vm598, %v595, %v597
        %v605 = vmax.f32 %v556, %v599
        %v606 = vmax.f32 %v557, %v593
        %v607 = vmax.f32 %v558, %v600
        %v608 = vmax.f32 %v559, %v597
        %v609 = vld [vmem:[#allocation2 + $0x6] sm:$0xff]
        %v610 = vld [vmem:[#allocation2 + $0xe] sm:$0xff]
        %v611 = vld [vmem:[#allocation2 + $0xa] sm:$0xff]
        %v612 = vld [vmem:[#allocation2 + $0x12] sm:$0xff]
        %v613 = vmax.f32 %v571, %v609
        %v614 = vmax.f32 %v573, %v610
        %v615 = vmax.f32 %v613, %v611
        %v616 = vmax.f32 %v614, %v612
        %617 = vst.msk [vmem:[#allocation3 + $0x8] sm:$0xff] %vm518, %v615
        %618 = vst.msk [vmem:[#allocation3 + $0x20] sm:$0xff] %vm518, %v616
        %v619 = vld [vmem:[#allocation3 + $0x8] sm:$0xff]
        %v620 = vld [vmem:[#allocation3 + $0x20] sm:$0xff]
        %623 = vrot.lane.b32.xlu0 %v619, 126
        %v624 = vpop.permute.xlu0 %623
        %625 = vrot.lane.b32.xlu0 %v620, 126
        %v626 = vpop.permute.xlu0 %625
        %v629 = vmax.f32 %v605, %v624
        %v630 = vmax.f32 %v606, %v624
        %v631 = vmax.f32 %v607, %v626
        %v632 = vmax.f32 %v608, %v626
        %637 = vrot.lane.b32.xlu0 %v629, 2
        %v638 = vpop.permute.xlu0 %637
        %639 = vrot.lane.b32.xlu0 %v630, 2
        %v640 = vpop.permute.xlu0 %639
        %641 = vrot.lane.b32.xlu0 %v631, 2
        %v642 = vpop.permute.xlu0 %641
        %643 = vrot.lane.b32.xlu0 %v632, 2
        %v644 = vpop.permute.xlu0 %643
        %vm645 = vcmask 15360
        %v646 = vsel %vm645, %v638, %v640
        %v647 = vsel %vm645, %v642, %v644
        %650 = vst.msk [vmem:[#allocation2 + $0x8] sm:$0xff] %vm518, %v646
        %651 = vst.msk [vmem:[#allocation2 + $0x10] sm:$0xff] %vm518, %v647
        %652 = vst.msk [vmem:[#allocation3 + $0x8] sm:$0xff] %vm518, %v646
        %653 = vst.msk [vmem:[#allocation3 + $0x20] sm:$0xff] %vm518, %v647
        %v654 = vld [vmem:[#allocation3] sm:$0xff]
        %v655 = vld [vmem:[#allocation3 + $0x8] sm:$0xff]
        %v656 = vld [vmem:[#allocation3 + $0x18] sm:$0xff]
        %v657 = vld [vmem:[#allocation3 + $0x20] sm:$0xff]
        %660 = vrot.lane.b32.xlu0 %v655, 116
        %v661 = vpop.permute.xlu0 %660
        %662 = vrot.lane.b32.xlu0 %v657, 116
        %v663 = vpop.permute.xlu0 %662
        %v666 = vmin.f32 %v654, %v661
        %v667 = vmin.f32 %v655, %v661
        %v668 = vmin.f32 %v656, %v663
        %v669 = vmin.f32 %v657, %v663
        %v670 = vld [vmem:[#allocation2 + $0x5] sm:$0xff]
        %v671 = vld [vmem:[#allocation2 + $0xd] sm:$0xff]
        %v672 = vld [vmem:[#allocation2 + $0x6] sm:$0xff]
        %v673 = vld [vmem:[#allocation2 + $0xe] sm:$0xff]
        %v674 = vld [vmem:[#allocation2 + $0x7] sm:$0xff]
        %v675 = vld [vmem:[#allocation2 + $0xf] sm:$0xff]
        %v676 = vld [vmem:[#allocation2 + $0x9] sm:$0xff]
        %v677 = vld [vmem:[#allocation2 + $0x11] sm:$0xff]
        %v678 = vld [vmem:[#allocation2 + $0xa] sm:$0xff]
        %v679 = vld [vmem:[#allocation2 + $0x12] sm:$0xff]
        %v680 = vld [vmem:[#allocation2 + $0xb] sm:$0xff]
        %v681 = vld [vmem:[#allocation2 + $0x13] sm:$0xff]
        %v682 = vmin.f32 %v655, %v670
        %v683 = vmin.f32 %v657, %v671
        %v684 = vmin.f32 %v682, %v672
        %v685 = vmin.f32 %v683, %v673
        %v686 = vmin.f32 %v684, %v674
        %v687 = vmin.f32 %v685, %v675
        %v688 = vmin.f32 %v686, %v676
        %v689 = vmin.f32 %v687, %v677
        %v690 = vmin.f32 %v688, %v678
        %v691 = vmin.f32 %v689, %v679
        %v692 = vmin.f32 %v690, %v680
        %v693 = vmin.f32 %v691, %v681
        %694 = vst.msk [vmem:[#allocation3 + $0x8] sm:$0xff] %vm518, %v692
        %695 = vst.msk [vmem:[#allocation3 + $0x20] sm:$0xff] %vm518, %v693
        %v696 = vld [vmem:[#allocation3] sm:$0xff]
        %v697 = vld [vmem:[#allocation3 + $0x8] sm:$0xff]
        %v698 = vld [vmem:[#allocation3 + $0x18] sm:$0xff]
        %v699 = vld [vmem:[#allocation3 + $0x20] sm:$0xff]
        %702 = vrot.lane.b32.xlu0 %v697, 118
        %v703 = vpop.permute.xlu0 %702
        %704 = vrot.lane.b32.xlu0 %v699, 118
        %v705 = vpop.permute.xlu0 %704
        %v708 = vmin.f32 %v696, %v703
        %v709 = vmin.f32 %v697, %v703
        %v710 = vmin.f32 %v698, %v705
        %v711 = vmin.f32 %v699, %v705
        %716 = vrot.lane.b32.xlu0 %v708, 127
        %v717 = vpop.permute.xlu0 %716
        %718 = vrot.lane.b32.xlu0 %v709, 127
        %v719 = vpop.permute.xlu0 %718
        %720 = vrot.lane.b32.xlu0 %v710, 127
        %v721 = vpop.permute.xlu0 %720
        %722 = vrot.lane.b32.xlu0 %v711, 127
        %v723 = vpop.permute.xlu0 %722
        %v724 = vsel %vm598, %v717, %v719
        %v725 = vsel %vm598, %v721, %v723
        %v730 = vmin.f32 %v666, %v724
        %v731 = vmin.f32 %v667, %v719
        %v732 = vmin.f32 %v668, %v725
        %v733 = vmin.f32 %v669, %v723
        %v734 = vld [vmem:[#allocation2 + $0x4] sm:$0xff]
        %v735 = vld [vmem:[#allocation2 + $0xc] sm:$0xff]
        %v736 = vld [vmem:[#allocation2 + $0x14] sm:$0xff]
        %v737 = vmin.f32 %v697, %v734
        %v738 = vmin.f32 %v699, %v735
        %v739 = vmin.f32 %v737, %v735
        %v740 = vmin.f32 %v738, %v736
        %741 = vst.msk [vmem:[#allocation3 + $0x8] sm:$0xff] %vm518, %v739
        %742 = vst.msk [vmem:[#allocation3 + $0x20] sm:$0xff] %vm518, %v740
        %v743 = vld [vmem:[#allocation3] sm:$0xff]
        %v744 = vld [vmem:[#allocation3 + $0x8] sm:$0xff]
        %v745 = vld [vmem:[#allocation3 + $0x18] sm:$0xff]
        %v746 = vld [vmem:[#allocation3 + $0x20] sm:$0xff]
        %749 = vrot.lane.b32.xlu0 %v744, 120
        %v750 = vpop.permute.xlu0 %749
        %751 = vrot.lane.b32.xlu0 %v746, 120
        %v752 = vpop.permute.xlu0 %751
        %v755 = vmin.f32 %v743, %v750
        %v756 = vmin.f32 %v744, %v750
        %v757 = vmin.f32 %v745, %v752
        %v758 = vmin.f32 %v746, %v752
        %763 = vrot.lane.b32.xlu0 %v755, 126
        %v764 = vpop.permute.xlu0 %763
        %765 = vrot.lane.b32.xlu0 %v756, 126
        %v766 = vpop.permute.xlu0 %765
        %767 = vrot.lane.b32.xlu0 %v757, 126
        %v768 = vpop.permute.xlu0 %767
        %769 = vrot.lane.b32.xlu0 %v758, 126
        %v770 = vpop.permute.xlu0 %769
        %vm771 = vcmask 1031168
        %v772 = vsel %vm771, %v764, %v766
        %v773 = vsel %vm771, %v768, %v770
        %v778 = vmin.f32 %v730, %v772
        %v779 = vmin.f32 %v731, %v766
        %v780 = vmin.f32 %v732, %v773
        %v781 = vmin.f32 %v733, %v770
        %v782 = vld [vmem:[#allocation2 + $0x3] sm:$0xff]
        %v783 = vld [vmem:[#allocation2 + $0xb] sm:$0xff]
        %v784 = vld [vmem:[#allocation2 + $0xd] sm:$0xff]
        %v785 = vld [vmem:[#allocation2 + $0x15] sm:$0xff]
        %v786 = vmin.f32 %v744, %v782
        %v787 = vmin.f32 %v746, %v783
        %v788 = vmin.f32 %v786, %v784
        %v789 = vmin.f32 %v787, %v785
        %790 = vst.msk [vmem:[#allocation3 + $0x8] sm:$0xff] %vm518, %v788
        %791 = vst.msk [vmem:[#allocation3 + $0x20] sm:$0xff] %vm518, %v789
        %v792 = vld [vmem:[#allocation3] sm:$0xff]
        %v793 = vld [vmem:[#allocation3 + $0x8] sm:$0xff]
        %v794 = vld [vmem:[#allocation3 + $0x18] sm:$0xff]
        %v795 = vld [vmem:[#allocation3 + $0x20] sm:$0xff]
        %800 = vrot.lane.b32.xlu0 %v792, 127
        %v801 = vpop.permute.xlu0 %800
        %802 = vrot.lane.b32.xlu0 %v793, 127
        %v803 = vpop.permute.xlu0 %802
        %804 = vrot.lane.b32.xlu0 %v794, 127
        %v805 = vpop.permute.xlu0 %804
        %806 = vrot.lane.b32.xlu0 %v795, 127
        %v807 = vpop.permute.xlu0 %806
        %v808 = vsel %vm598, %v801, %v803
        %v809 = vsel %vm598, %v805, %v807
        %v814 = vmin.f32 %v792, %v808
        %v815 = vmin.f32 %v793, %v803
        %v816 = vmin.f32 %v794, %v809
        %v817 = vmin.f32 %v795, %v807
        %818 = vrot.lane.b32.xlu0 %v793, 126
        %v819 = vpop.permute.xlu0 %818
        %820 = vrot.lane.b32.xlu0 %v795, 126
        %v821 = vpop.permute.xlu0 %820
        %v824 = vmin.f32 %v792, %v819
        %v825 = vmin.f32 %v793, %v819
        %v826 = vmin.f32 %v794, %v821
        %v827 = vmin.f32 %v795, %v821
        %832 = vrot.lane.b32.xlu0 %v824, 126
        %v833 = vpop.permute.xlu0 %832
        %834 = vrot.lane.b32.xlu0 %v825, 126
        %v835 = vpop.permute.xlu0 %834
        %836 = vrot.lane.b32.xlu0 %v826, 126
        %v837 = vpop.permute.xlu0 %836
        %838 = vrot.lane.b32.xlu0 %v827, 126
        %v839 = vpop.permute.xlu0 %838
        %v840 = vsel %vm771, %v833, %v835
        %v841 = vsel %vm771, %v837, %v839
        %v846 = vmin.f32 %v814, %v840
        %v847 = vmin.f32 %v815, %v835
        %v848 = vmin.f32 %v816, %v841
        %v849 = vmin.f32 %v817, %v839
        %852 = vrot.lane.b32.xlu0 %v815, 123
        %v853 = vpop.permute.xlu0 %852
        %854 = vrot.lane.b32.xlu0 %v817, 123
        %v855 = vpop.permute.xlu0 %854
        %v858 = vmin.f32 %v846, %v853
        %v859 = vmin.f32 %v847, %v853
        %v860 = vmin.f32 %v848, %v855
        %v861 = vmin.f32 %v849, %v855
        %866 = vrot.lane.b32.xlu0 %v858, 125
        %v867 = vpop.permute.xlu0 %866
        %868 = vrot.lane.b32.xlu0 %v859, 125
        %v869 = vpop.permute.xlu0 %868
        %870 = vrot.lane.b32.xlu0 %v860, 125
        %v871 = vpop.permute.xlu0 %870
        %872 = vrot.lane.b32.xlu0 %v861, 125
        %v873 = vpop.permute.xlu0 %872
        %vm874 = vcmask 1022976
        %v875 = vsel %vm874, %v867, %v869
        %v876 = vsel %vm874, %v871, %v873
        %v881 = vmin.f32 %v778, %v875
        %v882 = vmin.f32 %v779, %v869
        %v883 = vmin.f32 %v780, %v876
        %v884 = vmin.f32 %v781, %v873
        %v885 = vld [vmem:[#allocation2 + $0x2] sm:$0xff]
        %v886 = vld [vmem:[#allocation2 + $0xa] sm:$0xff]
        %v887 = vld [vmem:[#allocation2 + $0xe] sm:$0xff]
        %v888 = vld [vmem:[#allocation2 + $0x16] sm:$0xff]
        %v889 = vmin.f32 %v793, %v885
        %v890 = vmin.f32 %v795, %v886
        %v891 = vmin.f32 %v889, %v887
        %v892 = vmin.f32 %v890, %v888
        %893 = vst.msk [vmem:[#allocation3 + $0x8] sm:$0xff] %vm518, %v891
        %894 = vst.msk [vmem:[#allocation3 + $0x20] sm:$0xff] %vm518, %v892
        %v895 = vld [vmem:[#allocation3 + $0x8] sm:$0xff]
        %v896 = vld [vmem:[#allocation3 + $0x20] sm:$0xff]
        %899 = vrot.lane.b32.xlu0 %v895, 122
        %v900 = vpop.permute.xlu0 %899
        %901 = vrot.lane.b32.xlu0 %v896, 122
        %v902 = vpop.permute.xlu0 %901
        %v905 = vmin.f32 %v881, %v900
        %v906 = vmin.f32 %v882, %v900
        %v907 = vmin.f32 %v883, %v902
        %v908 = vmin.f32 %v884, %v902
        %913 = vrot.lane.b32.xlu0 %v905, 6
        %v914 = vpop.permute.xlu0 %913
        %915 = vrot.lane.b32.xlu0 %v906, 6
        %v916 = vpop.permute.xlu0 %915
        %917 = vrot.lane.b32.xlu0 %v907, 6
        %v918 = vpop.permute.xlu0 %917
        %919 = vrot.lane.b32.xlu0 %v908, 6
        %v920 = vpop.permute.xlu0 %919
        %vm921 = vcmask 48128
        %v922 = vsel %vm921, %v914, %v916
        %v923 = vsel %vm921, %v918, %v920
        %926 = vst.msk [vmem:[#allocation2 + $0x8] sm:$0xff] %vm518, %v922
        %927 = vst.msk [vmem:[#allocation2 + $0x10] sm:$0xff] %vm518, %v923
        %928 = vst.msk [vmem:[#allocation3 + $0x8] sm:$0xff] %vm518, %v922
        %929 = vst.msk [vmem:[#allocation3 + $0x20] sm:$0xff] %vm518, %v923
        %v930 = vld [vmem:[#allocation3] sm:$0xff]
        %v931 = vld [vmem:[#allocation3 + $0x8] sm:$0xff]
        %v932 = vld [vmem:[#allocation3 + $0x18] sm:$0xff]
        %v933 = vld [vmem:[#allocation3 + $0x20] sm:$0xff]
        %936 = vrot.lane.b32.xlu0 %v931, 120
        %v937 = vpop.permute.xlu0 %936
        %938 = vrot.lane.b32.xlu0 %v933, 120
        %v939 = vpop.permute.xlu0 %938
        %v942 = vmax.f32 %v930, %v937
        %v943 = vmax.f32 %v931, %v937
        %v944 = vmax.f32 %v932, %v939
        %v945 = vmax.f32 %v933, %v939
        %v946 = vld [vmem:[#allocation2 + $0x6] sm:$0xff]
        %v947 = vld [vmem:[#allocation2 + $0xe] sm:$0xff]
        %v948 = vld [vmem:[#allocation2 + $0x7] sm:$0xff]
        %v949 = vld [vmem:[#allocation2 + $0xf] sm:$0xff]
        %v950 = vld [vmem:[#allocation2 + $0x9] sm:$0xff]
        %v951 = vld [vmem:[#allocation2 + $0x11] sm:$0xff]
        %v952 = vld [vmem:[#allocation2 + $0xa] sm:$0xff]
        %v953 = vld [vmem:[#allocation2 + $0x12] sm:$0xff]
        %v954 = vmax.f32 %v931, %v946
        %v955 = vmax.f32 %v933, %v947
        %v956 = vmax.f32 %v954, %v948
        %v957 = vmax.f32 %v955, %v949
        %v958 = vmax.f32 %v956, %v950
        %v959 = vmax.f32 %v957, %v951
        %v960 = vmax.f32 %v958, %v952
        %v961 = vmax.f32 %v959, %v953
        %962 = vst.msk [vmem:[#allocation3 + $0x8] sm:$0xff] %vm518, %v960
        %963 = vst.msk [vmem:[#allocation3 + $0x20] sm:$0xff] %vm518, %v961
        %v964 = vld [vmem:[#allocation3] sm:$0xff]
        %v965 = vld [vmem:[#allocation3 + $0x8] sm:$0xff]
        %v966 = vld [vmem:[#allocation3 + $0x18] sm:$0xff]
        %v967 = vld [vmem:[#allocation3 + $0x20] sm:$0xff]
        %970 = vrot.lane.b32.xlu0 %v965, 122
        %v971 = vpop.permute.xlu0 %970
        %972 = vrot.lane.b32.xlu0 %v967, 122
        %v973 = vpop.permute.xlu0 %972
        %v976 = vmax.f32 %v964, %v971
        %v977 = vmax.f32 %v965, %v971
        %v978 = vmax.f32 %v966, %v973
        %v979 = vmax.f32 %v967, %v973
        %984 = vrot.lane.b32.xlu0 %v976, 127
        %v985 = vpop.permute.xlu0 %984
        %986 = vrot.lane.b32.xlu0 %v977, 127
        %v987 = vpop.permute.xlu0 %986
        %988 = vrot.lane.b32.xlu0 %v978, 127
        %v989 = vpop.permute.xlu0 %988
        %990 = vrot.lane.b32.xlu0 %v979, 127
        %v991 = vpop.permute.xlu0 %990
        %v992 = vsel %vm598, %v985, %v987
        %v993 = vsel %vm598, %v989, %v991
        %v998 = vmax.f32 %v942, %v992
        %v999 = vmax.f32 %v943, %v987
        %v1000 = vmax.f32 %v944, %v993
        %v1001 = vmax.f32 %v945, %v991
        %v1002 = vld [vmem:[#allocation2 + $0x5] sm:$0xff]
        %v1003 = vld [vmem:[#allocation2 + $0xd] sm:$0xff]
        %v1004 = vld [vmem:[#allocation2 + $0xb] sm:$0xff]
        %v1005 = vld [vmem:[#allocation2 + $0x13] sm:$0xff]
        %v1006 = vmax.f32 %v965, %v1002
        %v1007 = vmax.f32 %v967, %v1003
        %v1008 = vmax.f32 %v1006, %v1004
        %v1009 = vmax.f32 %v1007, %v1005
        %1010 = vst.msk [vmem:[#allocation3 + $0x8] sm:$0xff] %vm518, %v1008
        %1011 = vst.msk [vmem:[#allocation3 + $0x20] sm:$0xff] %vm518, %v1009
        %v1012 = vld [vmem:[#allocation3] sm:$0xff]
        %v1013 = vld [vmem:[#allocation3 + $0x8] sm:$0xff]
        %v1014 = vld [vmem:[#allocation3 + $0x18] sm:$0xff]
        %v1015 = vld [vmem:[#allocation3 + $0x20] sm:$0xff]
        %1020 = vrot.lane.b32.xlu0 %v1012, 127
        %v1021 = vpop.permute.xlu0 %1020
        %1022 = vrot.lane.b32.xlu0 %v1013, 127
        %v1023 = vpop.permute.xlu0 %1022
        %1024 = vrot.lane.b32.xlu0 %v1014, 127
        %v1025 = vpop.permute.xlu0 %1024
        %1026 = vrot.lane.b32.xlu0 %v1015, 127
        %v1027 = vpop.permute.xlu0 %1026
        %v1028 = vsel %vm598, %v1021, %v1023
        %v1029 = vsel %vm598, %v1025, %v1027
        %v1034 = vmax.f32 %v1012, %v1028
        %v1035 = vmax.f32 %v1013, %v1023
        %v1036 = vmax.f32 %v1014, %v1029
        %v1037 = vmax.f32 %v1015, %v1027
        %1040 = vrot.lane.b32.xlu0 %v1035, 125
        %v1041 = vpop.permute.xlu0 %1040
        %1042 = vrot.lane.b32.xlu0 %v1037, 125
        %v1043 = vpop.permute.xlu0 %1042
        %v1046 = vmax.f32 %v1034, %v1041
        %v1047 = vmax.f32 %v1035, %v1041
        %v1048 = vmax.f32 %v1036, %v1043
        %v1049 = vmax.f32 %v1037, %v1043
        %1054 = vrot.lane.b32.xlu0 %v1046, 126
        %v1055 = vpop.permute.xlu0 %1054
        %1056 = vrot.lane.b32.xlu0 %v1047, 126
        %v1057 = vpop.permute.xlu0 %1056
        %1058 = vrot.lane.b32.xlu0 %v1048, 126
        %v1059 = vpop.permute.xlu0 %1058
        %1060 = vrot.lane.b32.xlu0 %v1049, 126
        %v1061 = vpop.permute.xlu0 %1060
        %v1062 = vsel %vm771, %v1055, %v1057
        %v1063 = vsel %vm771, %v1059, %v1061
        %v1068 = vmax.f32 %v998, %v1062
        %v1069 = vmax.f32 %v999, %v1057
        %v1070 = vmax.f32 %v1000, %v1063
        %v1071 = vmax.f32 %v1001, %v1061
        %v1072 = vld [vmem:[#allocation2 + $0x4] sm:$0xff]
        %v1073 = vld [vmem:[#allocation2 + $0xc] sm:$0xff]
        %v1074 = vld [vmem:[#allocation2 + $0x14] sm:$0xff]
        %v1075 = vmax.f32 %v1013, %v1072
        %v1076 = vmax.f32 %v1015, %v1073
        %v1077 = vmax.f32 %v1075, %v1073
        %v1078 = vmax.f32 %v1076, %v1074
        %1079 = vst.msk [vmem:[#allocation3 + $0x8] sm:$0xff] %vm518, %v1077
        %1080 = vst.msk [vmem:[#allocation3 + $0x20] sm:$0xff] %vm518, %v1078
        %v1081 = vld [vmem:[#allocation3 + $0x8] sm:$0xff]
        %v1082 = vld [vmem:[#allocation3 + $0x20] sm:$0xff]
        %1085 = vrot.lane.b32.xlu0 %v1081, 124
        %v1086 = vpop.permute.xlu0 %1085
        %1087 = vrot.lane.b32.xlu0 %v1082, 124
        %v1088 = vpop.permute.xlu0 %1087
        %v1091 = vmax.f32 %v1068, %v1086
        %v1092 = vmax.f32 %v1069, %v1086
        %v1093 = vmax.f32 %v1070, %v1088
        %v1094 = vmax.f32 %v1071, %v1088
        %v1095 = vlaneseq
        %v1096 = vshrl.u32 %v1095, 7
        %v1097 = vadd.s32 %v1096, 8
        %v1098 = vlaneseq
        %v1099 = vand.u32 %v1098, 127
        %vm1100 = vcmp.le.s32.totalorder %v1096, %v1099
        %vm1101 = vcmp.le.s32.totalorder %v1097, %v1099
        %v1102 = vsel %vm1100, 1, 0
        %v1103 = vsel %vm1101, 1, 0
        %v1104 = vcvt.s32.f32 %v1102
        %v1105 = vcvt.s32.f32 %v1103
        %v1106 = vpack.c.bf16 %v1105, %v1104
        %vm1107 = vcmp.ge.s32.totalorder %v1096, %v1099
        %vm1108 = vcmp.ge.s32.totalorder %v1097, %v1099
        %v1109 = vsel %vm1107, 1, 0
        %v1110 = vsel %vm1108, 1, 0
        %v1111 = vcvt.s32.f32 %v1109
        %v1112 = vcvt.s32.f32 %v1110
        %v1113 = vpack.c.bf16 %v1112, %v1111
        %v1114 = vpack.c.bf16 %v1093, %v1091
        %v1115 = vpack.c.bf16 %v1094, %v1092
        %1118 = vrot.lane.b32.xlu0 %v1114, 4
        %v1119 = vpop.permute.xlu0 %1118
        %1120 = vrot.lane.b32.xlu0 %v1115, 4
        %v1121 = vpop.permute.xlu0 %1120
        %vm1122 = vcmask 31744
        %v1123 = vsel %vm1122, %v1119, %v1121
        %v1125 = vsel %vm518, %v1123, 0
        %1127 = vmatprep.subr.bf16.mxu0 0
        %1128 = vmatpush1.bf16.msra.mxu0 %v1106
        %1129 = vmatprep.subr.bf16.mxu0 0
        %1130 = vmatpush1.bf16.msra.mxu0 0
        %1131 = vmatprep.subr.bf16.mxu0 0
        %1132 = vmatpush1.bf16.msra.mxu0 0
        %1133 = vmatprep.subr.bf16.mxu0 0
        %1134 = vmatpush1.bf16.msra.mxu0 0
        %1135 = vmatprep.subr.bf16.mxu0 0
        %1136 = vmatpush1.bf16.msra.mxu0 0
        %1137 = vmatprep.subr.bf16.mxu0 0
        %1138 = vmatpush1.bf16.msra.mxu0 0
        %1139 = vmatprep.subr.bf16.mxu0 0
        %1140 = vmatpush1.bf16.msra.mxu0 0
        %1141 = vmatprep.subr.bf16.mxu0 0
        %1142 = vmatpush1.bf16.msra.mxu0 0
        %1143 = vmatprep.subr.bf16.mxu0 0
        %1144 = vmatpush1.bf16.msra.mxu0 0
        %1145 = vmatprep.subr.bf16.mxu0 0
        %1146 = vmatpush1.bf16.msra.mxu0 0
        %1147 = vmatprep.subr.bf16.mxu0 0
        %1148 = vmatpush1.bf16.msra.mxu0 0
        %1149 = vmatprep.subr.bf16.mxu0 0
        %1150 = vmatpush1.bf16.msra.mxu0 0
        %1151 = vmatprep.subr.bf16.mxu0 0
        %1152 = vmatpush1.bf16.msra.mxu0 0
        %1153 = vmatprep.subr.bf16.mxu0 0
        %1154 = vmatpush1.bf16.msra.mxu0 0
        %1155 = vmatprep.subr.bf16.mxu0 0
        %1156 = vmatpush1.bf16.msra.mxu0 0
        %1157 = vmatprep.subr.bf16.mxu0 0
        %1158 = vmatpush1.bf16.msra.mxu0 0
        %1159 = vmatprep.mubr.bf16.mxu0 0
        %1160 = vmatmul.mubr.bf16.gmra.mrb[0].mxu0 %v1125
        %v1161 = vpop.f32.mrb[0].mxu0
        %v1162 = vadd.f32 0.0, %v1161
        %v1163 = vpop.f32.mrb[0].mxu0
        %v1164 = vpop.f32.mrb[0].mxu0
        %v1165 = vadd.f32 0.0, %v1164
        %v1166 = vpop.f32.mrb[0].mxu0
        %1167 = vdwg.mxu0
        %v1170 = vsel %vm518, %v1113, 0
        %1172 = vmatprep.subr.bf16.mxu0 0
        %1173 = vmatpush1.bf16.msra.mxu0 %v1123
        %1174 = vmatprep.subr.bf16.mxu0 0
        %1175 = vmatpush1.bf16.msra.mxu0 0
        %1176 = vmatprep.subr.bf16.mxu0 0
        %1177 = vmatpush1.bf16.msra.mxu0 0
        %1178 = vmatprep.subr.bf16.mxu0 0
        %1179 = vmatpush1.bf16.msra.mxu0 0
        %1180 = vmatprep.subr.bf16.mxu0 0
        %1181 = vmatpush1.bf16.msra.mxu0 0
        %1182 = vmatprep.subr.bf16.mxu0 0
        %1183 = vmatpush1.bf16.msra.mxu0 0
        %1184 = vmatprep.subr.bf16.mxu0 0
        %1185 = vmatpush1.bf16.msra.mxu0 0
        %1186 = vmatprep.subr.bf16.mxu0 0
        %1187 = vmatpush1.bf16.msra.mxu0 0
        %1188 = vmatprep.subr.bf16.mxu0 0
        %1189 = vmatpush1.bf16.msra.mxu0 0
        %1190 = vmatprep.subr.bf16.mxu0 0
        %1191 = vmatpush1.bf16.msra.mxu0 0
        %1192 = vmatprep.subr.bf16.mxu0 0
        %1193 = vmatpush1.bf16.msra.mxu0 0
        %1194 = vmatprep.subr.bf16.mxu0 0
        %1195 = vmatpush1.bf16.msra.mxu0 0
        %1196 = vmatprep.subr.bf16.mxu0 0
        %1197 = vmatpush1.bf16.msra.mxu0 0
        %1198 = vmatprep.subr.bf16.mxu0 0
        %1199 = vmatpush1.bf16.msra.mxu0 0
        %1200 = vmatprep.subr.bf16.mxu0 0
        %1201 = vmatpush1.bf16.msra.mxu0 0
        %1202 = vmatprep.subr.bf16.mxu0 0
        %1203 = vmatpush1.bf16.msra.mxu0 0
        %1204 = vmatprep.mubr.bf16.mxu0 0
        %1205 = vmatmul.mubr.bf16.gmra.mrb[0].mxu0 %v1170
        %v1206 = vpop.f32.mrb[0].mxu0
        %v1207 = vadd.f32 0.0, %v1206
        %v1208 = vpop.f32.mrb[0].mxu0
        %v1209 = vpop.f32.mrb[0].mxu0
        %v1210 = vadd.f32 0.0, %v1209
        %v1211 = vpop.f32.mrb[0].mxu0
        %1212 = vdwg.mxu0
        %vm1213 = vcmp.gt.f32.partialorder %v1162, 0.0
        %vm1214 = vcmp.gt.f32.partialorder %v1165, 0.0
        %1216 = vset.pattern.permute.xlu0 15
        %1217 = vperm.xlu0 %1216, %v1162
        %v1218 = vpop.permute.xlu0 %1217
        %1221 = vset.pattern.permute.xlu0 15
        %1222 = vperm.xlu0 %1221, %v1165
        %v1223 = vpop.permute.xlu0 %1222
        %vm1225 = vcmp.lt.f32.partialorder %v1162, %v1218
        %vm1226 = vcmp.lt.f32.partialorder %v1165, %v1223
        %vm1227 = vmand %vm1213, %vm1225
        %vm1228 = vmand %vm1214, %vm1226
        %vm1229 = vcmp.gt.f32.partialorder %v1207, 0.0
        %vm1230 = vcmp.gt.f32.partialorder %v1210, 0.0
        %vm1231 = vmand %vm1227, %vm1229
        %vm1232 = vmand %vm1228, %vm1230
        %v1233 = vlaneseq
        %v1234 = vshrl.u32 %v1233, 7
        %v1235 = vsub.s32 7, %v1234
        %v1236 = vrot.slane %v1210, %v1235
        %vm1237 = vcmp.lt.f32.partialorder %v1207, %v1236
        %vm1238 = vcmp.lt.f32.partialorder %v1210, %v1236
        %vm1239 = vmand %vm1231, %vm1237
        %vm1240 = vmand %vm1232, %vm1238
        %v1241 = vsel %vm1239, 1, 0
        %v1242 = vsel %vm1240, 1, 0
        %v1243 = vcvt.s32.f32 %v1241
        %v1244 = vcvt.s32.f32 %v1242
        %v1245 = vsub.f32 1.0, %v1091
        %v1246 = vsub.f32 1.0, %v1092
        %v1247 = vsub.f32 1.0, %v1093
        %v1248 = vsub.f32 1.0, %v1094
        %1253 = vrot.lane.b32.xlu0 %v1245, 4
        %v1254 = vpop.permute.xlu0 %1253
        %1255 = vrot.lane.b32.xlu0 %v1246, 4
        %v1256 = vpop.permute.xlu0 %1255
        %1257 = vrot.lane.b32.xlu0 %v1247, 4
        %v1258 = vpop.permute.xlu0 %1257
        %1259 = vrot.lane.b32.xlu0 %v1248, 4
        %v1260 = vpop.permute.xlu0 %1259
        %vm1261 = vcmask 31744
        %v1262 = vsel %vm1261, %v1254, %v1256
        %v1263 = vsel %vm1261, %v1258, %v1260
        %v1266 = vmul.f32 %v1243, %v1262
        %v1267 = vmul.f32 %v1244, %v1263
        %1268 = vst.msk [vmem:[#allocation2 + $0x8] sm:$0xff] %vm518, %v1266
        %1269 = vst.msk [vmem:[#allocation2 + $0x10] sm:$0xff] %vm518, %v1267
        %1270 = vst.msk [vmem:[#allocation3 + $0x8] sm:$0xff] %vm518, %v1266
        %1271 = vst.msk [vmem:[#allocation3 + $0x20] sm:$0xff] %vm518, %v1267
        %v1272 = vld [vmem:[#allocation3] sm:$0xff]
        %v1273 = vld [vmem:[#allocation3 + $0x8] sm:$0xff]
        %v1274 = vld [vmem:[#allocation3 + $0x18] sm:$0xff]
        %v1275 = vld [vmem:[#allocation3 + $0x20] sm:$0xff]
        %1278 = vrot.lane.b32.xlu0 %v1273, 118
        %v1279 = vpop.permute.xlu0 %1278
        %1280 = vrot.lane.b32.xlu0 %v1275, 118
        %v1281 = vpop.permute.xlu0 %1280
        %v1284 = vmax.f32 %v1272, %v1279
        %v1285 = vmax.f32 %v1273, %v1279
        %v1286 = vmax.f32 %v1274, %v1281
        %v1287 = vmax.f32 %v1275, %v1281
        %v1288 = vld [vmem:[#allocation2 + $0x5] sm:$0xff]
        %v1289 = vld [vmem:[#allocation2 + $0xd] sm:$0xff]
        %v1290 = vld [vmem:[#allocation2 + $0x6] sm:$0xff]
        %v1291 = vld [vmem:[#allocation2 + $0xe] sm:$0xff]
        %v1292 = vld [vmem:[#allocation2 + $0x7] sm:$0xff]
        %v1293 = vld [vmem:[#allocation2 + $0xf] sm:$0xff]
        %v1294 = vld [vmem:[#allocation2 + $0x9] sm:$0xff]
        %v1295 = vld [vmem:[#allocation2 + $0x11] sm:$0xff]
        %v1296 = vld [vmem:[#allocation2 + $0xa] sm:$0xff]
        %v1297 = vld [vmem:[#allocation2 + $0x12] sm:$0xff]
        %v1298 = vld [vmem:[#allocation2 + $0xb] sm:$0xff]
        %v1299 = vld [vmem:[#allocation2 + $0x13] sm:$0xff]
        %v1300 = vmax.f32 %v1273, %v1288
        %v1301 = vmax.f32 %v1275, %v1289
        %v1302 = vmax.f32 %v1300, %v1290
        %v1303 = vmax.f32 %v1301, %v1291
        %v1304 = vmax.f32 %v1302, %v1292
        %v1305 = vmax.f32 %v1303, %v1293
        %v1306 = vmax.f32 %v1304, %v1294
        %v1307 = vmax.f32 %v1305, %v1295
        %v1308 = vmax.f32 %v1306, %v1296
        %v1309 = vmax.f32 %v1307, %v1297
        %v1310 = vmax.f32 %v1308, %v1298
        %v1311 = vmax.f32 %v1309, %v1299
        %1312 = vst.msk [vmem:[#allocation3 + $0x8] sm:$0xff] %vm518, %v1310
        %1313 = vst.msk [vmem:[#allocation3 + $0x20] sm:$0xff] %vm518, %v1311
        %v1314 = vld [vmem:[#allocation3] sm:$0xff]
        %v1315 = vld [vmem:[#allocation3 + $0x8] sm:$0xff]
        %v1316 = vld [vmem:[#allocation3 + $0x18] sm:$0xff]
        %v1317 = vld [vmem:[#allocation3 + $0x20] sm:$0xff]
        %1320 = vrot.lane.b32.xlu0 %v1315, 120
        %v1321 = vpop.permute.xlu0 %1320
        %1322 = vrot.lane.b32.xlu0 %v1317, 120
        %v1323 = vpop.permute.xlu0 %1322
        %v1326 = vmax.f32 %v1314, %v1321
        %v1327 = vmax.f32 %v1315, %v1321
        %v1328 = vmax.f32 %v1316, %v1323
        %v1329 = vmax.f32 %v1317, %v1323
        %1334 = vrot.lane.b32.xlu0 %v1326, 127
        %v1335 = vpop.permute.xlu0 %1334
        %1336 = vrot.lane.b32.xlu0 %v1327, 127
        %v1337 = vpop.permute.xlu0 %1336
        %1338 = vrot.lane.b32.xlu0 %v1328, 127
        %v1339 = vpop.permute.xlu0 %1338
        %1340 = vrot.lane.b32.xlu0 %v1329, 127
        %v1341 = vpop.permute.xlu0 %1340
        %v1342 = vsel %vm598, %v1335, %v1337
        %v1343 = vsel %vm598, %v1339, %v1341
        %v1348 = vmax.f32 %v1284, %v1342
        %v1349 = vmax.f32 %v1285, %v1337
        %v1350 = vmax.f32 %v1286, %v1343
        %v1351 = vmax.f32 %v1287, %v1341
        %v1352 = vld [vmem:[#allocation2 + $0x4] sm:$0xff]
        %v1353 = vld [vmem:[#allocation2 + $0xc] sm:$0xff]
        %v1354 = vld [vmem:[#allocation2 + $0x14] sm:$0xff]
        %v1355 = vmax.f32 %v1315, %v1352
        %v1356 = vmax.f32 %v1317, %v1353
        %v1357 = vmax.f32 %v1355, %v1353
        %v1358 = vmax.f32 %v1356, %v1354
        %1359 = vst.msk [vmem:[#allocation3 + $0x8] sm:$0xff] %vm518, %v1357
        %1360 = vst.msk [vmem:[#allocation3 + $0x20] sm:$0xff] %vm518, %v1358
        %v1361 = vld [vmem:[#allocation3] sm:$0xff]
        %v1362 = vld [vmem:[#allocation3 + $0x8] sm:$0xff]
        %v1363 = vld [vmem:[#allocation3 + $0x18] sm:$0xff]
        %v1364 = vld [vmem:[#allocation3 + $0x20] sm:$0xff]
        %1369 = vrot.lane.b32.xlu0 %v1361, 127
        %v1370 = vpop.permute.xlu0 %1369
        %1371 = vrot.lane.b32.xlu0 %v1362, 127
        %v1372 = vpop.permute.xlu0 %1371
        %1373 = vrot.lane.b32.xlu0 %v1363, 127
        %v1374 = vpop.permute.xlu0 %1373
        %1375 = vrot.lane.b32.xlu0 %v1364, 127
        %v1376 = vpop.permute.xlu0 %1375
        %v1377 = vsel %vm598, %v1370, %v1372
        %v1378 = vsel %vm598, %v1374, %v1376
        %v1383 = vmax.f32 %v1361, %v1377
        %v1384 = vmax.f32 %v1362, %v1372
        %v1385 = vmax.f32 %v1363, %v1378
        %v1386 = vmax.f32 %v1364, %v1376
        %1387 = vrot.lane.b32.xlu0 %v1362, 126
        %v1388 = vpop.permute.xlu0 %1387
        %1389 = vrot.lane.b32.xlu0 %v1364, 126
        %v1390 = vpop.permute.xlu0 %1389
        %v1393 = vmax.f32 %v1361, %v1388
        %v1394 = vmax.f32 %v1362, %v1388
        %v1395 = vmax.f32 %v1363, %v1390
        %v1396 = vmax.f32 %v1364, %v1390
        %1401 = vrot.lane.b32.xlu0 %v1393, 126
        %v1402 = vpop.permute.xlu0 %1401
        %1403 = vrot.lane.b32.xlu0 %v1394, 126
        %v1404 = vpop.permute.xlu0 %1403
        %1405 = vrot.lane.b32.xlu0 %v1395, 126
        %v1406 = vpop.permute.xlu0 %1405
        %1407 = vrot.lane.b32.xlu0 %v1396, 126
        %v1408 = vpop.permute.xlu0 %1407
        %v1409 = vsel %vm771, %v1402, %v1404
        %v1410 = vsel %vm771, %v1406, %v1408
        %v1415 = vmax.f32 %v1383, %v1409
        %v1416 = vmax.f32 %v1384, %v1404
        %v1417 = vmax.f32 %v1385, %v1410
        %v1418 = vmax.f32 %v1386, %v1408
        %1421 = vrot.lane.b32.xlu0 %v1384, 123
        %v1422 = vpop.permute.xlu0 %1421
        %1423 = vrot.lane.b32.xlu0 %v1386, 123
        %v1424 = vpop.permute.xlu0 %1423
        %v1427 = vmax.f32 %v1415, %v1422
        %v1428 = vmax.f32 %v1416, %v1422
        %v1429 = vmax.f32 %v1417, %v1424
        %v1430 = vmax.f32 %v1418, %v1424
        %1435 = vrot.lane.b32.xlu0 %v1427, 126
        %v1436 = vpop.permute.xlu0 %1435
        %1437 = vrot.lane.b32.xlu0 %v1428, 126
        %v1438 = vpop.permute.xlu0 %1437
        %1439 = vrot.lane.b32.xlu0 %v1429, 126
        %v1440 = vpop.permute.xlu0 %1439
        %1441 = vrot.lane.b32.xlu0 %v1430, 126
        %v1442 = vpop.permute.xlu0 %1441
        %v1443 = vsel %vm771, %v1436, %v1438
        %v1444 = vsel %vm771, %v1440, %v1442
        %v1449 = vmax.f32 %v1348, %v1443
        %v1450 = vmax.f32 %v1349, %v1438
        %v1451 = vmax.f32 %v1350, %v1444
        %v1452 = vmax.f32 %v1351, %v1442
        %v1453 = vld [vmem:[#allocation2 + $0x3] sm:$0xff]
        %v1454 = vld [vmem:[#allocation2 + $0xb] sm:$0xff]
        %v1455 = vld [vmem:[#allocation2 + $0xd] sm:$0xff]
        %v1456 = vld [vmem:[#allocation2 + $0x15] sm:$0xff]
        %v1457 = vmax.f32 %v1362, %v1453
        %v1458 = vmax.f32 %v1364, %v1454
        %v1459 = vmax.f32 %v1457, %v1455
        %v1460 = vmax.f32 %v1458, %v1456
        %1461 = vst.msk [vmem:[#allocation3 + $0x8] sm:$0xff] %vm518, %v1459
        %1462 = vst.msk [vmem:[#allocation3 + $0x20] sm:$0xff] %vm518, %v1460
        %v1463 = vld [vmem:[#allocation3 + $0x8] sm:$0xff]
        %v1464 = vld [vmem:[#allocation3 + $0x20] sm:$0xff]
        %1467 = vrot.lane.b32.xlu0 %v1463, 123
        %v1468 = vpop.permute.xlu0 %1467
        %1469 = vrot.lane.b32.xlu0 %v1464, 123
        %v1470 = vpop.permute.xlu0 %1469
        %v1473 = vmax.f32 %v1449, %v1468
        %v1474 = vmax.f32 %v1450, %v1468
        %v1475 = vmax.f32 %v1451, %v1470
        %v1476 = vmax.f32 %v1452, %v1470
        %1481 = vrot.lane.b32.xlu0 %v1473, 5
        %v1482 = vpop.permute.xlu0 %1481
        %1483 = vrot.lane.b32.xlu0 %v1474, 5
        %v1484 = vpop.permute.xlu0 %1483
        %1485 = vrot.lane.b32.xlu0 %v1475, 5
        %v1486 = vpop.permute.xlu0 %1485
        %1487 = vrot.lane.b32.xlu0 %v1476, 5
        %v1488 = vpop.permute.xlu0 %1487
        %vm1489 = vcmask 39936
        %v1490 = vsel %vm1489, %v1482, %v1484
        %v1491 = vsel %vm1489, %v1486, %v1488
        %1494 = vst.msk [vmem:[#allocation2 + $0x8] sm:$0xff] %vm518, %v1490
        %1495 = vst.msk [vmem:[#allocation2 + $0x10] sm:$0xff] %vm518, %v1491
        %1496 = vst.msk [vmem:[#allocation3 + $0x8] sm:$0xff] %vm518, %v1490
        %1497 = vst.msk [vmem:[#allocation3 + $0x20] sm:$0xff] %vm518, %v1491
        %v1498 = vld [vmem:[#allocation3] sm:$0xff]
        %v1499 = vld [vmem:[#allocation3 + $0x8] sm:$0xff]
        %v1500 = vld [vmem:[#allocation3 + $0x18] sm:$0xff]
        %v1501 = vld [vmem:[#allocation3 + $0x20] sm:$0xff]
        %1504 = vrot.lane.b32.xlu0 %v1499, 116
        %v1505 = vpop.permute.xlu0 %1504
        %1506 = vrot.lane.b32.xlu0 %v1501, 116
        %v1507 = vpop.permute.xlu0 %1506
        %v1510 = vmin.f32 %v1498, %v1505
        %v1511 = vmin.f32 %v1499, %v1505
        %v1512 = vmin.f32 %v1500, %v1507
        %v1513 = vmin.f32 %v1501, %v1507
        %v1514 = vld [vmem:[#allocation2 + $0x5] sm:$0xff]
        %v1515 = vld [vmem:[#allocation2 + $0xd] sm:$0xff]
        %v1516 = vld [vmem:[#allocation2 + $0x6] sm:$0xff]
        %v1517 = vld [vmem:[#allocation2 + $0xe] sm:$0xff]
        %v1518 = vld [vmem:[#allocation2 + $0x7] sm:$0xff]
        %v1519 = vld [vmem:[#allocation2 + $0xf] sm:$0xff]
        %v1520 = vld [vmem:[#allocation2 + $0x9] sm:$0xff]
        %v1521 = vld [vmem:[#allocation2 + $0x11] sm:$0xff]
        %v1522 = vld [vmem:[#allocation2 + $0xa] sm:$0xff]
        %v1523 = vld [vmem:[#allocation2 + $0x12] sm:$0xff]
        %v1524 = vld [vmem:[#allocation2 + $0xb] sm:$0xff]
        %v1525 = vld [vmem:[#allocation2 + $0x13] sm:$0xff]
        %v1526 = vmin.f32 %v1499, %v1514
        %v1527 = vmin.f32 %v1501, %v1515
        %v1528 = vmin.f32 %v1526, %v1516
        %v1529 = vmin.f32 %v1527, %v1517
        %v1530 = vmin.f32 %v1528, %v1518
        %v1531 = vmin.f32 %v1529, %v1519
        %v1532 = vmin.f32 %v1530, %v1520
        %v1533 = vmin.f32 %v1531, %v1521
        %v1534 = vmin.f32 %v1532, %v1522
        %v1535 = vmin.f32 %v1533, %v1523
        %v1536 = vmin.f32 %v1534, %v1524
        %v1537 = vmin.f32 %v1535, %v1525
        %1538 = vst.msk [vmem:[#allocation3 + $0x8] sm:$0xff] %vm518, %v1536
        %1539 = vst.msk [vmem:[#allocation3 + $0x20] sm:$0xff] %vm518, %v1537
        %v1540 = vld [vmem:[#allocation3] sm:$0xff]
        %v1541 = vld [vmem:[#allocation3 + $0x8] sm:$0xff]
        %v1542 = vld [vmem:[#allocation3 + $0x18] sm:$0xff]
        %v1543 = vld [vmem:[#allocation3 + $0x20] sm:$0xff]
        %1546 = vrot.lane.b32.xlu0 %v1541, 118
        %v1547 = vpop.permute.xlu0 %1546
        %1548 = vrot.lane.b32.xlu0 %v1543, 118
        %v1549 = vpop.permute.xlu0 %1548
        %v1552 = vmin.f32 %v1540, %v1547
        %v1553 = vmin.f32 %v1541, %v1547
        %v1554 = vmin.f32 %v1542, %v1549
        %v1555 = vmin.f32 %v1543, %v1549
        %1560 = vrot.lane.b32.xlu0 %v1552, 127
        %v1561 = vpop.permute.xlu0 %1560
        %1562 = vrot.lane.b32.xlu0 %v1553, 127
        %v1563 = vpop.permute.xlu0 %1562
        %1564 = vrot.lane.b32.xlu0 %v1554, 127
        %v1565 = vpop.permute.xlu0 %1564
        %1566 = vrot.lane.b32.xlu0 %v1555, 127
        %v1567 = vpop.permute.xlu0 %1566
        %v1568 = vsel %vm598, %v1561, %v1563
        %v1569 = vsel %vm598, %v1565, %v1567
        %v1574 = vmin.f32 %v1510, %v1568
        %v1575 = vmin.f32 %v1511, %v1563
        %v1576 = vmin.f32 %v1512, %v1569
        %v1577 = vmin.f32 %v1513, %v1567
        %v1578 = vld [vmem:[#allocation2 + $0x4] sm:$0xff]
        %v1579 = vld [vmem:[#allocation2 + $0xc] sm:$0xff]
        %v1580 = vld [vmem:[#allocation2 + $0x14] sm:$0xff]
        %v1581 = vmin.f32 %v1541, %v1578
        %v1582 = vmin.f32 %v1543, %v1579
        %v1583 = vmin.f32 %v1581, %v1579
        %v1584 = vmin.f32 %v1582, %v1580
        %1585 = vst.msk [vmem:[#allocation3 + $0x8] sm:$0xff] %vm518, %v1583
        %1586 = vst.msk [vmem:[#allocation3 + $0x20] sm:$0xff] %vm518, %v1584
        %v1587 = vld [vmem:[#allocation3] sm:$0xff]
        %v1588 = vld [vmem:[#allocation3 + $0x8] sm:$0xff]
        %v1589 = vld [vmem:[#allocation3 + $0x18] sm:$0xff]
        %v1590 = vld [vmem:[#allocation3 + $0x20] sm:$0xff]
        %1593 = vrot.lane.b32.xlu0 %v1588, 120
        %v1594 = vpop.permute.xlu0 %1593
        %1595 = vrot.lane.b32.xlu0 %v1590, 120
        %v1596 = vpop.permute.xlu0 %1595
        %v1599 = vmin.f32 %v1587, %v1594
        %v1600 = vmin.f32 %v1588, %v1594
        %v1601 = vmin.f32 %v1589, %v1596
        %v1602 = vmin.f32 %v1590, %v1596
        %1607 = vrot.lane.b32.xlu0 %v1599, 126
        %v1608 = vpop.permute.xlu0 %1607
        %1609 = vrot.lane.b32.xlu0 %v1600, 126
        %v1610 = vpop.permute.xlu0 %1609
        %1611 = vrot.lane.b32.xlu0 %v1601, 126
        %v1612 = vpop.permute.xlu0 %1611
        %1613 = vrot.lane.b32.xlu0 %v1602, 126
        %v1614 = vpop.permute.xlu0 %1613
        %v1615 = vsel %vm771, %v1608, %v1610
        %v1616 = vsel %vm771, %v1612, %v1614
        %v1621 = vmin.f32 %v1574, %v1615
        %v1622 = vmin.f32 %v1575, %v1610
        %v1623 = vmin.f32 %v1576, %v1616
        %v1624 = vmin.f32 %v1577, %v1614
        %v1625 = vld [vmem:[#allocation2 + $0x3] sm:$0xff]
        %v1626 = vld [vmem:[#allocation2 + $0xb] sm:$0xff]
        %v1627 = vld [vmem:[#allocation2 + $0xd] sm:$0xff]
        %v1628 = vld [vmem:[#allocation2 + $0x15] sm:$0xff]
        %v1629 = vmin.f32 %v1588, %v1625
        %v1630 = vmin.f32 %v1590, %v1626
        %v1631 = vmin.f32 %v1629, %v1627
        %v1632 = vmin.f32 %v1630, %v1628
        %1633 = vst.msk [vmem:[#allocation3 + $0x8] sm:$0xff] %vm518, %v1631
        %1634 = vst.msk [vmem:[#allocation3 + $0x20] sm:$0xff] %vm518, %v1632
        %v1635 = vld [vmem:[#allocation3] sm:$0xff]
        %v1636 = vld [vmem:[#allocation3 + $0x8] sm:$0xff]
        %v1637 = vld [vmem:[#allocation3 + $0x18] sm:$0xff]
        %v1638 = vld [vmem:[#allocation3 + $0x20] sm:$0xff]
        %1643 = vrot.lane.b32.xlu0 %v1635, 127
        %v1644 = vpop.permute.xlu0 %1643
        %1645 = vrot.lane.b32.xlu0 %v1636, 127
        %v1646 = vpop.permute.xlu0 %1645
        %1647 = vrot.lane.b32.xlu0 %v1637, 127
        %v1648 = vpop.permute.xlu0 %1647
        %1649 = vrot.lane.b32.xlu0 %v1638, 127
        %v1650 = vpop.permute.xlu0 %1649
        %v1651 = vsel %vm598, %v1644, %v1646
        %v1652 = vsel %vm598, %v1648, %v1650
        %v1657 = vmin.f32 %v1635, %v1651
        %v1658 = vmin.f32 %v1636, %v1646
        %v1659 = vmin.f32 %v1637, %v1652
        %v1660 = vmin.f32 %v1638, %v1650
        %1661 = vrot.lane.b32.xlu0 %v1636, 126
        %v1662 = vpop.permute.xlu0 %1661
        %1663 = vrot.lane.b32.xlu0 %v1638, 126
        %v1664 = vpop.permute.xlu0 %1663
        %v1667 = vmin.f32 %v1635, %v1662
        %v1668 = vmin.f32 %v1636, %v1662
        %v1669 = vmin.f32 %v1637, %v1664
        %v1670 = vmin.f32 %v1638, %v1664
        %1675 = vrot.lane.b32.xlu0 %v1667, 126
        %v1676 = vpop.permute.xlu0 %1675
        %1677 = vrot.lane.b32.xlu0 %v1668, 126
        %v1678 = vpop.permute.xlu0 %1677
        %1679 = vrot.lane.b32.xlu0 %v1669, 126
        %v1680 = vpop.permute.xlu0 %1679
        %1681 = vrot.lane.b32.xlu0 %v1670, 126
        %v1682 = vpop.permute.xlu0 %1681
        %v1683 = vsel %vm771, %v1676, %v1678
        %v1684 = vsel %vm771, %v1680, %v1682
        %v1689 = vmin.f32 %v1657, %v1683
        %v1690 = vmin.f32 %v1658, %v1678
        %v1691 = vmin.f32 %v1659, %v1684
        %v1692 = vmin.f32 %v1660, %v1682
        %1695 = vrot.lane.b32.xlu0 %v1658, 123
        %v1696 = vpop.permute.xlu0 %1695
        %1697 = vrot.lane.b32.xlu0 %v1660, 123
        %v1698 = vpop.permute.xlu0 %1697
        %v1701 = vmin.f32 %v1689, %v1696
        %v1702 = vmin.f32 %v1690, %v1696
        %v1703 = vmin.f32 %v1691, %v1698
        %v1704 = vmin.f32 %v1692, %v1698
        %1709 = vrot.lane.b32.xlu0 %v1701, 125
        %v1710 = vpop.permute.xlu0 %1709
        %1711 = vrot.lane.b32.xlu0 %v1702, 125
        %v1712 = vpop.permute.xlu0 %1711
        %1713 = vrot.lane.b32.xlu0 %v1703, 125
        %v1714 = vpop.permute.xlu0 %1713
        %1715 = vrot.lane.b32.xlu0 %v1704, 125
        %v1716 = vpop.permute.xlu0 %1715
        %v1717 = vsel %vm874, %v1710, %v1712
        %v1718 = vsel %vm874, %v1714, %v1716
        %v1723 = vmin.f32 %v1621, %v1717
        %v1724 = vmin.f32 %v1622, %v1712
        %v1725 = vmin.f32 %v1623, %v1718
        %v1726 = vmin.f32 %v1624, %v1716
        %v1727 = vld [vmem:[#allocation2 + $0x2] sm:$0xff]
        %v1728 = vld [vmem:[#allocation2 + $0xa] sm:$0xff]
        %v1729 = vld [vmem:[#allocation2 + $0xe] sm:$0xff]
        %v1730 = vld [vmem:[#allocation2 + $0x16] sm:$0xff]
        %v1731 = vmin.f32 %v1636, %v1727
        %v1732 = vmin.f32 %v1638, %v1728
        %v1733 = vmin.f32 %v1731, %v1729
        %v1734 = vmin.f32 %v1732, %v1730
        %1735 = vst.msk [vmem:[#allocation3 + $0x8] sm:$0xff] %vm518, %v1733
        %1736 = vst.msk [vmem:[#allocation3 + $0x20] sm:$0xff] %vm518, %v1734
        %v1737 = vld [vmem:[#allocation3 + $0x8] sm:$0xff]
        %v1738 = vld [vmem:[#allocation3 + $0x20] sm:$0xff]
        %1741 = vrot.lane.b32.xlu0 %v1737, 122
        %v1742 = vpop.permute.xlu0 %1741
        %1743 = vrot.lane.b32.xlu0 %v1738, 122
        %v1744 = vpop.permute.xlu0 %1743
        %v1747 = vmin.f32 %v1723, %v1742
        %v1748 = vmin.f32 %v1724, %v1742
        %v1749 = vmin.f32 %v1725, %v1744
        %v1750 = vmin.f32 %v1726, %v1744
        %1755 = vrot.lane.b32.xlu0 %v1747, 6
        %v1756 = vpop.permute.xlu0 %1755
        %1757 = vrot.lane.b32.xlu0 %v1748, 6
        %v1758 = vpop.permute.xlu0 %1757
        %1759 = vrot.lane.b32.xlu0 %v1749, 6
        %v1760 = vpop.permute.xlu0 %1759
        %1761 = vrot.lane.b32.xlu0 %v1750, 6
        %v1762 = vpop.permute.xlu0 %1761
        %v1763 = vsel %vm921, %v1756, %v1758
        %v1764 = vsel %vm921, %v1760, %v1762
        %1767 = vst.msk [vmem:[#allocation2 + $0x8] sm:$0xff] %vm518, %v1763
        %1768 = vst.msk [vmem:[#allocation2 + $0x10] sm:$0xff] %vm518, %v1764
        %1769 = vst.msk [vmem:[#allocation3 + $0x8] sm:$0xff] %vm518, %v1763
        %1770 = vst.msk [vmem:[#allocation3 + $0x20] sm:$0xff] %vm518, %v1764
        %v1771 = vld [vmem:[#allocation3] sm:$0xff]
        %v1772 = vld [vmem:[#allocation3 + $0x8] sm:$0xff]
        %v1773 = vld [vmem:[#allocation3 + $0x18] sm:$0xff]
        %v1774 = vld [vmem:[#allocation3 + $0x20] sm:$0xff]
        %1777 = vrot.lane.b32.xlu0 %v1772, 118
        %v1778 = vpop.permute.xlu0 %1777
        %1779 = vrot.lane.b32.xlu0 %v1774, 118
        %v1780 = vpop.permute.xlu0 %1779
        %v1783 = vmax.f32 %v1771, %v1778
        %v1784 = vmax.f32 %v1772, %v1778
        %v1785 = vmax.f32 %v1773, %v1780
        %v1786 = vmax.f32 %v1774, %v1780
        %v1787 = vld [vmem:[#allocation2 + $0x5] sm:$0xff]
        %v1788 = vld [vmem:[#allocation2 + $0xd] sm:$0xff]
        %v1789 = vld [vmem:[#allocation2 + $0x6] sm:$0xff]
        %v1790 = vld [vmem:[#allocation2 + $0xe] sm:$0xff]
        %v1791 = vld [vmem:[#allocation2 + $0x7] sm:$0xff]
        %v1792 = vld [vmem:[#allocation2 + $0xf] sm:$0xff]
        %v1793 = vld [vmem:[#allocation2 + $0x9] sm:$0xff]
        %v1794 = vld [vmem:[#allocation2 + $0x11] sm:$0xff]
        %v1795 = vld [vmem:[#allocation2 + $0xa] sm:$0xff]
        %v1796 = vld [vmem:[#allocation2 + $0x12] sm:$0xff]
        %v1797 = vld [vmem:[#allocation2 + $0xb] sm:$0xff]
        %v1798 = vld [vmem:[#allocation2 + $0x13] sm:$0xff]
        %v1799 = vmax.f32 %v1772, %v1787
        %v1800 = vmax.f32 %v1774, %v1788
        %v1801 = vmax.f32 %v1799, %v1789
        %v1802 = vmax.f32 %v1800, %v1790
        %v1803 = vmax.f32 %v1801, %v1791
        %v1804 = vmax.f32 %v1802, %v1792
        %v1805 = vmax.f32 %v1803, %v1793
        %v1806 = vmax.f32 %v1804, %v1794
        %v1807 = vmax.f32 %v1805, %v1795
        %v1808 = vmax.f32 %v1806, %v1796
        %v1809 = vmax.f32 %v1807, %v1797
        %v1810 = vmax.f32 %v1808, %v1798
        %1811 = vst.msk [vmem:[#allocation3 + $0x8] sm:$0xff] %vm518, %v1809
        %1812 = vst.msk [vmem:[#allocation3 + $0x20] sm:$0xff] %vm518, %v1810
        %v1813 = vld [vmem:[#allocation3] sm:$0xff]
        %v1814 = vld [vmem:[#allocation3 + $0x8] sm:$0xff]
        %v1815 = vld [vmem:[#allocation3 + $0x18] sm:$0xff]
        %v1816 = vld [vmem:[#allocation3 + $0x20] sm:$0xff]
        %1819 = vrot.lane.b32.xlu0 %v1814, 120
        %v1820 = vpop.permute.xlu0 %1819
        %1821 = vrot.lane.b32.xlu0 %v1816, 120
        %v1822 = vpop.permute.xlu0 %1821
        %v1825 = vmax.f32 %v1813, %v1820
        %v1826 = vmax.f32 %v1814, %v1820
        %v1827 = vmax.f32 %v1815, %v1822
        %v1828 = vmax.f32 %v1816, %v1822
        %1833 = vrot.lane.b32.xlu0 %v1825, 127
        %v1834 = vpop.permute.xlu0 %1833
        %1835 = vrot.lane.b32.xlu0 %v1826, 127
        %v1836 = vpop.permute.xlu0 %1835
        %1837 = vrot.lane.b32.xlu0 %v1827, 127
        %v1838 = vpop.permute.xlu0 %1837
        %1839 = vrot.lane.b32.xlu0 %v1828, 127
        %v1840 = vpop.permute.xlu0 %1839
        %v1841 = vsel %vm598, %v1834, %v1836
        %v1842 = vsel %vm598, %v1838, %v1840
        %v1847 = vmax.f32 %v1783, %v1841
        %v1848 = vmax.f32 %v1784, %v1836
        %v1849 = vmax.f32 %v1785, %v1842
        %v1850 = vmax.f32 %v1786, %v1840
        %v1851 = vld [vmem:[#allocation2 + $0x4] sm:$0xff]
        %v1852 = vld [vmem:[#allocation2 + $0xc] sm:$0xff]
        %v1853 = vld [vmem:[#allocation2 + $0x14] sm:$0xff]
        %v1854 = vmax.f32 %v1814, %v1851
        %v1855 = vmax.f32 %v1816, %v1852
        %v1856 = vmax.f32 %v1854, %v1852
        %v1857 = vmax.f32 %v1855, %v1853
        %1858 = vst.msk [vmem:[#allocation3 + $0x8] sm:$0xff] %vm518, %v1856
        %1859 = vst.msk [vmem:[#allocation3 + $0x20] sm:$0xff] %vm518, %v1857
        %v1860 = vld [vmem:[#allocation3] sm:$0xff]
        %v1861 = vld [vmem:[#allocation3 + $0x8] sm:$0xff]
        %v1862 = vld [vmem:[#allocation3 + $0x18] sm:$0xff]
        %v1863 = vld [vmem:[#allocation3 + $0x20] sm:$0xff]
        %1868 = vrot.lane.b32.xlu0 %v1860, 127
        %v1869 = vpop.permute.xlu0 %1868
        %1870 = vrot.lane.b32.xlu0 %v1861, 127
        %v1871 = vpop.permute.xlu0 %1870
        %1872 = vrot.lane.b32.xlu0 %v1862, 127
        %v1873 = vpop.permute.xlu0 %1872
        %1874 = vrot.lane.b32.xlu0 %v1863, 127
        %v1875 = vpop.permute.xlu0 %1874
        %v1876 = vsel %vm598, %v1869, %v1871
        %v1877 = vsel %vm598, %v1873, %v1875
        %v1882 = vmax.f32 %v1860, %v1876
        %v1883 = vmax.f32 %v1861, %v1871
        %v1884 = vmax.f32 %v1862, %v1877
        %v1885 = vmax.f32 %v1863, %v1875
        %1886 = vrot.lane.b32.xlu0 %v1861, 126
        %v1887 = vpop.permute.xlu0 %1886
        %1888 = vrot.lane.b32.xlu0 %v1863, 126
        %v1889 = vpop.permute.xlu0 %1888
        %v1892 = vmax.f32 %v1860, %v1887
        %v1893 = vmax.f32 %v1861, %v1887
        %v1894 = vmax.f32 %v1862, %v1889
        %v1895 = vmax.f32 %v1863, %v1889
        %1900 = vrot.lane.b32.xlu0 %v1892, 126
        %v1901 = vpop.permute.xlu0 %1900
        %1902 = vrot.lane.b32.xlu0 %v1893, 126
        %v1903 = vpop.permute.xlu0 %1902
        %1904 = vrot.lane.b32.xlu0 %v1894, 126
        %v1905 = vpop.permute.xlu0 %1904
        %1906 = vrot.lane.b32.xlu0 %v1895, 126
        %v1907 = vpop.permute.xlu0 %1906
        %v1908 = vsel %vm771, %v1901, %v1903
        %v1909 = vsel %vm771, %v1905, %v1907
        %v1914 = vmax.f32 %v1882, %v1908
        %v1915 = vmax.f32 %v1883, %v1903
        %v1916 = vmax.f32 %v1884, %v1909
        %v1917 = vmax.f32 %v1885, %v1907
        %1920 = vrot.lane.b32.xlu0 %v1883, 123
        %v1921 = vpop.permute.xlu0 %1920
        %1922 = vrot.lane.b32.xlu0 %v1885, 123
        %v1923 = vpop.permute.xlu0 %1922
        %v1926 = vmax.f32 %v1914, %v1921
        %v1927 = vmax.f32 %v1915, %v1921
        %v1928 = vmax.f32 %v1916, %v1923
        %v1929 = vmax.f32 %v1917, %v1923
        %1934 = vrot.lane.b32.xlu0 %v1926, 126
        %v1935 = vpop.permute.xlu0 %1934
        %1936 = vrot.lane.b32.xlu0 %v1927, 126
        %v1937 = vpop.permute.xlu0 %1936
        %1938 = vrot.lane.b32.xlu0 %v1928, 126
        %v1939 = vpop.permute.xlu0 %1938
        %1940 = vrot.lane.b32.xlu0 %v1929, 126
        %v1941 = vpop.permute.xlu0 %1940
        %v1942 = vsel %vm771, %v1935, %v1937
        %v1943 = vsel %vm771, %v1939, %v1941
        %v1948 = vmax.f32 %v1847, %v1942
        %v1949 = vmax.f32 %v1848, %v1937
        %v1950 = vmax.f32 %v1849, %v1943
        %v1951 = vmax.f32 %v1850, %v1941
        %v1952 = vld [vmem:[#allocation2 + $0x3] sm:$0xff]
        %v1953 = vld [vmem:[#allocation2 + $0xb] sm:$0xff]
        %v1954 = vld [vmem:[#allocation2 + $0xd] sm:$0xff]
        %v1955 = vld [vmem:[#allocation2 + $0x15] sm:$0xff]
        %v1956 = vmax.f32 %v1861, %v1952
        %v1957 = vmax.f32 %v1863, %v1953
        %v1958 = vmax.f32 %v1956, %v1954
        %v1959 = vmax.f32 %v1957, %v1955
        %1960 = vst.msk [vmem:[#allocation3 + $0x8] sm:$0xff] %vm518, %v1958
        %1961 = vst.msk [vmem:[#allocation3 + $0x20] sm:$0xff] %vm518, %v1959
        %v1962 = vld [vmem:[#allocation3 + $0x8] sm:$0xff]
        %v1963 = vld [vmem:[#allocation3 + $0x20] sm:$0xff]
        %1966 = vrot.lane.b32.xlu0 %v1962, 123
        %v1967 = vpop.permute.xlu0 %1966
        %1968 = vrot.lane.b32.xlu0 %v1963, 123
        %v1969 = vpop.permute.xlu0 %1968
        %v1972 = vmax.f32 %v1948, %v1967
        %v1973 = vmax.f32 %v1949, %v1967
        %v1974 = vmax.f32 %v1950, %v1969
        %v1975 = vmax.f32 %v1951, %v1969
        %vm1976 = vcmp.gt.f32.partialorder %v532, 0.4
        %vm1977 = vcmp.gt.f32.partialorder %v533, 0.4
        %v1978 = vsel %vm1976, 1, 0
        %v1979 = vsel %vm1977, 1, 0
        %v1980 = vcvt.s32.f32 %v1978
        %v1981 = vcvt.s32.f32 %v1979
        %v1982 = vmul.f32 %v1980, %v1763
        %v1983 = vmul.f32 %v1981, %v1764
        %1984 = vst.msk [vmem:[#allocation2 + $0x8] sm:$0xff] %vm518, %v1982
        %1985 = vst.msk [vmem:[#allocation2 + $0x10] sm:$0xff] %vm518, %v1983
        %1986 = vst.msk [vmem:[#allocation3 + $0x8] sm:$0xff] %vm518, %v1982
        %1987 = vst.msk [vmem:[#allocation3 + $0x20] sm:$0xff] %vm518, %v1983
        %v1988 = vld [vmem:[#allocation3] sm:$0xff]
        %v1989 = vld [vmem:[#allocation3 + $0x8] sm:$0xff]
        %v1990 = vld [vmem:[#allocation3 + $0x18] sm:$0xff]
        %v1991 = vld [vmem:[#allocation3 + $0x20] sm:$0xff]
        %1994 = vrot.lane.b32.xlu0 %v1989, 126
        %v1995 = vpop.permute.xlu0 %1994
        %1996 = vrot.lane.b32.xlu0 %v1991, 126
        %v1997 = vpop.permute.xlu0 %1996
        %v2000 = vmin.f32 %v1988, %v1995
        %v2001 = vmin.f32 %v1989, %v1995
        %v2002 = vmin.f32 %v1990, %v1997
        %v2003 = vmin.f32 %v1991, %v1997
        %v2004 = vld [vmem:[#allocation2 + $0x7] sm:$0xff]
        %v2005 = vld [vmem:[#allocation2 + $0xf] sm:$0xff]
        %v2006 = vld [vmem:[#allocation2 + $0x9] sm:$0xff]
        %v2007 = vld [vmem:[#allocation2 + $0x11] sm:$0xff]
        %v2008 = vmin.f32 %v1989, %v2004
        %v2009 = vmin.f32 %v1991, %v2005
        %v2010 = vmin.f32 %v2008, %v2006
        %v2011 = vmin.f32 %v2009, %v2007
        %2012 = vst.msk [vmem:[#allocation3 + $0x8] sm:$0xff] %vm518, %v2010
        %2013 = vst.msk [vmem:[#allocation3 + $0x20] sm:$0xff] %vm518, %v2011
        %v2014 = vld [vmem:[#allocation3 + $0x8] sm:$0xff]
        %v2015 = vld [vmem:[#allocation3 + $0x20] sm:$0xff]
        %2018 = vrot.lane.b32.xlu0 %v2014, 127
        %v2019 = vpop.permute.xlu0 %2018
        %2020 = vrot.lane.b32.xlu0 %v2015, 127
        %v2021 = vpop.permute.xlu0 %2020
        %v2024 = vmin.f32 %v2000, %v2019
        %v2025 = vmin.f32 %v2001, %v2019
        %v2026 = vmin.f32 %v2002, %v2021
        %v2027 = vmin.f32 %v2003, %v2021
        %2032 = vrot.lane.b32.xlu0 %v2024, 1
        %v2033 = vpop.permute.xlu0 %2032
        %2034 = vrot.lane.b32.xlu0 %v2025, 1
        %v2035 = vpop.permute.xlu0 %2034
        %2036 = vrot.lane.b32.xlu0 %v2026, 1
        %v2037 = vpop.permute.xlu0 %2036
        %2038 = vrot.lane.b32.xlu0 %v2027, 1
        %v2039 = vpop.permute.xlu0 %2038
        %vm2040 = vcmask 7168
        %v2041 = vsel %vm2040, %v2033, %v2035
        %v2042 = vsel %vm2040, %v2037, %v2039
        %2045 = vst.msk [vmem:[#allocation2 + $0x8] sm:$0xff] %vm518, %v2041
        %2046 = vst.msk [vmem:[#allocation2 + $0x10] sm:$0xff] %vm518, %v2042
        %2047 = vst.msk [vmem:[#allocation3 + $0x8] sm:$0xff] %vm518, %v2041
        %2048 = vst.msk [vmem:[#allocation3 + $0x20] sm:$0xff] %vm518, %v2042
        %v2049 = vld [vmem:[#allocation3] sm:$0xff]
        %v2050 = vld [vmem:[#allocation3 + $0x8] sm:$0xff]
        %v2051 = vld [vmem:[#allocation3 + $0x18] sm:$0xff]
        %v2052 = vld [vmem:[#allocation3 + $0x20] sm:$0xff]
        %2055 = vrot.lane.b32.xlu0 %v2050, 126
        %v2056 = vpop.permute.xlu0 %2055
        %2057 = vrot.lane.b32.xlu0 %v2052, 126
        %v2058 = vpop.permute.xlu0 %2057
        %v2061 = vmax.f32 %v2049, %v2056
        %v2062 = vmax.f32 %v2050, %v2056
        %v2063 = vmax.f32 %v2051, %v2058
        %v2064 = vmax.f32 %v2052, %v2058
        %v2065 = vld [vmem:[#allocation2 + $0x7] sm:$0xff]
        %v2066 = vld [vmem:[#allocation2 + $0xf] sm:$0xff]
        %v2067 = vld [vmem:[#allocation2 + $0x9] sm:$0xff]
        %v2068 = vld [vmem:[#allocation2 + $0x11] sm:$0xff]
        %v2069 = vmax.f32 %v2050, %v2065
        %v2070 = vmax.f32 %v2052, %v2066
        %v2071 = vmax.f32 %v2069, %v2067
        %v2072 = vmax.f32 %v2070, %v2068
        %2073 = vst.msk [vmem:[#allocation3 + $0x8] sm:$0xff] %vm518, %v2071
        %2074 = vst.msk [vmem:[#allocation3 + $0x20] sm:$0xff] %vm518, %v2072
        %v2075 = vld [vmem:[#allocation3 + $0x8] sm:$0xff]
        %v2076 = vld [vmem:[#allocation3 + $0x20] sm:$0xff]
        %2079 = vrot.lane.b32.xlu0 %v2075, 127
        %v2080 = vpop.permute.xlu0 %2079
        %2081 = vrot.lane.b32.xlu0 %v2076, 127
        %v2082 = vpop.permute.xlu0 %2081
        %v2085 = vmax.f32 %v2061, %v2080
        %v2086 = vmax.f32 %v2062, %v2080
        %v2087 = vmax.f32 %v2063, %v2082
        %v2088 = vmax.f32 %v2064, %v2082
        %vm2089 = vcmp.gt.f32.partialorder %v530, 0.5
        %vm2090 = vcmp.gt.f32.partialorder %v531, 0.5
        %v2091 = vsel %vm2089, 1, 0
        %v2092 = vsel %vm2090, 1, 0
        %v2093 = vcvt.s32.f32 %v2091
        %v2094 = vcvt.s32.f32 %v2092
        %2099 = vrot.lane.b32.xlu0 %v1972, 5
        %v2100 = vpop.permute.xlu0 %2099
        %2101 = vrot.lane.b32.xlu0 %v1973, 5
        %v2102 = vpop.permute.xlu0 %2101
        %2103 = vrot.lane.b32.xlu0 %v1974, 5
        %v2104 = vpop.permute.xlu0 %2103
        %2105 = vrot.lane.b32.xlu0 %v1975, 5
        %v2106 = vpop.permute.xlu0 %2105
        %v2107 = vsel %vm1489, %v2100, %v2102
        %v2108 = vsel %vm1489, %v2104, %v2106
        %v2111 = vmul.f32 %v2093, %v2107
        %v2112 = vmul.f32 %v2094, %v2108
        %2113 = vst.msk [vmem:[#allocation2 + $0x8] sm:$0xff] %vm518, %v2111
        %2114 = vst.msk [vmem:[#allocation2 + $0x10] sm:$0xff] %vm518, %v2112
        %2115 = vst.msk [vmem:[#allocation3 + $0x8] sm:$0xff] %vm518, %v2111
        %2116 = vst.msk [vmem:[#allocation3 + $0x20] sm:$0xff] %vm518, %v2112
        %v2117 = vld [vmem:[#allocation3] sm:$0xff]
        %v2118 = vld [vmem:[#allocation3 + $0x8] sm:$0xff]
        %v2119 = vld [vmem:[#allocation3 + $0x18] sm:$0xff]
        %v2120 = vld [vmem:[#allocation3 + $0x20] sm:$0xff]
        %2123 = vrot.lane.b32.xlu0 %v2118, 124
        %v2124 = vpop.permute.xlu0 %2123
        %2125 = vrot.lane.b32.xlu0 %v2120, 124
        %v2126 = vpop.permute.xlu0 %2125
        %v2129 = vmax.f32 %v2117, %v2124
        %v2130 = vmax.f32 %v2118, %v2124
        %v2131 = vmax.f32 %v2119, %v2126
        %v2132 = vmax.f32 %v2120, %v2126
        %v2133 = vld [vmem:[#allocation2 + $0x7] sm:$0xff]
        %v2134 = vld [vmem:[#allocation2 + $0xf] sm:$0xff]
        %v2135 = vld [vmem:[#allocation2 + $0x9] sm:$0xff]
        %v2136 = vld [vmem:[#allocation2 + $0x11] sm:$0xff]
        %v2137 = vmax.f32 %v2118, %v2133
        %v2138 = vmax.f32 %v2120, %v2134
        %v2139 = vmax.f32 %v2137, %v2135
        %v2140 = vmax.f32 %v2138, %v2136
        %2141 = vst.msk [vmem:[#allocation3 + $0x8] sm:$0xff] %vm518, %v2139
        %2142 = vst.msk [vmem:[#allocation3 + $0x20] sm:$0xff] %vm518, %v2140
        %v2143 = vld [vmem:[#allocation3] sm:$0xff]
        %v2144 = vld [vmem:[#allocation3 + $0x8] sm:$0xff]
        %v2145 = vld [vmem:[#allocation3 + $0x18] sm:$0xff]
        %v2146 = vld [vmem:[#allocation3 + $0x20] sm:$0xff]
        %2149 = vrot.lane.b32.xlu0 %v2144, 126
        %v2150 = vpop.permute.xlu0 %2149
        %2151 = vrot.lane.b32.xlu0 %v2146, 126
        %v2152 = vpop.permute.xlu0 %2151
        %v2155 = vmax.f32 %v2143, %v2150
        %v2156 = vmax.f32 %v2144, %v2150
        %v2157 = vmax.f32 %v2145, %v2152
        %v2158 = vmax.f32 %v2146, %v2152
        %2163 = vrot.lane.b32.xlu0 %v2155, 127
        %v2164 = vpop.permute.xlu0 %2163
        %2165 = vrot.lane.b32.xlu0 %v2156, 127
        %v2166 = vpop.permute.xlu0 %2165
        %2167 = vrot.lane.b32.xlu0 %v2157, 127
        %v2168 = vpop.permute.xlu0 %2167
        %2169 = vrot.lane.b32.xlu0 %v2158, 127
        %v2170 = vpop.permute.xlu0 %2169
        %v2171 = vsel %vm598, %v2164, %v2166
        %v2172 = vsel %vm598, %v2168, %v2170
        %v2177 = vmax.f32 %v2129, %v2171
        %v2178 = vmax.f32 %v2130, %v2166
        %v2179 = vmax.f32 %v2131, %v2172
        %v2180 = vmax.f32 %v2132, %v2170
        %v2181 = vld [vmem:[#allocation2 + $0x6] sm:$0xff]
        %v2182 = vld [vmem:[#allocation2 + $0xe] sm:$0xff]
        %v2183 = vld [vmem:[#allocation2 + $0xa] sm:$0xff]
        %v2184 = vld [vmem:[#allocation2 + $0x12] sm:$0xff]
        %v2185 = vmax.f32 %v2144, %v2181
        %v2186 = vmax.f32 %v2146, %v2182
        %v2187 = vmax.f32 %v2185, %v2183
        %v2188 = vmax.f32 %v2186, %v2184
        %2189 = vst.msk [vmem:[#allocation3 + $0x8] sm:$0xff] %vm518, %v2187
        %2190 = vst.msk [vmem:[#allocation3 + $0x20] sm:$0xff] %vm518, %v2188
        %v2191 = vld [vmem:[#allocation3 + $0x8] sm:$0xff]
        %v2192 = vld [vmem:[#allocation3 + $0x20] sm:$0xff]
        %2195 = vrot.lane.b32.xlu0 %v2191, 126
        %v2196 = vpop.permute.xlu0 %2195
        %2197 = vrot.lane.b32.xlu0 %v2192, 126
        %v2198 = vpop.permute.xlu0 %2197
        %v2201 = vmax.f32 %v2177, %v2196
        %v2202 = vmax.f32 %v2178, %v2196
        %v2203 = vmax.f32 %v2179, %v2198
        %v2204 = vmax.f32 %v2180, %v2198
        %2209 = vrot.lane.b32.xlu0 %v2085, 1
        %v2210 = vpop.permute.xlu0 %2209
        %2211 = vrot.lane.b32.xlu0 %v2086, 1
        %v2212 = vpop.permute.xlu0 %2211
        %2213 = vrot.lane.b32.xlu0 %v2087, 1
        %v2214 = vpop.permute.xlu0 %2213
        %2215 = vrot.lane.b32.xlu0 %v2088, 1
        %v2216 = vpop.permute.xlu0 %2215
        %v2217 = vsel %vm2040, %v2210, %v2212
        %v2218 = vsel %vm2040, %v2214, %v2216
        %2221 = vst.msk [vmem:[#allocation2 + $0x8] sm:$0xff] %vm518, %v2217
        %2222 = vst.msk [vmem:[#allocation2 + $0x10] sm:$0xff] %vm518, %v2218
        %2223 = vst.msk [vmem:[#allocation3 + $0x8] sm:$0xff] %vm518, %v2217
        %2224 = vst.msk [vmem:[#allocation3 + $0x20] sm:$0xff] %vm518, %v2218
        %v2225 = vld [vmem:[#allocation3] sm:$0xff]
        %v2226 = vld [vmem:[#allocation3 + $0x8] sm:$0xff]
        %v2227 = vld [vmem:[#allocation3 + $0x18] sm:$0xff]
        %v2228 = vld [vmem:[#allocation3 + $0x20] sm:$0xff]
        %2231 = vrot.lane.b32.xlu0 %v2226, 126
        %v2232 = vpop.permute.xlu0 %2231
        %2233 = vrot.lane.b32.xlu0 %v2228, 126
        %v2234 = vpop.permute.xlu0 %2233
        %v2237 = vmax.f32 %v2225, %v2232
        %v2238 = vmax.f32 %v2226, %v2232
        %v2239 = vmax.f32 %v2227, %v2234
        %v2240 = vmax.f32 %v2228, %v2234
        %v2241 = vld [vmem:[#allocation2 + $0x7] sm:$0xff]
        %v2242 = vld [vmem:[#allocation2 + $0xf] sm:$0xff]
        %v2243 = vld [vmem:[#allocation2 + $0x9] sm:$0xff]
        %v2244 = vld [vmem:[#allocation2 + $0x11] sm:$0xff]
        %v2245 = vmax.f32 %v2226, %v2241
        %v2246 = vmax.f32 %v2228, %v2242
        %v2247 = vmax.f32 %v2245, %v2243
        %v2248 = vmax.f32 %v2246, %v2244
        %2249 = vst.msk [vmem:[#allocation3 + $0x8] sm:$0xff] %vm518, %v2247
        %2250 = vst.msk [vmem:[#allocation3 + $0x20] sm:$0xff] %vm518, %v2248
        %v2251 = vld [vmem:[#allocation3 + $0x8] sm:$0xff]
        %v2252 = vld [vmem:[#allocation3 + $0x20] sm:$0xff]
        %2255 = vrot.lane.b32.xlu0 %v2251, 127
        %v2256 = vpop.permute.xlu0 %2255
        %2257 = vrot.lane.b32.xlu0 %v2252, 127
        %v2258 = vpop.permute.xlu0 %2257
        %v2261 = vmax.f32 %v2237, %v2256
        %v2262 = vmax.f32 %v2238, %v2256
        %v2263 = vmax.f32 %v2239, %v2258
        %v2264 = vmax.f32 %v2240, %v2258
        %v2265 = vsub.f32 1.0, %v2201
        %v2266 = vsub.f32 1.0, %v2202
        %v2267 = vsub.f32 1.0, %v2203
        %v2268 = vsub.f32 1.0, %v2204
        %2273 = vrot.lane.b32.xlu0 %v2265, 1
        %v2274 = vpop.permute.xlu0 %2273
        %2275 = vrot.lane.b32.xlu0 %v2266, 1
        %v2276 = vpop.permute.xlu0 %2275
        %2277 = vrot.lane.b32.xlu0 %v2267, 1
        %v2278 = vpop.permute.xlu0 %2277
        %2279 = vrot.lane.b32.xlu0 %v2268, 1
        %v2280 = vpop.permute.xlu0 %2279
        %v2281 = vsel %vm2040, %v2274, %v2276
        %v2282 = vsel %vm2040, %v2278, %v2280
        %v2287 = vmul.f32 %v2261, %v2274
        %v2288 = vmul.f32 %v2262, %v2281
        %v2289 = vmul.f32 %v2263, %v2278
        %v2290 = vmul.f32 %v2264, %v2282
        %2291 = vrot.lane.b32.xlu0 %v1972, 4
        %v2292 = vpop.permute.xlu0 %2291
        %2293 = vrot.lane.b32.xlu0 %v1973, 4
        %v2294 = vpop.permute.xlu0 %2293
        %2295 = vrot.lane.b32.xlu0 %v1974, 4
        %v2296 = vpop.permute.xlu0 %2295
        %2297 = vrot.lane.b32.xlu0 %v1975, 4
        %v2298 = vpop.permute.xlu0 %2297
        %v2299 = vsel %vm1261, %v2292, %v2294
        %v2300 = vsel %vm1261, %v2296, %v2298
        %v2305 = vmul.f32 %v2287, %v2292
        %v2306 = vmul.f32 %v2288, %v2299
        %v2307 = vmul.f32 %v2289, %v2296
        %v2308 = vmul.f32 %v2290, %v2300
        %v2309 = vtrunc.f32 %v538
        %v2310 = vtrunc.f32 %v539
        %v2311 = vpack.c.f32.eXmY %v2309, %v2310, 56
        %v2315 = vpack.c.b8 %v2311, %v2311
        %v2317 = vunpack.c.0.s8 %v2315
        %v2318 = vunpack.c.1.s8 %v2315
        %v2319 = vpack.c.b16 %v2317, %v2317
        %v2320 = vpack.c.b8 %v2319, %v2319
        %v2321 = vpack.c.b16 %v2318, %v2318
        %v2322 = vpack.c.b8 %v2321, %v2321
        %vm2323 = vcmask 123904
        %2324 = vst.msk [vmem:[%s476] sm:$0x3] %vm2323, %v2320
        %2325 = vst.msk [vmem:[%s476 + $0x2] sm:$0x3] %vm2323, %v2322
        %v2326 = vtrunc.f32 %v1091
        %v2327 = vtrunc.f32 %v1092
        %v2328 = vtrunc.f32 %v1093
        %v2329 = vtrunc.f32 %v1094
        %v2330 = vpack.c.f32.eXmY %v2326, %v2328, 56
        %v2334 = vpack.c.b8 %v2330, %v2330
        %v2336 = vpack.c.f32.eXmY %v2327, %v2329, 56
        %v2340 = vpack.c.b8 %v2336, %v2336
        %v2342 = vunpack.c.0.s8 %v2334
        %v2343 = vunpack.c.0.s8 %v2340
        %v2344 = vunpack.c.1.s8 %v2334
        %v2345 = vunpack.c.1.s8 %v2340
        %v2346 = vpack.c.b16 %v2343, %v2342
        %v2347 = vpack.c.b8 %v2346, %v2346
        %v2348 = vpack.c.b16 %v2345, %v2344
        %v2349 = vpack.c.b8 %v2348, %v2348
        %2350 = vrot.lane.b32.xlu0 %v2347, 4
        %v2351 = vpop.permute.xlu0 %2350
        %2352 = vrot.lane.b32.xlu0 %v2349, 4
        %v2353 = vpop.permute.xlu0 %2352
        %v2354 = vrot.slane %v2351, 2
        %v2355 = vrot.slane %v2353, 2
        %vm2356 = vcmask 31744
        %v2357 = vsel %vm2356, %v2351, %v2354
        %v2358 = vsel %vm2356, %v2353, %v2355
        %2359 = vst.msk [vmem:[%s481] sm:$0x3] %vm2323, %v2357
        %2360 = vst.msk [vmem:[%s481 + $0x2] sm:$0x3] %vm2323, %v2358
        %v2361 = vtrunc.f32 %v1243
        %v2362 = vtrunc.f32 %v1244
        %v2363 = vpack.c.f32.eXmY %v2361, %v2362, 56
        %v2367 = vpack.c.b8 %v2363, %v2363
        %v2369 = vunpack.c.0.s8 %v2367
        %v2370 = vunpack.c.1.s8 %v2367
        %v2371 = vpack.c.b16 %v2369, %v2369
        %v2372 = vpack.c.b8 %v2371, %v2371
        %v2373 = vpack.c.b16 %v2370, %v2370
        %v2374 = vpack.c.b8 %v2373, %v2373
        %2375 = vst.msk [vmem:[%s486] sm:$0x3] %vm2323, %v2372
        %2376 = vst.msk [vmem:[%s486 + $0x2] sm:$0x3] %vm2323, %v2374
        %v2377 = vtrunc.f32 %v1747
        %v2378 = vtrunc.f32 %v1748
        %v2379 = vtrunc.f32 %v1749
        %v2380 = vtrunc.f32 %v1750
        %v2381 = vpack.c.f32.eXmY %v2377, %v2379, 56
        %v2385 = vpack.c.b8 %v2381, %v2381
        %v2387 = vpack.c.f32.eXmY %v2378, %v2380, 56
        %v2391 = vpack.c.b8 %v2387, %v2387
        %v2393 = vunpack.c.0.s8 %v2385
        %v2394 = vunpack.c.0.s8 %v2391
        %v2395 = vunpack.c.1.s8 %v2385
        %v2396 = vunpack.c.1.s8 %v2391
        %v2397 = vpack.c.b16 %v2394, %v2393
        %v2398 = vpack.c.b8 %v2397, %v2397
        %v2399 = vpack.c.b16 %v2396, %v2395
        %v2400 = vpack.c.b8 %v2399, %v2399
        %2401 = vrot.lane.b32.xlu0 %v2398, 6
        %v2402 = vpop.permute.xlu0 %2401
        %2403 = vrot.lane.b32.xlu0 %v2400, 6
        %v2404 = vpop.permute.xlu0 %2403
        %v2405 = vrot.slane %v2402, 2
        %v2406 = vrot.slane %v2404, 2
        %vm2407 = vcmask 48128
        %v2408 = vsel %vm2407, %v2402, %v2405
        %v2409 = vsel %vm2407, %v2404, %v2406
        %2410 = vst.msk [vmem:[%s491] sm:$0x3] %vm2323, %v2408
        %2411 = vst.msk [vmem:[%s491 + $0x2] sm:$0x3] %vm2323, %v2409
        %v2412 = vtrunc.f32 %v1982
        %v2413 = vtrunc.f32 %v1983
        %v2414 = vpack.c.f32.eXmY %v2412, %v2413, 56
        %v2418 = vpack.c.b8 %v2414, %v2414
        %v2420 = vunpack.c.0.s8 %v2418
        %v2421 = vunpack.c.1.s8 %v2418
        %v2422 = vpack.c.b16 %v2420, %v2420
        %v2423 = vpack.c.b8 %v2422, %v2422
        %v2424 = vpack.c.b16 %v2421, %v2421
        %v2425 = vpack.c.b8 %v2424, %v2424
        %2426 = vst.msk [vmem:[%s496] sm:$0x3] %vm2323, %v2423
        %2427 = vst.msk [vmem:[%s496 + $0x2] sm:$0x3] %vm2323, %v2425
        %v2428 = vtrunc.f32 %v2085
        %v2429 = vtrunc.f32 %v2086
        %v2430 = vtrunc.f32 %v2087
        %v2431 = vtrunc.f32 %v2088
        %v2432 = vpack.c.f32.eXmY %v2428, %v2430, 56
        %v2436 = vpack.c.b8 %v2432, %v2432
        %v2438 = vpack.c.f32.eXmY %v2429, %v2431, 56
        %v2442 = vpack.c.b8 %v2438, %v2438
        %v2444 = vunpack.c.0.s8 %v2436
        %v2445 = vunpack.c.0.s8 %v2442
        %v2446 = vunpack.c.1.s8 %v2436
        %v2447 = vunpack.c.1.s8 %v2442
        %v2448 = vpack.c.b16 %v2445, %v2444
        %v2449 = vpack.c.b8 %v2448, %v2448
        %v2450 = vpack.c.b16 %v2447, %v2446
        %v2451 = vpack.c.b8 %v2450, %v2450
        %2452 = vrot.lane.b32.xlu0 %v2449, 1
        %v2453 = vpop.permute.xlu0 %2452
        %2454 = vrot.lane.b32.xlu0 %v2451, 1
        %v2455 = vpop.permute.xlu0 %2454
        %v2456 = vrot.slane %v2453, 2
        %v2457 = vrot.slane %v2455, 2
        %vm2458 = vcmask 7168
        %v2459 = vsel %vm2458, %v2453, %v2456
        %v2460 = vsel %vm2458, %v2455, %v2457
        %2461 = vst.msk [vmem:[%s501] sm:$0x3] %vm2323, %v2459
        %2462 = vst.msk [vmem:[%s501 + $0x2] sm:$0x3] %vm2323, %v2460
        %v2463 = vtrunc.f32 %v1972
        %v2464 = vtrunc.f32 %v1973
        %v2465 = vtrunc.f32 %v1974
        %v2466 = vtrunc.f32 %v1975
        %v2467 = vpack.c.f32.eXmY %v2463, %v2465, 56
        %v2471 = vpack.c.b8 %v2467, %v2467
        %v2473 = vpack.c.f32.eXmY %v2464, %v2466, 56
        %v2477 = vpack.c.b8 %v2473, %v2473
        %v2479 = vunpack.c.0.s8 %v2471
        %v2480 = vunpack.c.0.s8 %v2477
        %v2481 = vunpack.c.1.s8 %v2471
        %v2482 = vunpack.c.1.s8 %v2477
        %v2483 = vpack.c.b16 %v2480, %v2479
        %v2484 = vpack.c.b8 %v2483, %v2483
        %v2485 = vpack.c.b16 %v2482, %v2481
        %v2486 = vpack.c.b8 %v2485, %v2485
        %2487 = vrot.lane.b32.xlu0 %v2484, 5
        %v2488 = vpop.permute.xlu0 %2487
        %2489 = vrot.lane.b32.xlu0 %v2486, 5
        %v2490 = vpop.permute.xlu0 %2489
        %v2491 = vrot.slane %v2488, 2
        %v2492 = vrot.slane %v2490, 2
        %vm2493 = vcmask 39936
        %v2494 = vsel %vm2493, %v2488, %v2491
        %v2495 = vsel %vm2493, %v2490, %v2492
        %2496 = vst.msk [vmem:[%s506] sm:$0x3] %vm2323, %v2494
        %2497 = vst.msk [vmem:[%s506 + $0x2] sm:$0x3] %vm2323, %v2495
        %2502 = vrot.lane.b32.xlu0 %v2305, 1
        %v2503 = vpop.permute.xlu0 %2502
        %2504 = vrot.lane.b32.xlu0 %v2306, 1
        %v2505 = vpop.permute.xlu0 %2504
        %2506 = vrot.lane.b32.xlu0 %v2307, 1
        %v2507 = vpop.permute.xlu0 %2506
        %2508 = vrot.lane.b32.xlu0 %v2308, 1
        %v2509 = vpop.permute.xlu0 %2508
        %v2510 = vsel %vm2040, %v2503, %v2505
        %v2511 = vsel %vm2040, %v2507, %v2509
        %2514 = vst.msk [vmem:[%s511] sm:$0xff] %vm518, %v2510
        %2515 = vst.msk [vmem:[%s511 + $0x8] sm:$0xff] %vm518, %v2511
        %2520 = vrot.lane.b32.xlu0 %v2201, 2
        %v2521 = vpop.permute.xlu0 %2520
        %2522 = vrot.lane.b32.xlu0 %v2202, 2
        %v2523 = vpop.permute.xlu0 %2522
        %2524 = vrot.lane.b32.xlu0 %v2203, 2
        %v2525 = vpop.permute.xlu0 %2524
        %2526 = vrot.lane.b32.xlu0 %v2204, 2
        %v2527 = vpop.permute.xlu0 %2526
        %v2528 = vsel %vm645, %v2521, %v2523
        %v2529 = vsel %vm645, %v2525, %v2527
        %2532 = vst.msk [vmem:[%s516] sm:$0xff] %vm518, %v2528
        %2533 = vst.msk [vmem:[%s516 + $0x8] sm:$0xff] %vm518, %v2529
        %p2534 = scmp.lt.s32.totalorder %s28, 1
        %s2535 = scalar_select %p2534, %s28, 1
        %s2536 = smul.addr %s2535, 2
        %s2537 = smul.addr %s2536, 2
        %s2538 = scalar_lea.vmem %s2, %s2537
        %p2539 = scmp.lt.s32.totalorder %s28, 1
        %s2540 = scalar_select %p2539, %s28, 1
        %s2541 = smul.addr %s2540, 2
        %s2542 = smul.addr %s2541, 2
        %s2543 = scalar_lea.vmem %s3, %s2542
        %p2544 = scmp.lt.s32.totalorder %s28, 1
        %s2545 = scalar_select %p2544, %s28, 1
        %s2546 = smul.addr %s2545, 2
        %s2547 = smul.addr %s2546, 2
        %s2548 = scalar_lea.vmem %s4, %s2547
        %p2549 = scmp.lt.s32.totalorder %s28, 1
        %s2550 = scalar_select %p2549, %s28, 1
        %s2551 = smul.addr %s2550, 2
        %s2552 = smul.addr %s2551, 2
        %s2553 = scalar_lea.vmem %s5, %s2552
        %p2554 = scmp.lt.s32.totalorder %s28, 1
        %s2555 = scalar_select %p2554, %s28, 1
        %s2556 = smul.addr %s2555, 2
        %s2557 = smul.addr %s2556, 2
        %s2558 = scalar_lea.vmem %s6, %s2557
        %p2559 = scmp.lt.s32.totalorder %s28, 1
        %s2560 = scalar_select %p2559, %s28, 1
        %s2561 = smul.addr %s2560, 2
        %s2562 = smul.addr %s2561, 2
        %s2563 = scalar_lea.vmem %s7, %s2562
        %p2564 = scmp.lt.s32.totalorder %s28, 1
        %s2565 = scalar_select %p2564, %s28, 1
        %s2566 = smul.addr %s2565, 2
        %s2567 = smul.addr %s2566, 2
        %s2568 = scalar_lea.vmem %s8, %s2567
        %p2569 = scmp.lt.s32.totalorder %s28, 1
        %s2570 = scalar_select %p2569, %s28, 1
        %s2571 = smul.addr %s2570, 2
        %s2572 = smul.addr %s2571, 8
        %s2573 = scalar_lea.vmem %s9, %s2572
        %p2574 = scmp.lt.s32.totalorder %s28, 1
        %s2575 = scalar_select %p2574, %s28, 1
        %s2576 = smul.addr %s2575, 2
        %s2577 = smul.addr %s2576, 8
        %s2578 = scalar_lea.vmem %s10, %s2577
        // Predicated region
        $region37: #{segmentation_mask_forward.1} parent=27 // pred_check
          %p2579 = pneg %p98
        $region38: #{segmentation_mask_forward.1} parent=27 // pred_check_branch
          %2581 = sbr.rel (%p2579) target = $region40
        $region39: #{segmentation_mask_forward.1} parent=27 // pred_region
          _
        $region40: #{segmentation_mask_forward.1} parent=27 // pred_fallthru
          _
        // Predicated region
        $region41: #{segmentation_mask_forward.1} parent=27 // pred_check
          %p2582 = pneg %p124
        $region42: #{segmentation_mask_forward.1} parent=27 // pred_check_branch
          %2584 = sbr.rel (%p2582) target = $region44
        $region43: #{segmentation_mask_forward.1} parent=27 // pred_region
          _
        $region44: #{segmentation_mask_forward.1} parent=27 // pred_fallthru
          _
        // Predicated region
        $region45: #{segmentation_mask_forward.1} parent=27 // pred_check
          %p2585 = pneg %p150
        $region46: #{segmentation_mask_forward.1} parent=27 // pred_check_branch
          %2587 = sbr.rel (%p2585) target = $region48
        $region47: #{segmentation_mask_forward.1} parent=27 // pred_region
          _
        $region48: #{segmentation_mask_forward.1} parent=27 // pred_fallthru
          _
        // Predicated region
        $region49: #{segmentation_mask_forward.1} parent=27 // pred_check
          %p2588 = pneg %p176
        $region50: #{segmentation_mask_forward.1} parent=27 // pred_check_branch
          %2590 = sbr.rel (%p2588) target = $region52
        $region51: #{segmentation_mask_forward.1} parent=27 // pred_region
          _
        $region52: #{segmentation_mask_forward.1} parent=27 // pred_fallthru
          _
        // Predicated region
        $region53: #{segmentation_mask_forward.1} parent=27 // pred_check
          %p2591 = pneg %p202
        $region54: #{segmentation_mask_forward.1} parent=27 // pred_check_branch
          %2593 = sbr.rel (%p2591) target = $region56
        $region55: #{segmentation_mask_forward.1} parent=27 // pred_region
          _
        $region56: #{segmentation_mask_forward.1} parent=27 // pred_fallthru
          _
        // Predicated region
        $region57: #{segmentation_mask_forward.1} parent=27 // pred_check
          %p2594 = pneg %p228
        $region58: #{segmentation_mask_forward.1} parent=27 // pred_check_branch
          %2596 = sbr.rel (%p2594) target = $region60
        $region59: #{segmentation_mask_forward.1} parent=27 // pred_region
          _
        $region60: #{segmentation_mask_forward.1} parent=27 // pred_fallthru
          _
        // Predicated region
        $region61: #{segmentation_mask_forward.1} parent=27 // pred_check
          %p2597 = pneg %p254
        $region62: #{segmentation_mask_forward.1} parent=27 // pred_check_branch
          %2599 = sbr.rel (%p2597) target = $region64
        $region63: #{segmentation_mask_forward.1} parent=27 // pred_region
          _
        $region64: #{segmentation_mask_forward.1} parent=27 // pred_fallthru
          _
        // Predicated region
        $region65: #{segmentation_mask_forward.1} parent=27 // pred_check
          %p2600 = pneg %p280
        $region66: #{segmentation_mask_forward.1} parent=27 // pred_check_branch
          %2602 = sbr.rel (%p2600) target = $region68
        $region67: #{segmentation_mask_forward.1} parent=27 // pred_region
          _
        $region68: #{segmentation_mask_forward.1} parent=27 // pred_fallthru
          _
        // Predicated region
        $region69: #{segmentation_mask_forward.1} parent=27 // pred_check
          %p2603 = pneg %p306
        $region70: #{segmentation_mask_forward.1} parent=27 // pred_check_branch
          %2605 = sbr.rel (%p2603) target = $region72
        $region71: #{segmentation_mask_forward.1} parent=27 // pred_region
          _
        $region72: #{segmentation_mask_forward.1} parent=27 // pred_fallthru
          _
      $region28: #{segmentation_mask_forward.1} parent=5 // pred_fallthru
        _
      %p2606 = scmp.le.s32.totalorder 2, %s23
      // Predicated region
      $region73: #{segmentation_mask_forward.1} parent=5 // pred_check
        %p2607 = pneg %p2606
      $region74: #{segmentation_mask_forward.1} parent=5 // pred_check_branch
        %2609 = sbr.rel (%p2607) target = $region76
      $region75: #{segmentation_mask_forward.1} parent=5 // pred_region
        %s2610 = ssub.s32 %s23, 2
        // Predicated region
        $region77: #{segmentation_mask_forward.1} parent=75 // pred_check
          %p2611 = pneg %p104
        $region78: #{segmentation_mask_forward.1} parent=75 // pred_check_branch
          %2613 = sbr.rel (%p2611) target = $region80
        $region79: #{segmentation_mask_forward.1} parent=75 // pred_region
          %p2614 = scmp.lt.s32.totalorder %s29, 1
          %s2615 = scalar_select %p2614, %s29, 1
          %s2616 = smul.addr %s2615, 2
          %s2617 = smul.addr %s2616, 2
          %s2618 = scalar_lea.vmem %s2, %s2617
        $region80: #{segmentation_mask_forward.1} parent=75 // pred_fallthru
          _
        // Predicated region
        $region81: #{segmentation_mask_forward.1} parent=75 // pred_check
          %p2619 = pneg %p130
        $region82: #{segmentation_mask_forward.1} parent=75 // pred_check_branch
          %2621 = sbr.rel (%p2619) target = $region84
        $region83: #{segmentation_mask_forward.1} parent=75 // pred_region
          %p2622 = scmp.lt.s32.totalorder %s29, 1
          %s2623 = scalar_select %p2622, %s29, 1
          %s2624 = smul.addr %s2623, 2
          %s2625 = smul.addr %s2624, 2
          %s2626 = scalar_lea.vmem %s3, %s2625
        $region84: #{segmentation_mask_forward.1} parent=75 // pred_fallthru
          _
        // Predicated region
        $region85: #{segmentation_mask_forward.1} parent=75 // pred_check
          %p2627 = pneg %p156
        $region86: #{segmentation_mask_forward.1} parent=75 // pred_check_branch
          %2629 = sbr.rel (%p2627) target = $region88
        $region87: #{segmentation_mask_forward.1} parent=75 // pred_region
          %p2630 = scmp.lt.s32.totalorder %s29, 1
          %s2631 = scalar_select %p2630, %s29, 1
          %s2632 = smul.addr %s2631, 2
          %s2633 = smul.addr %s2632, 2
          %s2634 = scalar_lea.vmem %s4, %s2633
        $region88: #{segmentation_mask_forward.1} parent=75 // pred_fallthru
          _
        // Predicated region
        $region89: #{segmentation_mask_forward.1} parent=75 // pred_check
          %p2635 = pneg %p182
        $region90: #{segmentation_mask_forward.1} parent=75 // pred_check_branch
          %2637 = sbr.rel (%p2635) target = $region92
        $region91: #{segmentation_mask_forward.1} parent=75 // pred_region
          %p2638 = scmp.lt.s32.totalorder %s29, 1
          %s2639 = scalar_select %p2638, %s29, 1
          %s2640 = smul.addr %s2639, 2
          %s2641 = smul.addr %s2640, 2
          %s2642 = scalar_lea.vmem %s5, %s2641
        $region92: #{segmentation_mask_forward.1} parent=75 // pred_fallthru
          _
        // Predicated region
        $region93: #{segmentation_mask_forward.1} parent=75 // pred_check
          %p2643 = pneg %p208
        $region94: #{segmentation_mask_forward.1} parent=75 // pred_check_branch
          %2645 = sbr.rel (%p2643) target = $region96
        $region95: #{segmentation_mask_forward.1} parent=75 // pred_region
          %p2646 = scmp.lt.s32.totalorder %s29, 1
          %s2647 = scalar_select %p2646, %s29, 1
          %s2648 = smul.addr %s2647, 2
          %s2649 = smul.addr %s2648, 2
          %s2650 = scalar_lea.vmem %s6, %s2649
        $region96: #{segmentation_mask_forward.1} parent=75 // pred_fallthru
          _
        // Predicated region
        $region97: #{segmentation_mask_forward.1} parent=75 // pred_check
          %p2651 = pneg %p234
        $region98: #{segmentation_mask_forward.1} parent=75 // pred_check_branch
          %2653 = sbr.rel (%p2651) target = $region100
        $region99: #{segmentation_mask_forward.1} parent=75 // pred_region
          %p2654 = scmp.lt.s32.totalorder %s29, 1
          %s2655 = scalar_select %p2654, %s29, 1
          %s2656 = smul.addr %s2655, 2
          %s2657 = smul.addr %s2656, 2
          %s2658 = scalar_lea.vmem %s7, %s2657
        $region100: #{segmentation_mask_forward.1} parent=75 // pred_fallthru
          _
        // Predicated region
        $region101: #{segmentation_mask_forward.1} parent=75 // pred_check
          %p2659 = pneg %p260
        $region102: #{segmentation_mask_forward.1} parent=75 // pred_check_branch
          %2661 = sbr.rel (%p2659) target = $region104
        $region103: #{segmentation_mask_forward.1} parent=75 // pred_region
          %p2662 = scmp.lt.s32.totalorder %s29, 1
          %s2663 = scalar_select %p2662, %s29, 1
          %s2664 = smul.addr %s2663, 2
          %s2665 = smul.addr %s2664, 2
          %s2666 = scalar_lea.vmem %s8, %s2665
        $region104: #{segmentation_mask_forward.1} parent=75 // pred_fallthru
          _
        // Predicated region
        $region105: #{segmentation_mask_forward.1} parent=75 // pred_check
          %p2667 = pneg %p286
        $region106: #{segmentation_mask_forward.1} parent=75 // pred_check_branch
          %2669 = sbr.rel (%p2667) target = $region108
        $region107: #{segmentation_mask_forward.1} parent=75 // pred_region
          %p2670 = scmp.lt.s32.totalorder %s29, 1
          %s2671 = scalar_select %p2670, %s29, 1
          %s2672 = smul.addr %s2671, 2
          %s2673 = smul.addr %s2672, 8
          %s2674 = scalar_lea.vmem %s9, %s2673
        $region108: #{segmentation_mask_forward.1} parent=75 // pred_fallthru
          _
        // Predicated region
        $region109: #{segmentation_mask_forward.1} parent=75 // pred_check
          %p2675 = pneg %p312
        $region110: #{segmentation_mask_forward.1} parent=75 // pred_check_branch
          %2677 = sbr.rel (%p2675) target = $region112
        $region111: #{segmentation_mask_forward.1} parent=75 // pred_region
          %p2678 = scmp.lt.s32.totalorder %s29, 1
          %s2679 = scalar_select %p2678, %s29, 1
          %s2680 = smul.addr %s2679, 2
          %s2681 = smul.addr %s2680, 8
          %s2682 = scalar_lea.vmem %s10, %s2681
        $region112: #{segmentation_mask_forward.1} parent=75 // pred_fallthru
          _
      $region76: #{segmentation_mask_forward.1} parent=5 // pred_fallthru
        _
    $region6: #{segmentation_mask_forward.1} parent=1 // loop_footer
      %s27 = sadd.s32 1, %s23
    $region7: #{segmentation_mask_forward.1} parent=1 // loop_footer_branch
      %22 = sbr.rel target = $region3
    $region8: #{segmentation_mask_forward.1} parent=1 // loop_exit
      _
    %2683 = vsyncpa [#allocation5], 1
    %s2684 = scalar_lea.sflag [#allocation5], 1
    %2685 = vsyncpa %s2684, 1
    %2686 = vsyncpa [#allocation7], 1
    %s2687 = scalar_lea.sflag [#allocation7], 1
    %2688 = vsyncpa %s2687, 1

</llo_original>
